<compile_context>
chip_gen: v7x
topology: tpu7x:2x2x1
jax: 0.10.0
libtpu: 0.0.40
codegen_flags: <defaults>
</compile_context>

<pallas_src>
import functools
from typing import NamedTuple

import jax
import jax.numpy as jnp
from jax import lax
from jax.experimental import pallas as pl
from jax.experimental.pallas import tpu as pltpu


def _round_up(x, m):
    return ((x + m - 1) // m) * m


# ------------------------------------------------------------------
# Static metadata (never traced; bound into the jitted forward via partial).
# ------------------------------------------------------------------
class GroupMeta(NamedTuple):
    depth: int      # number of stacked layers in this group
    in_pad: int
    out_pad: int
    relu: bool


class NetMeta(NamedTuple):
    groups: tuple                 # tuple[GroupMeta, ...]
    imsize: int
    in_pad: int
    out_dim: int                  # real (unpadded) num_classes
    out_pad: int
    compute_dtype: object         # MXU operand dtype (bf16 by default)
    single_buffer_weights: bool   # pipeline_mode=pl.Buffered(1) supported?


# ------------------------------------------------------------------
# One-time probe: does this Pallas accept pipeline_mode=pl.Buffered(1)?
# (Single-buffering grid-invariant weight blocks halves their VMEM footprint;
#  fall back silently to default double-buffering if rejected.)
# ------------------------------------------------------------------
_SINGLE_BUFFER_OK = None


def _single_buffer_supported():
    global _SINGLE_BUFFER_OK
    if _SINGLE_BUFFER_OK is None:
        try:
            def _k(x_ref, o_ref):
                o_ref[...] = x_ref[...] + 1.0

            fn = pl.pallas_call(
                _k,
                out_shape=jax.ShapeDtypeStruct((8, 128), jnp.float32),
                grid=(1,),
                in_specs=[pl.BlockSpec((8, 128), lambda i: (0, 0),
                                       pipeline_mode=pl.Buffered(1))],
                out_specs=pl.BlockSpec((8, 128), lambda i: (0, 0)),
            )
            jax.block_until_ready(fn(jnp.zeros((8, 128), jnp.float32)))
            _SINGLE_BUFFER_OK = True
        except Exception:
            _SINGLE_BUFFER_OK = False
    return _SINGLE_BUFFER_OK


# ------------------------------------------------------------------
# One-time parameter preparation (call OUTSIDE the per-step jitted forward).
# params: list of (W, b) with W shaped (in, out)  [== PyTorch Linear.weight.T]
# Returns (stacks, meta): stacks = (w_stack_0, b_stack_0, w_stack_1, b_stack_1, ...)
# ------------------------------------------------------------------
def prepare_net_params(params, *, compute_dtype=jnp.bfloat16):
    n_lin = len(params)
    layers = []
    for li, (w, b) in enumerate(params):
        w = jnp.asarray(w, jnp.float32)
        b = jnp.asarray(b, jnp.float32)
        d_in, d_out = w.shape
        in_pad, out_pad = _round_up(d_in, 128), _round_up(d_out, 128)
        # Zero padding is numerically exact: padded input cols hit zero weight rows;
        # padded hidden cols get zero weight col + zero bias -> ReLU(0)=0 -> zero
        # contribution downstream; padded logits are sliced off by the wrapper.
        wp = jnp.zeros((in_pad, out_pad), jnp.float32).at[:d_in, :d_out].set(w)
        wp = wp.astype(compute_dtype)                                   # MXU operand
        bp = jnp.zeros((1, out_pad), jnp.float32).at[:, :d_out].set(b)  # f32 epilogue
        layers.append((wp, bp, in_pad, out_pad, li < n_lin - 1))

    # Group consecutive layers with identical padded shape + activation so that each
    # group becomes ONE stacked (L, in, out) weight + (L, 1, out) bias operand.
    groups, stacks = [], []
    i = 0
    while i < n_lin:
        _, _, ip, op, relu = layers[i]
        j = i + 1
        while j < n_lin and layers[j][2:] == (ip, op, relu):
            j += 1
        stacks.append(jnp.stack([layers[k][0] for k in range(i, j)]))
        stacks.append(jnp.stack([layers[k][1] for k in range(i, j)]))
        groups.append(GroupMeta(depth=j - i, in_pad=ip, out_pad=op, relu=relu))
        i = j

    meta = NetMeta(
        groups=tuple(groups),
        imsize=params[0][0].shape[0],
        in_pad=groups[0].in_pad,
        out_dim=params[-1][0].shape[1],
        out_pad=groups[-1].out_pad,
        compute_dtype=compute_dtype,
        single_buffer_weights=_single_buffer_supported(),
    )
    return tuple(stacks), meta


# ------------------------------------------------------------------
# Fused MLP kernel.  refs = (x_ref, w_stack_0, b_stack_0, ..., o_ref).
# ------------------------------------------------------------------
def _make_mlp_kernel(groups, compute_dtype):
    def kernel(*refs):
        x_ref, o_ref = refs[0], refs[-1]
        h = x_ref[...]
        r = 1
        for g in groups:
            w_ref, b_ref = refs[r], refs[r + 1]
            r += 2

            def layer(li, hh, w_ref=w_ref, b_ref=b_ref, relu=g.relu):
                # MXU in compute_dtype (bf16 default), f32 accumulation,
                # f32 bias-add / ReLU epilogue (v5e has no bf16 VPU/EUP).
                hh = jnp.dot(hh.astype(compute_dtype), w_ref[li],
                             preferred_element_type=jnp.float32) + b_ref[li]
                return jnp.maximum(hh, 0.0) if relu else hh

            if g.depth == 1:
                h = layer(0, h)
            else:
                # fori_loop (not a Python unroll) bounds the live set to one
                # (in_pad, out_pad) weight tile no matter how deep the stack is.
                h = lax.fori_loop(0, g.depth, layer, h.astype(jnp.float32))
        o_ref[...] = h.astype(o_ref.dtype)

    return kernel


# ------------------------------------------------------------------
# VMEM budget: resident weights + double-buffered activation tiles + live temps,
# with headroom, capped at ~75% of physical VMEM (v7x: 64 MiB per TensorCore).
# ------------------------------------------------------------------
def _vmem_limit_bytes(meta, tb):
    wsize = jnp.dtype(meta.compute_dtype).itemsize
    w_bytes = sum(g.depth * g.in_pad * g.out_pad for g in meta.groups) * wsize
    b_bytes = sum(g.depth * g.out_pad for g in meta.groups) * 4
    if not meta.single_buffer_weights:           # default pipelining keeps 2 buffers
        w_bytes, b_bytes = 2 * w_bytes, 2 * b_bytes
    act_bytes = 2 * tb * meta.in_pad * wsize     # double-buffered input tile
    out_bytes = 2 * tb * meta.out_pad * 4        # double-buffered output tile
    widest = max(meta.in_pad, max(g.out_pad for g in meta.groups))
    live_bytes = 3 * tb * widest * 4             # h carry / dot result / epilogue temps
    need = w_bytes + b_bytes + act_bytes + out_bytes + live_bytes
    limit = max(2 * need, 32 << 20)              # generous compiler-scratch headroom
    cap = 96 << 20                               # below v5e/v6e 128 MiB physical
    try:
        cap = min(cap, int(pltpu.get_tpu_info().vmem_capacity_bytes) * 3 // 4)
    except Exception:
        pass
    return int(min(limit, cap))


# ------------------------------------------------------------------
# Wrapper: the jitted forward pass.
# ------------------------------------------------------------------
def net_forward(x, stacks, *, meta, batch_tile=512, do_res=False):
    cdt = meta.compute_dtype
    orig_shape = x.shape
    xf = x.reshape(-1, meta.imsize)
    n = xf.shape[0]

    # Batch tile: multiple of the sublane packing of the compute dtype, no larger than
    # the row-padded batch.  Larger tiles amortize the ~0.35us/step grid overhead; on
    # v7x keep >=2 grid steps (lower batch_tile) if you want megacore sharding.
    min_rows = {4: 8, 2: 16, 1: 32}.get(jnp.dtype(cdt).itemsize, 8)
    tb = max(min_rows, _round_up(min(batch_tile, _round_up(n, min_rows)), min_rows))
    n_pad = _round_up(n, tb)

    # Pad / cast activations only when actually needed (static shape checks).
    if n_pad != n or meta.in_pad != meta.imsize:
        xp = jnp.zeros((n_pad, meta.in_pad), cdt).at[:n, :meta.imsize].set(
            xf.astype(cdt))
    else:
        xp = xf.astype(cdt)

    single = meta.single_buffer_weights

    def resident_spec(shape):
        # Grid-invariant block: DMA'd once, VMEM-resident; single-buffered when the
        # installed Pallas supports pipeline_mode=pl.Buffered(1).
        zeros = (0,) * len(shape)
        if single:
            return pl.BlockSpec(shape, lambda i: zeros, pipeline_mode=pl.Buffered(1))
        return pl.BlockSpec(shape, lambda i: zeros)

    in_specs = [pl.BlockSpec((tb, meta.in_pad), lambda i: (i, 0))]
    for g in meta.groups:
        in_specs.append(resident_spec((g.depth, g.in_pad, g.out_pad)))
        in_specs.append(resident_spec((g.depth, 1, g.out_pad)))

    out = pl.pallas_call(
        _make_mlp_kernel(meta.groups, cdt),
        out_shape=jax.ShapeDtypeStruct((n_pad, meta.out_pad), jnp.float32),
        grid=(n_pad // tb,),
        in_specs=in_specs,
        out_specs=pl.BlockSpec((tb, meta.out_pad), lambda i: (i, 0)),
        compiler_params=pltpu.CompilerParams(
            dimension_semantics=("parallel",),
            vmem_limit_bytes=_vmem_limit_bytes(meta, tb),
        ),
    )(xp, *stacks)

    logits = out[:n, :meta.out_dim]
    if do_res:
        # Residual branch of Net.forward (shape-valid only when the net output matches
        # the input element count, as in the original module).
        return x + logits.reshape(orig_shape).astype(x.dtype)
    return logits


# ------------------------------------------------------------------
# Parameter construction mirroring Net.__init__ layer sizes (PyTorch Linear init),
# with weights stored (in, out) == PyTorch weight.T.
# ------------------------------------------------------------------
def init_net_params(key, num_layers, size, channel, num_classes=10,
                    do_classification=True):
    imsize = size * size * channel if do_classification else size * channel
    l_sizes = [imsize, imsize] + [50] * 20
    dims = [l_sizes[i] for i in range(num_layers + 1)] + [num_classes]
    params = []
    keys = jax.random.split(key, 2 * (num_layers + 1))
    for li in range(num_layers + 1):
        fan_in = dims[li]
        bound = 1.0 / (fan_in ** 0.5)
        w = jax.random.uniform(keys[2 * li], (dims[li], dims[li + 1]),
                               jnp.float32, minval=-bound, maxval=bound)
        b = jax.random.uniform(keys[2 * li + 1], (dims[li + 1],),
                               jnp.float32, minval=-bound, maxval=bound)
        params.append((w, b))
    return params


if __name__ == "__main__":
    key = jax.random.PRNGKey(0)
    kx, kp = jax.random.split(key)

    batch, channel, size = 2, 4, 16           # imsize = 16*16*4 = 1024
    num_layers, num_classes = 4, 10
    # Net layers: Linear(1024,1024)+ReLU, Linear(1024,50)+ReLU,
    #             Linear(50,50)+ReLU x2 (-> one stacked fori_loop group),
    #             Linear(50,10).

    x = jax.random.normal(kx, (batch, channel, size, size), jnp.float32)
    params = init_net_params(kp, num_layers, size, channel, num_classes)

    # One-time prep OUTSIDE the per-step jit: pad to 128-lane multiples, cast MXU
    # operands to bf16, stack uniform layers, probe Buffered(1) support.
    stacks, meta = prepare_net_params(params, compute_dtype=jnp.bfloat16)

    fwd = jax.jit(functools.partial(net_forward, meta=meta))
    out = fwd(x, stacks)
    jax.block_until_ready(out)
    assert out.shape == (batch, num_classes) and out.dtype == jnp.float32

    # Plain-JAX reference with the same operand rounding (bf16 MXU inputs, f32 accum).
    def ref_forward(xx, ps, cdt):
        h = xx.reshape(-1, ps[0][0].shape[0])
        for li, (w, b) in enumerate(ps):
            h = jnp.dot(h.astype(cdt), w.astype(cdt),
                        preferred_element_type=jnp.float32) + b
            if li < len(ps) - 1:
                h = jnp.maximum(h, 0.0)
        return h

    ref = ref_forward(x, params, jnp.bfloat16)
    assert jnp.allclose(out, ref, atol=5e-2, rtol=5e-2)

    print("KERNEL_OK")
</pallas_src>

<mosaic_0001>
module attributes {stable_mosaic.version = 11 : i64} {
  func.func @_k(%arg0: i32, %arg1: memref<8x128xf32, #tpu.memory_space<vmem>>, %arg2: memref<8x128xf32, #tpu.memory_space<vmem>>) attributes {dimension_semantics = [#tpu.dimension_semantics<arbitrary>], iteration_bounds = array<i64: 1>, scalar_prefetch = 0 : i64, scratch_operands = 0 : i64, tpu.core_type = #tpu.core_type<tc>, window_params = [{pipeline_mode = #tpu.pipeline_mode<synchronous>, transform_indices = @transform_0, window_bounds = array<i64: 8, 128>}, {pipeline_mode = #tpu.pipeline_mode<synchronous>, transform_indices = @transform_1, window_bounds = array<i64: 8, 128>}]} {
    %c0 = arith.constant 0 : index
    %c0_0 = arith.constant 0 : index
    %0 = vector.load %arg1[%c0, %c0_0] : memref<8x128xf32, #tpu.memory_space<vmem>>, vector<8x128xf32>
    %cst = arith.constant 1.000000e+00 : f32
    %1 = vector.broadcast %cst : f32 to vector<8x128xf32>
    %2 = arith.addf %0, %1 : vector<8x128xf32>
    %c0_1 = arith.constant 0 : index
    %c0_2 = arith.constant 0 : index
    %3 = vector.load %arg2[%c0_1, %c0_2] : memref<8x128xf32, #tpu.memory_space<vmem>>, vector<8x128xf32>
    tpu.vector_store %arg2[%c0_1, %c0_2], %2 {strides = array<i32>} : memref<8x128xf32, #tpu.memory_space<vmem>>, vector<8x128xf32>,
    return
  }
  func.func @transform_0(%arg0: i32) -> (i32, i32) {
    %c0_i32 = arith.constant 0 : i32
    %c0_i32_0 = arith.constant 0 : i32
    %c0_i32_1 = arith.constant 0 : i32
    return %c0_i32, %c0_i32_0 : i32, i32
  }
  func.func @transform_1(%arg0: i32) -> (i32, i32) {
    %c0_i32 = arith.constant 0 : i32
    %c0_i32_0 = arith.constant 0 : i32
    %c0_i32_1 = arith.constant 0 : i32
    return %c0_i32, %c0_i32_0 : i32, i32
  }
}

module attributes {stable_mosaic.version = 11 : i64} {
  func.func @kernel(%arg0: i32, %arg1: memref<16x1024xbf16, #tpu.memory_space<vmem>>, %arg2: memref<1x1024x1024xbf16, #tpu.memory_space<vmem>>, %arg3: memref<1x1x1024xf32, #tpu.memory_space<vmem>>, %arg4: memref<1x1024x128xbf16, #tpu.memory_space<vmem>>, %arg5: memref<1x1x128xf32, #tpu.memory_space<vmem>>, %arg6: memref<2x128x128xbf16, #tpu.memory_space<vmem>>, %arg7: memref<2x1x128xf32, #tpu.memory_space<vmem>>, %arg8: memref<1x128x128xbf16, #tpu.memory_space<vmem>>, %arg9: memref<1x1x128xf32, #tpu.memory_space<vmem>>, %arg10: memref<16x128xf32, #tpu.memory_space<vmem>>) attributes {dimension_semantics = [#tpu.dimension_semantics<parallel>], iteration_bounds = array<i64: 1>, scalar_prefetch = 0 : i64, scratch_operands = 0 : i64, tpu.core_type = #tpu.core_type<tc>, window_params = [{transform_indices = @transform_0, window_bounds = array<i64: 16, 1024>}, {pipeline_mode = #tpu.pipeline_mode<synchronous>, transform_indices = @transform_1, window_bounds = array<i64: 1, 1024, 1024>}, {pipeline_mode = #tpu.pipeline_mode<synchronous>, transform_indices = @transform_2, window_bounds = array<i64: 1, 1, 1024>}, {pipeline_mode = #tpu.pipeline_mode<synchronous>, transform_indices = @transform_3, window_bounds = array<i64: 1, 1024, 128>}, {pipeline_mode = #tpu.pipeline_mode<synchronous>, transform_indices = @transform_4, window_bounds = array<i64: 1, 1, 128>}, {pipeline_mode = #tpu.pipeline_mode<synchronous>, transform_indices = @transform_5, window_bounds = array<i64: 2, 128, 128>}, {pipeline_mode = #tpu.pipeline_mode<synchronous>, transform_indices = @transform_6, window_bounds = array<i64: 2, 1, 128>}, {pipeline_mode = #tpu.pipeline_mode<synchronous>, transform_indices = @transform_7, window_bounds = array<i64: 1, 128, 128>}, {pipeline_mode = #tpu.pipeline_mode<synchronous>, transform_indices = @transform_8, window_bounds = array<i64: 1, 1, 128>}, {transform_indices = @transform_9, window_bounds = array<i64: 16, 128>}]} {
    %c0 = arith.constant 0 : index
    %c0_0 = arith.constant 0 : index
    %0 = vector.load %arg1[%c0, %c0_0] : memref<16x1024xbf16, #tpu.memory_space<vmem>>, vector<16x1024xbf16>
    %c0_1 = arith.constant 0 : index
    %c0_2 = arith.constant 0 : index
    %c0_3 = arith.constant 0 : index
    %1 = vector.load %arg2[%c0_1, %c0_2, %c0_3] : memref<1x1024x1024xbf16, #tpu.memory_space<vmem>>, vector<1x1024x1024xbf16>
    %2 = vector.shape_cast %1 : vector<1x1024x1024xbf16> to vector<1024x1024xbf16>
    %cst = arith.constant dense<0.000000e+00> : vector<16x1024xf32>
    %3 = tpu.matmul %0, %2, %cst {dimension_numbers = #tpu.dot_dimension_numbers<[1], [0], [0], [1], [0, 0, 1, 1], [], []>} : vector<16x1024xbf16>, vector<1024x1024xbf16>, vector<16x1024xf32> -> vector<16x1024xf32>
    %c0_4 = arith.constant 0 : index
    %c0_5 = arith.constant 0 : index
    %c0_6 = arith.constant 0 : index
    %4 = vector.load %arg3[%c0_4, %c0_5, %c0_6] : memref<1x1x1024xf32, #tpu.memory_space<vmem>>, vector<1x1x1024xf32>
    %5 = vector.shape_cast %4 : vector<1x1x1024xf32> to vector<1x1024xf32>
    %6 = vector.broadcast %5 : vector<1x1024xf32> to vector<16x1024xf32>
    %7 = arith.addf %3, %6 : vector<16x1024xf32>
    %cst_7 = arith.constant 0.000000e+00 : f32
    %8 = vector.broadcast %cst_7 : f32 to vector<16x1024xf32>
    %9 = arith.maximumf %7, %8 : vector<16x1024xf32>
    %10 = arith.truncf %9 : vector<16x1024xf32> to vector<16x1024xbf16>
    %c0_8 = arith.constant 0 : index
    %c0_9 = arith.constant 0 : index
    %c0_10 = arith.constant 0 : index
    %11 = vector.load %arg4[%c0_8, %c0_9, %c0_10] : memref<1x1024x128xbf16, #tpu.memory_space<vmem>>, vector<1x1024x128xbf16>
    %12 = vector.shape_cast %11 : vector<1x1024x128xbf16> to vector<1024x128xbf16>
    %cst_11 = arith.constant dense<0.000000e+00> : vector<16x128xf32>
    %13 = tpu.matmul %10, %12, %cst_11 {dimension_numbers = #tpu.dot_dimension_numbers<[1], [0], [0], [1], [0, 0, 1, 1], [], []>} : vector<16x1024xbf16>, vector<1024x128xbf16>, vector<16x128xf32> -> vector<16x128xf32>
    %c0_12 = arith.constant 0 : index
    %c0_13 = arith.constant 0 : index
    %c0_14 = arith.constant 0 : index
    %14 = vector.load %arg5[%c0_12, %c0_13, %c0_14] : memref<1x1x128xf32, #tpu.memory_space<vmem>>, vector<1x1x128xf32>
    %15 = vector.shape_cast %14 : vector<1x1x128xf32> to vector<1x128xf32>
    %16 = vector.broadcast %15 : vector<1x128xf32> to vector<16x128xf32>
    %17 = arith.addf %13, %16 : vector<16x128xf32>
    %cst_15 = arith.constant 0.000000e+00 : f32
    %18 = vector.broadcast %cst_15 : f32 to vector<16x128xf32>
    %19 = arith.maximumf %17, %18 : vector<16x128xf32>
    %c0_i32 = arith.constant 0 : i32
    %c2_i32 = arith.constant 2 : i32
    %20 = arith.addi %c0_i32, %c2_i32 : i32
    %c1_i32 = arith.constant 1 : i32
    %21 = scf.for %arg11 = %c0_i32 to %20 step %c1_i32 iter_args(%arg12 = %19) -> (vector<16x128xf32>)  : i32 {
      %31 = arith.truncf %arg12 : vector<16x128xf32> to vector<16x128xbf16>
      %32 = arith.index_cast %arg11 : i32 to index
      %c0_26 = arith.constant 0 : index
      %c0_27 = arith.constant 0 : index
      %33 = vector.load %arg6[%32, %c0_26, %c0_27] : memref<2x128x128xbf16, #tpu.memory_space<vmem>>, vector<1x128x128xbf16>
      %34 = vector.shape_cast %33 : vector<1x128x128xbf16> to vector<128x128xbf16>
      %cst_28 = arith.constant dense<0.000000e+00> : vector<16x128xf32>
      %35 = tpu.matmul %31, %34, %cst_28 {dimension_numbers = #tpu.dot_dimension_numbers<[1], [0], [0], [1], [0, 0, 1, 1], [], []>} : vector<16x128xbf16>, vector<128x128xbf16>, vector<16x128xf32> -> vector<16x128xf32>
      %36 = arith.index_cast %arg11 : i32 to index
      %c0_29 = arith.constant 0 : index
      %c0_30 = arith.constant 0 : index
      %37 = vector.load %arg7[%36, %c0_29, %c0_30] : memref<2x1x128xf32, #tpu.memory_space<vmem>>, vector<1x1x128xf32>
      %38 = vector.shape_cast %37 : vector<1x1x128xf32> to vector<1x128xf32>
      %39 = vector.broadcast %38 : vector<1x128xf32> to vector<16x128xf32>
      %40 = arith.addf %35, %39 : vector<16x128xf32>
      %cst_31 = arith.constant 0.000000e+00 : f32
      %41 = vector.broadcast %cst_31 : f32 to vector<16x128xf32>
      %42 = arith.maximumf %40, %41 : vector<16x128xf32>
      scf.yield %42 : vector<16x128xf32>
    }
    %c2_i32_16 = arith.constant 2 : i32
    %22 = arith.truncf %21 : vector<16x128xf32> to vector<16x128xbf16>
    %c0_17 = arith.constant 0 : index
    %c0_18 = arith.constant 0 : index
    %c0_19 = arith.constant 0 : index
    %23 = vector.load %arg8[%c0_17, %c0_18, %c0_19] : memref<1x128x128xbf16, #tpu.memory_space<vmem>>, vector<1x128x128xbf16>
    %24 = vector.shape_cast %23 : vector<1x128x128xbf16> to vector<128x128xbf16>
    %cst_20 = arith.constant dense<0.000000e+00> : vector<16x128xf32>
    %25 = tpu.matmul %22, %24, %cst_20 {dimension_numbers = #tpu.dot_dimension_numbers<[1], [0], [0], [1], [0, 0, 1, 1], [], []>} : vector<16x128xbf16>, vector<128x128xbf16>, vector<16x128xf32> -> vector<16x128xf32>
    %c0_21 = arith.constant 0 : index
    %c0_22 = arith.constant 0 : index
    %c0_23 = arith.constant 0 : index
    %26 = vector.load %arg9[%c0_21, %c0_22, %c0_23] : memref<1x1x128xf32, #tpu.memory_space<vmem>>, vector<1x1x128xf32>
    %27 = vector.shape_cast %26 : vector<1x1x128xf32> to vector<1x128xf32>
    %28 = vector.broadcast %27 : vector<1x128xf32> to vector<16x128xf32>
    %29 = arith.addf %25, %28 : vector<16x128xf32>
    %c0_24 = arith.constant 0 : index
    %c0_25 = arith.constant 0 : index
    %30 = vector.load %arg10[%c0_24, %c0_25] : memref<16x128xf32, #tpu.memory_space<vmem>>, vector<16x128xf32>
    tpu.vector_store %arg10[%c0_24, %c0_25], %29 {strides = array<i32>} : memref<16x128xf32, #tpu.memory_space<vmem>>, vector<16x128xf32>,
    return
  }
  func.func @transform_0(%arg0: i32) -> (i32, i32) {
    %c0_i32 = arith.constant 0 : i32
    %c0_i32_0 = arith.constant 0 : i32
    return %arg0, %c0_i32 : i32, i32
  }
  func.func @transform_1(%arg0: i32) -> (i32, i32, i32) {
    %c0_i32 = arith.constant 0 : i32
    %c0_i32_0 = arith.constant 0 : i32
    %c0_i32_1 = arith.constant 0 : i32
    %c0_i32_2 = arith.constant 0 : i32
    return %c0_i32, %c0_i32_0, %c0_i32_1 : i32, i32, i32
  }
  func.func @transform_2(%arg0: i32) -> (i32, i32, i32) {
    %c0_i32 = arith.constant 0 : i32
    %c0_i32_0 = arith.constant 0 : i32
    %c0_i32_1 = arith.constant 0 : i32
    %c0_i32_2 = arith.constant 0 : i32
    return %c0_i32, %c0_i32_0, %c0_i32_1 : i32, i32, i32
  }
  func.func @transform_3(%arg0: i32) -> (i32, i32, i32) {
    %c0_i32 = arith.constant 0 : i32
    %c0_i32_0 = arith.constant 0 : i32
    %c0_i32_1 = arith.constant 0 : i32
    %c0_i32_2 = arith.constant 0 : i32
    return %c0_i32, %c0_i32_0, %c0_i32_1 : i32, i32, i32
  }
  func.func @transform_4(%arg0: i32) -> (i32, i32, i32) {
    %c0_i32 = arith.constant 0 : i32
    %c0_i32_0 = arith.constant 0 : i32
    %c0_i32_1 = arith.constant 0 : i32
    %c0_i32_2 = arith.constant 0 : i32
    return %c0_i32, %c0_i32_0, %c0_i32_1 : i32, i32, i32
  }
  func.func @transform_5(%arg0: i32) -> (i32, i32, i32) {
    %c0_i32 = arith.constant 0 : i32
    %c0_i32_0 = arith.constant 0 : i32
    %c0_i32_1 = arith.constant 0 : i32
    %c0_i32_2 = arith.constant 0 : i32
    return %c0_i32, %c0_i32_0, %c0_i32_1 : i32, i32, i32
  }
  func.func @transform_6(%arg0: i32) -> (i32, i32, i32) {
    %c0_i32 = arith.constant 0 : i32
    %c0_i32_0 = arith.constant 0 : i32
    %c0_i32_1 = arith.constant 0 : i32
    %c0_i32_2 = arith.constant 0 : i32
    return %c0_i32, %c0_i32_0, %c0_i32_1 : i32, i32, i32
  }
  func.func @transform_7(%arg0: i32) -> (i32, i32, i32) {
    %c0_i32 = arith.constant 0 : i32
    %c0_i32_0 = arith.constant 0 : i32
    %c0_i32_1 = arith.constant 0 : i32
    %c0_i32_2 = arith.constant 0 : i32
    return %c0_i32, %c0_i32_0, %c0_i32_1 : i32, i32, i32
  }
  func.func @transform_8(%arg0: i32) -> (i32, i32, i32) {
    %c0_i32 = arith.constant 0 : i32
    %c0_i32_0 = arith.constant 0 : i32
    %c0_i32_1 = arith.constant 0 : i32
    %c0_i32_2 = arith.constant 0 : i32
    return %c0_i32, %c0_i32_0, %c0_i32_1 : i32, i32, i32
  }
  func.func @transform_9(%arg0: i32) -> (i32, i32) {
    %c0_i32 = arith.constant 0 : i32
    %c0_i32_0 = arith.constant 0 : i32
    return %arg0, %c0_i32 : i32, i32
  }
}

</mosaic_0001>

<llo_original>
// kernel: tpu_custom_call.1
$region0: #{tpu_custom_call.1}
  #allocation0 [shape = 'u32[]', space=smem, size = 0x4, offset = 0x4, fixed_abs, tag = 'smem constant byte address 0x4 - core index']
  #allocation1 [shape = 'u32[144,128]{1,0:T(1,128)}', space=vmem, size = 0x12000, scoped, tag = 'internal scratch']
  %s0 = inlined_call_operand.hbm [shape: f32[8,128], index: 0, kind: input, shape index: {}]
  %s1 = inlined_call_operand.hbm [shape: f32[8,128], index: 1, kind: output, shape index: {}]
  %s2 = sld [smem:[#allocation0]]
  $region18: #{tpu_custom_call.1} parent=0
    _
  %s4 = ssub.s32 1, %s2
  %s5 = scalar_select 0, %s4, %s2
  $region1: #{tpu_custom_call.1} parent=0
    #allocation2 [shape = 'u8[4096]{0}', space=vmem, size = 0x1000, scoped, tag = 'input window, operand 0, single buffered']
    #allocation3 [shape = 's32[1]{0}', space=sflag, size = 0x4, scoped, tag = 'scoped memory for tpu_custom_call.1']
    #allocation4 [shape = 's32[1]{0}', space=sflag, size = 0x4, scoped, tag = 'scoped memory for tpu_custom_call.1']
    #allocation5 [shape = 'u8[4096]{0}', space=vmem, size = 0x1000, scoped, tag = 'output window, operand 0, single buffered']
    %6 = vsyncpa [#allocation3], 0
    %7 = vsyncpa [#allocation4], 0
    // Predicated region
    $region2: #{tpu_custom_call.1} parent=1 // pred_check
      _
    $region3: #{tpu_custom_call.1} parent=1 // pred_check_branch
      %9 = sbr.rel (0) target = $region5
    $region4: #{tpu_custom_call.1} parent=1 // pred_region
      %s11 = ssub.s32 128, 128
      %12 = vsyncadd [#allocation3], %s11
      %s14 = sshll.u32 [#allocation2], 4
      %s15 = int_to_ptr.vmem [resolvable:$true] %s14
      %17 = dma.hbm_to_vmem [thread:$0]  %s0, 128, %s15, [#allocation3]
    $region5: #{tpu_custom_call.1} parent=1 // pred_fallthru
      _
    // Predicated region
    $region6: #{tpu_custom_call.1} parent=1 // pred_check
      _
    $region7: #{tpu_custom_call.1} parent=1 // pred_check_branch
      %19 = sbr.rel (0) target = $region9
    $region8: #{tpu_custom_call.1} parent=1 // pred_region
      %20 = dma.done [#allocation3], 128
    $region9: #{tpu_custom_call.1} parent=1 // pred_fallthru
      _
    %v21 = vld [vmem:[#allocation2] sm:$0xff]
    %v22 = vadd.f32 %v21, 1.0
    %23 = vst [vmem:[#allocation5] sm:$0xff] %v22
    // Predicated region
    $region10: #{tpu_custom_call.1} parent=1 // pred_check
      _
    $region11: #{tpu_custom_call.1} parent=1 // pred_check_branch
      %25 = sbr.rel (0) target = $region13
    $region12: #{tpu_custom_call.1} parent=1 // pred_region
      %s27 = ssub.s32 128, 128
      %28 = vsyncadd [#allocation4], %s27
      %s30 = sshll.u32 [#allocation5], 4
      %s31 = int_to_ptr.vmem [resolvable:$true] %s30
      %33 = dma.vmem_to_hbm [thread:$0]  %s31, 128, %s1, [#allocation4]
    $region13: #{tpu_custom_call.1} parent=1 // pred_fallthru
      _
    // Predicated region
    $region14: #{tpu_custom_call.1} parent=1 // pred_check
      _
    $region15: #{tpu_custom_call.1} parent=1 // pred_check_branch
      %35 = sbr.rel (0) target = $region17
    $region16: #{tpu_custom_call.1} parent=1 // pred_region
      %36 = dma.done [#allocation4], 128
    $region17: #{tpu_custom_call.1} parent=1 // pred_fallthru
      _
    %37 = vsyncpa [#allocation3], 1
    %38 = vsyncpa [#allocation4], 1

// kernel: net_forward.1
$region0: #{net_forward.1}
  #allocation0 [shape = 'u32[]', space=smem, size = 0x4, offset = 0x4, fixed_abs, tag = 'smem constant byte address 0x4 - core index']
  #allocation1 [shape = 'u32[144,128]{1,0:T(1,128)}', space=vmem, size = 0x12000, scoped, tag = 'internal scratch']
  %s0 = inlined_call_operand.vmem [shape: bf16[16,1024], index: 0, kind: input, shape index: {}]
  %s1 = inlined_call_operand.hbm [shape: bf16[1,1024,1024], index: 1, kind: input, shape index: {}]
  %s2 = inlined_call_operand.hbm [shape: f32[1,1,1024], index: 2, kind: input, shape index: {}]
  %s3 = inlined_call_operand.hbm [shape: bf16[1,1024,128], index: 3, kind: input, shape index: {}]
  %s4 = inlined_call_operand.hbm [shape: f32[1,1,128], index: 4, kind: input, shape index: {}]
  %s5 = inlined_call_operand.hbm [shape: bf16[2,128,128], index: 5, kind: input, shape index: {}]
  %s6 = inlined_call_operand.hbm [shape: f32[2,1,128], index: 6, kind: input, shape index: {}]
  %s7 = inlined_call_operand.hbm [shape: bf16[1,128,128], index: 7, kind: input, shape index: {}]
  %s8 = inlined_call_operand.hbm [shape: f32[1,1,128], index: 8, kind: input, shape index: {}]
  %s9 = inlined_call_operand.vmem [shape: f32[16,128], index: 9, kind: output, shape index: {}]
  %s10 = sld [smem:[#allocation0]]
  $region85: #{net_forward.1} parent=0
    _
  %s12 = ssub.s32 1, %s10
  %s13 = scalar_select 0, %s12, %s10
  $region1: #{net_forward.1} parent=0
    #allocation2 [shape = 'u8[2097152]{0}', space=vmem, size = 0x200000, scoped, tag = 'input window, operand 1, single buffered']
    #allocation3 [shape = 's32[1]{0}', space=sflag, size = 0x4, scoped, tag = 'scoped memory for net_forward.1']
    #allocation4 [shape = 'u8[4096]{0}', space=vmem, size = 0x1000, scoped, tag = 'input window, operand 2, single buffered']
    #allocation5 [shape = 's32[1]{0}', space=sflag, size = 0x4, scoped, tag = 'scoped memory for net_forward.1']
    #allocation6 [shape = 'u8[262144]{0}', space=vmem, size = 0x40000, scoped, tag = 'input window, operand 3, single buffered']
    #allocation7 [shape = 'u8[512]{0}', space=vmem, size = 0x400, scoped, tag = 'input window, operand 4, single buffered']
    #allocation8 [shape = 's32[1]{0}', space=sflag, size = 0x4, scoped, tag = 'scoped memory for net_forward.1']
    #allocation9 [shape = 'u8[65536]{0}', space=vmem, size = 0x10000, scoped, tag = 'input window, operand 5, single buffered']
    #allocation10 [shape = 'u8[1024]{0}', space=vmem, size = 0x400, scoped, tag = 'input window, operand 6, single buffered']
    #allocation11 [shape = 's32[1]{0}', space=sflag, size = 0x4, scoped, tag = 'scoped memory for net_forward.1']
    #allocation12 [shape = 'u8[32768]{0}', space=vmem, size = 0x8000, scoped, tag = 'input window, operand 7, single buffered']
    #allocation13 [shape = 'u8[512]{0}', space=vmem, size = 0x400, scoped, tag = 'input window, operand 8, single buffered']
    #allocation14 [shape = 's32[1]{0}', space=sflag, size = 0x4, scoped, tag = 'scoped memory for net_forward.1']
    %14 = vsyncpa [#allocation3], 0
    %15 = vsyncpa [#allocation5], 0
    %16 = vsyncpa [#allocation8], 0
    %17 = vsyncpa [#allocation11], 0
    %18 = vsyncpa [#allocation14], 0
    // Predicated region
    $region2: #{net_forward.1} parent=1 // pred_check
      _
    $region3: #{net_forward.1} parent=1 // pred_check_branch
      %20 = sbr.rel (0) target = $region5
    $region4: #{net_forward.1} parent=1 // pred_region
      _
    $region5: #{net_forward.1} parent=1 // pred_fallthru
      _
    // Predicated region
    $region6: #{net_forward.1} parent=1 // pred_check
      _
    $region7: #{net_forward.1} parent=1 // pred_check_branch
      %22 = sbr.rel (0) target = $region9
    $region8: #{net_forward.1} parent=1 // pred_region
      %s24 = ssub.s32 65536, 65536
      %25 = vsyncadd [#allocation3], %s24
      %s26 = sshll.u32 [#allocation2], 4
      %s27 = int_to_ptr.vmem [resolvable:$true] %s26
      %32 = dma.hbm_to_vmem [thread:$0]  %s1, 65536, %s27, [#allocation3], 512, 512, 32
    $region9: #{net_forward.1} parent=1 // pred_fallthru
      _
    // Predicated region
    $region10: #{net_forward.1} parent=1 // pred_check
      _
    $region11: #{net_forward.1} parent=1 // pred_check_branch
      %34 = sbr.rel (0) target = $region13
    $region12: #{net_forward.1} parent=1 // pred_region
      %s36 = ssub.s32 128, 128
      %37 = vsyncadd [#allocation5], %s36
      %s39 = sshll.u32 [#allocation4], 4
      %s40 = int_to_ptr.vmem [resolvable:$true] %s39
      %42 = dma.hbm_to_vmem [thread:$0]  %s2, 128, %s40, [#allocation5]
    $region13: #{net_forward.1} parent=1 // pred_fallthru
      _
    // Predicated region
    $region14: #{net_forward.1} parent=1 // pred_check
      _
    $region15: #{net_forward.1} parent=1 // pred_check_branch
      %44 = sbr.rel (0) target = $region17
    $region16: #{net_forward.1} parent=1 // pred_region
      %s46 = ssub.s32 8192, 8192
      %47 = vsyncadd [#allocation5], %s46
      %s48 = sshll.u32 [#allocation6], 4
      %s49 = int_to_ptr.vmem [resolvable:$true] %s48
      %54 = dma.hbm_to_vmem [thread:$0]  %s3, 8192, %s49, [#allocation5], 64, 64, 4
    $region17: #{net_forward.1} parent=1 // pred_fallthru
      _
    // Predicated region
    $region18: #{net_forward.1} parent=1 // pred_check
      _
    $region19: #{net_forward.1} parent=1 // pred_check_branch
      %56 = sbr.rel (0) target = $region21
    $region20: #{net_forward.1} parent=1 // pred_region
      %s58 = ssub.s32 16, 16
      %59 = vsyncadd [#allocation8], %s58
      %s61 = sshll.u32 [#allocation7], 4
      %s62 = int_to_ptr.vmem [resolvable:$true] %s61
      %64 = dma.hbm_to_vmem [thread:$0]  %s4, 16, %s62, [#allocation8]
    $region21: #{net_forward.1} parent=1 // pred_fallthru
      _
    // Predicated region
    $region22: #{net_forward.1} parent=1 // pred_check
      _
    $region23: #{net_forward.1} parent=1 // pred_check_branch
      %66 = sbr.rel (0) target = $region25
    $region24: #{net_forward.1} parent=1 // pred_region
      %s68 = ssub.s32 2048, 2048
      %69 = vsyncadd [#allocation8], %s68
      %s70 = sshll.u32 [#allocation9], 4
      %s71 = int_to_ptr.vmem [resolvable:$true] %s70
      %76 = dma.hbm_to_vmem [thread:$0]  %s5, 2048, %s71, [#allocation8], 64, 64, 4
    $region25: #{net_forward.1} parent=1 // pred_fallthru
      _
    // Predicated region
    $region26: #{net_forward.1} parent=1 // pred_check
      _
    $region27: #{net_forward.1} parent=1 // pred_check_branch
      %78 = sbr.rel (0) target = $region29
    $region28: #{net_forward.1} parent=1 // pred_region
      %s80 = ssub.s32 32, 32
      %81 = vsyncadd [#allocation11], %s80
      %s82 = sshll.u32 [#allocation10], 4
      %s83 = int_to_ptr.vmem [resolvable:$true] %s82
      %88 = dma.hbm_to_vmem [thread:$0]  %s6, 32, %s83, [#allocation11], 16, 16, 1
    $region29: #{net_forward.1} parent=1 // pred_fallthru
      _
    // Predicated region
    $region30: #{net_forward.1} parent=1 // pred_check
      _
    $region31: #{net_forward.1} parent=1 // pred_check_branch
      %90 = sbr.rel (0) target = $region33
    $region32: #{net_forward.1} parent=1 // pred_region
      %s92 = ssub.s32 1024, 1024
      %93 = vsyncadd [#allocation11], %s92
      %s94 = sshll.u32 [#allocation12], 4
      %s95 = int_to_ptr.vmem [resolvable:$true] %s94
      %100 = dma.hbm_to_vmem [thread:$0]  %s7, 1024, %s95, [#allocation11], 64, 64, 4
    $region33: #{net_forward.1} parent=1 // pred_fallthru
      _
    // Predicated region
    $region34: #{net_forward.1} parent=1 // pred_check
      _
    $region35: #{net_forward.1} parent=1 // pred_check_branch
      %102 = sbr.rel (0) target = $region37
    $region36: #{net_forward.1} parent=1 // pred_region
      %s104 = ssub.s32 16, 16
      %105 = vsyncadd [#allocation14], %s104
      %s107 = sshll.u32 [#allocation13], 4
      %s108 = int_to_ptr.vmem [resolvable:$true] %s107
      %110 = dma.hbm_to_vmem [thread:$0]  %s8, 16, %s108, [#allocation14]
    $region37: #{net_forward.1} parent=1 // pred_fallthru
      _
    // Predicated region
    $region38: #{net_forward.1} parent=1 // pred_check
      _
    $region39: #{net_forward.1} parent=1 // pred_check_branch
      %112 = sbr.rel (0) target = $region41
    $region40: #{net_forward.1} parent=1 // pred_region
      %113 = dma.done [#allocation3], 65536
    $region41: #{net_forward.1} parent=1 // pred_fallthru
      _
    // Predicated region
    $region42: #{net_forward.1} parent=1 // pred_check
      _
    $region43: #{net_forward.1} parent=1 // pred_check_branch
      %115 = sbr.rel (0) target = $region45
    $region44: #{net_forward.1} parent=1 // pred_region
      %116 = dma.done [#allocation5], 128
    $region45: #{net_forward.1} parent=1 // pred_fallthru
      _
    // Predicated region
    $region46: #{net_forward.1} parent=1 // pred_check
      _
    $region47: #{net_forward.1} parent=1 // pred_check_branch
      %118 = sbr.rel (0) target = $region49
    $region48: #{net_forward.1} parent=1 // pred_region
      %119 = dma.done [#allocation5], 8192
    $region49: #{net_forward.1} parent=1 // pred_fallthru
      _
    // Predicated region
    $region50: #{net_forward.1} parent=1 // pred_check
      _
    $region51: #{net_forward.1} parent=1 // pred_check_branch
      %121 = sbr.rel (0) target = $region53
    $region52: #{net_forward.1} parent=1 // pred_region
      %122 = dma.done [#allocation8], 16
    $region53: #{net_forward.1} parent=1 // pred_fallthru
      _
    // Predicated region
    $region54: #{net_forward.1} parent=1 // pred_check
      _
    $region55: #{net_forward.1} parent=1 // pred_check_branch
      %124 = sbr.rel (0) target = $region57
    $region56: #{net_forward.1} parent=1 // pred_region
      %125 = dma.done [#allocation8], 2048
    $region57: #{net_forward.1} parent=1 // pred_fallthru
      _
    // Predicated region
    $region58: #{net_forward.1} parent=1 // pred_check
      _
    $region59: #{net_forward.1} parent=1 // pred_check_branch
      %127 = sbr.rel (0) target = $region61
    $region60: #{net_forward.1} parent=1 // pred_region
      %128 = dma.done [#allocation11], 32
    $region61: #{net_forward.1} parent=1 // pred_fallthru
      _
    // Predicated region
    $region62: #{net_forward.1} parent=1 // pred_check
      _
    $region63: #{net_forward.1} parent=1 // pred_check_branch
      %130 = sbr.rel (0) target = $region65
    $region64: #{net_forward.1} parent=1 // pred_region
      %131 = dma.done [#allocation11], 1024
    $region65: #{net_forward.1} parent=1 // pred_fallthru
      _
    // Predicated region
    $region66: #{net_forward.1} parent=1 // pred_check
      _
    $region67: #{net_forward.1} parent=1 // pred_check_branch
      %133 = sbr.rel (0) target = $region69
    $region68: #{net_forward.1} parent=1 // pred_region
      %134 = dma.done [#allocation14], 16
    $region69: #{net_forward.1} parent=1 // pred_fallthru
      _
    %v136 = vld [vmem:[%s0] sm:$0xff]
    %v137 = vld [vmem:[%s0 + $0x8] sm:$0xff]
    %v138 = vld [vmem:[%s0 + $0x10] sm:$0xff]
    %v139 = vld [vmem:[%s0 + $0x18] sm:$0xff]
    %v140 = vld [vmem:[%s0 + $0x20] sm:$0xff]
    %v141 = vld [vmem:[%s0 + $0x28] sm:$0xff]
    %v142 = vld [vmem:[%s0 + $0x30] sm:$0xff]
    %v143 = vld [vmem:[%s0 + $0x38] sm:$0xff]
    %v144 = vld [vmem:[#allocation2] sm:$0xff]
    %v145 = vld [vmem:[#allocation2 + $0x8] sm:$0xff]
    %v146 = vld [vmem:[#allocation2 + $0x10] sm:$0xff]
    %v147 = vld [vmem:[#allocation2 + $0x18] sm:$0xff]
    %v148 = vld [vmem:[#allocation2 + $0x20] sm:$0xff]
    %v149 = vld [vmem:[#allocation2 + $0x28] sm:$0xff]
    %v150 = vld [vmem:[#allocation2 + $0x30] sm:$0xff]
    %v151 = vld [vmem:[#allocation2 + $0x38] sm:$0xff]
    %v152 = vld [vmem:[#allocation2 + $0x40] sm:$0xff]
    %v153 = vld [vmem:[#allocation2 + $0x48] sm:$0xff]
    %v154 = vld [vmem:[#allocation2 + $0x50] sm:$0xff]
    %v155 = vld [vmem:[#allocation2 + $0x58] sm:$0xff]
    %v156 = vld [vmem:[#allocation2 + $0x60] sm:$0xff]
    %v157 = vld [vmem:[#allocation2 + $0x68] sm:$0xff]
    %v158 = vld [vmem:[#allocation2 + $0x70] sm:$0xff]
    %v159 = vld [vmem:[#allocation2 + $0x78] sm:$0xff]
    %v160 = vld [vmem:[#allocation2 + $0x80] sm:$0xff]
    %v161 = vld [vmem:[#allocation2 + $0x88] sm:$0xff]
    %v162 = vld [vmem:[#allocation2 + $0x90] sm:$0xff]
    %v163 = vld [vmem:[#allocation2 + $0x98] sm:$0xff]
    %v164 = vld [vmem:[#allocation2 + $0xa0] sm:$0xff]
    %v165 = vld [vmem:[#allocation2 + $0xa8] sm:$0xff]
    %v166 = vld [vmem:[#allocation2 + $0xb0] sm:$0xff]
    %v167 = vld [vmem:[#allocation2 + $0xb8] sm:$0xff]
    %v168 = vld [vmem:[#allocation2 + $0xc0] sm:$0xff]
    %v169 = vld [vmem:[#allocation2 + $0xc8] sm:$0xff]
    %v170 = vld [vmem:[#allocation2 + $0xd0] sm:$0xff]
    %v171 = vld [vmem:[#allocation2 + $0xd8] sm:$0xff]
    %v172 = vld [vmem:[#allocation2 + $0xe0] sm:$0xff]
    %v173 = vld [vmem:[#allocation2 + $0xe8] sm:$0xff]
    %v174 = vld [vmem:[#allocation2 + $0xf0] sm:$0xff]
    %v175 = vld [vmem:[#allocation2 + $0xf8] sm:$0xff]
    %v176 = vld [vmem:[#allocation2 + $0x100] sm:$0xff]
    %v177 = vld [vmem:[#allocation2 + $0x108] sm:$0xff]
    %v178 = vld [vmem:[#allocation2 + $0x110] sm:$0xff]
    %v179 = vld [vmem:[#allocation2 + $0x118] sm:$0xff]
    %v180 = vld [vmem:[#allocation2 + $0x120] sm:$0xff]
    %v181 = vld [vmem:[#allocation2 + $0x128] sm:$0xff]
    %v182 = vld [vmem:[#allocation2 + $0x130] sm:$0xff]
    %v183 = vld [vmem:[#allocation2 + $0x138] sm:$0xff]
    %v184 = vld [vmem:[#allocation2 + $0x140] sm:$0xff]
    %v185 = vld [vmem:[#allocation2 + $0x148] sm:$0xff]
    %v186 = vld [vmem:[#allocation2 + $0x150] sm:$0xff]
    %v187 = vld [vmem:[#allocation2 + $0x158] sm:$0xff]
    %v188 = vld [vmem:[#allocation2 + $0x160] sm:$0xff]
    %v189 = vld [vmem:[#allocation2 + $0x168] sm:$0xff]
    %v190 = vld [vmem:[#allocation2 + $0x170] sm:$0xff]
    %v191 = vld [vmem:[#allocation2 + $0x178] sm:$0xff]
    %v192 = vld [vmem:[#allocation2 + $0x180] sm:$0xff]
    %v193 = vld [vmem:[#allocation2 + $0x188] sm:$0xff]
    %v194 = vld [vmem:[#allocation2 + $0x190] sm:$0xff]
    %v195 = vld [vmem:[#allocation2 + $0x198] sm:$0xff]
    %v196 = vld [vmem:[#allocation2 + $0x1a0] sm:$0xff]
    %v197 = vld [vmem:[#allocation2 + $0x1a8] sm:$0xff]
    %v198 = vld [vmem:[#allocation2 + $0x1b0] sm:$0xff]
    %v199 = vld [vmem:[#allocation2 + $0x1b8] sm:$0xff]
    %v200 = vld [vmem:[#allocation2 + $0x1c0] sm:$0xff]
    %v201 = vld [vmem:[#allocation2 + $0x1c8] sm:$0xff]
    %v202 = vld [vmem:[#allocation2 + $0x1d0] sm:$0xff]
    %v203 = vld [vmem:[#allocation2 + $0x1d8] sm:$0xff]
    %v204 = vld [vmem:[#allocation2 + $0x1e0] sm:$0xff]
    %v205 = vld [vmem:[#allocation2 + $0x1e8] sm:$0xff]
    %v206 = vld [vmem:[#allocation2 + $0x1f0] sm:$0xff]
    %v207 = vld [vmem:[#allocation2 + $0x1f8] sm:$0xff]
    %v208 = vld [vmem:[#allocation2 + $0x200] sm:$0xff]
    %v209 = vld [vmem:[#allocation2 + $0x208] sm:$0xff]
    %v210 = vld [vmem:[#allocation2 + $0x210] sm:$0xff]
    %v211 = vld [vmem:[#allocation2 + $0x218] sm:$0xff]
    %v212 = vld [vmem:[#allocation2 + $0x220] sm:$0xff]
    %v213 = vld [vmem:[#allocation2 + $0x228] sm:$0xff]
    %v214 = vld [vmem:[#allocation2 + $0x230] sm:$0xff]
    %v215 = vld [vmem:[#allocation2 + $0x238] sm:$0xff]
    %v216 = vld [vmem:[#allocation2 + $0x240] sm:$0xff]
    %v217 = vld [vmem:[#allocation2 + $0x248] sm:$0xff]
    %v218 = vld [vmem:[#allocation2 + $0x250] sm:$0xff]
    %v219 = vld [vmem:[#allocation2 + $0x258] sm:$0xff]
    %v220 = vld [vmem:[#allocation2 + $0x260] sm:$0xff]
    %v221 = vld [vmem:[#allocation2 + $0x268] sm:$0xff]
    %v222 = vld [vmem:[#allocation2 + $0x270] sm:$0xff]
    %v223 = vld [vmem:[#allocation2 + $0x278] sm:$0xff]
    %v224 = vld [vmem:[#allocation2 + $0x280] sm:$0xff]
    %v225 = vld [vmem:[#allocation2 + $0x288] sm:$0xff]
    %v226 = vld [vmem:[#allocation2 + $0x290] sm:$0xff]
    %v227 = vld [vmem:[#allocation2 + $0x298] sm:$0xff]
    %v228 = vld [vmem:[#allocation2 + $0x2a0] sm:$0xff]
    %v229 = vld [vmem:[#allocation2 + $0x2a8] sm:$0xff]
    %v230 = vld [vmem:[#allocation2 + $0x2b0] sm:$0xff]
    %v231 = vld [vmem:[#allocation2 + $0x2b8] sm:$0xff]
    %v232 = vld [vmem:[#allocation2 + $0x2c0] sm:$0xff]
    %v233 = vld [vmem:[#allocation2 + $0x2c8] sm:$0xff]
    %v234 = vld [vmem:[#allocation2 + $0x2d0] sm:$0xff]
    %v235 = vld [vmem:[#allocation2 + $0x2d8] sm:$0xff]
    %v236 = vld [vmem:[#allocation2 + $0x2e0] sm:$0xff]
    %v237 = vld [vmem:[#allocation2 + $0x2e8] sm:$0xff]
    %v238 = vld [vmem:[#allocation2 + $0x2f0] sm:$0xff]
    %v239 = vld [vmem:[#allocation2 + $0x2f8] sm:$0xff]
    %v240 = vld [vmem:[#allocation2 + $0x300] sm:$0xff]
    %v241 = vld [vmem:[#allocation2 + $0x308] sm:$0xff]
    %v242 = vld [vmem:[#allocation2 + $0x310] sm:$0xff]
    %v243 = vld [vmem:[#allocation2 + $0x318] sm:$0xff]
    %v244 = vld [vmem:[#allocation2 + $0x320] sm:$0xff]
    %v245 = vld [vmem:[#allocation2 + $0x328] sm:$0xff]
    %v246 = vld [vmem:[#allocation2 + $0x330] sm:$0xff]
    %v247 = vld [vmem:[#allocation2 + $0x338] sm:$0xff]
    %v248 = vld [vmem:[#allocation2 + $0x340] sm:$0xff]
    %v249 = vld [vmem:[#allocation2 + $0x348] sm:$0xff]
    %v250 = vld [vmem:[#allocation2 + $0x350] sm:$0xff]
    %v251 = vld [vmem:[#allocation2 + $0x358] sm:$0xff]
    %v252 = vld [vmem:[#allocation2 + $0x360] sm:$0xff]
    %v253 = vld [vmem:[#allocation2 + $0x368] sm:$0xff]
    %v254 = vld [vmem:[#allocation2 + $0x370] sm:$0xff]
    %v255 = vld [vmem:[#allocation2 + $0x378] sm:$0xff]
    %v256 = vld [vmem:[#allocation2 + $0x380] sm:$0xff]
    %v257 = vld [vmem:[#allocation2 + $0x388] sm:$0xff]
    %v258 = vld [vmem:[#allocation2 + $0x390] sm:$0xff]
    %v259 = vld [vmem:[#allocation2 + $0x398] sm:$0xff]
    %v260 = vld [vmem:[#allocation2 + $0x3a0] sm:$0xff]
    %v261 = vld [vmem:[#allocation2 + $0x3a8] sm:$0xff]
    %v262 = vld [vmem:[#allocation2 + $0x3b0] sm:$0xff]
    %v263 = vld [vmem:[#allocation2 + $0x3b8] sm:$0xff]
    %v264 = vld [vmem:[#allocation2 + $0x3c0] sm:$0xff]
    %v265 = vld [vmem:[#allocation2 + $0x3c8] sm:$0xff]
    %v266 = vld [vmem:[#allocation2 + $0x3d0] sm:$0xff]
    %v267 = vld [vmem:[#allocation2 + $0x3d8] sm:$0xff]
    %v268 = vld [vmem:[#allocation2 + $0x3e0] sm:$0xff]
    %v269 = vld [vmem:[#allocation2 + $0x3e8] sm:$0xff]
    %v270 = vld [vmem:[#allocation2 + $0x3f0] sm:$0xff]
    %v271 = vld [vmem:[#allocation2 + $0x3f8] sm:$0xff]
    %v272 = vld [vmem:[#allocation2 + $0x400] sm:$0xff]
    %v273 = vld [vmem:[#allocation2 + $0x408] sm:$0xff]
    %v274 = vld [vmem:[#allocation2 + $0x410] sm:$0xff]
    %v275 = vld [vmem:[#allocation2 + $0x418] sm:$0xff]
    %v276 = vld [vmem:[#allocation2 + $0x420] sm:$0xff]
    %v277 = vld [vmem:[#allocation2 + $0x428] sm:$0xff]
    %v278 = vld [vmem:[#allocation2 + $0x430] sm:$0xff]
    %v279 = vld [vmem:[#allocation2 + $0x438] sm:$0xff]
    %v280 = vld [vmem:[#allocation2 + $0x440] sm:$0xff]
    %v281 = vld [vmem:[#allocation2 + $0x448] sm:$0xff]
    %v282 = vld [vmem:[#allocation2 + $0x450] sm:$0xff]
    %v283 = vld [vmem:[#allocation2 + $0x458] sm:$0xff]
    %v284 = vld [vmem:[#allocation2 + $0x460] sm:$0xff]
    %v285 = vld [vmem:[#allocation2 + $0x468] sm:$0xff]
    %v286 = vld [vmem:[#allocation2 + $0x470] sm:$0xff]
    %v287 = vld [vmem:[#allocation2 + $0x478] sm:$0xff]
    %v288 = vld [vmem:[#allocation2 + $0x480] sm:$0xff]
    %v289 = vld [vmem:[#allocation2 + $0x488] sm:$0xff]
    %v290 = vld [vmem:[#allocation2 + $0x490] sm:$0xff]
    %v291 = vld [vmem:[#allocation2 + $0x498] sm:$0xff]
    %v292 = vld [vmem:[#allocation2 + $0x4a0] sm:$0xff]
    %v293 = vld [vmem:[#allocation2 + $0x4a8] sm:$0xff]
    %v294 = vld [vmem:[#allocation2 + $0x4b0] sm:$0xff]
    %v295 = vld [vmem:[#allocation2 + $0x4b8] sm:$0xff]
    %v296 = vld [vmem:[#allocation2 + $0x4c0] sm:$0xff]
    %v297 = vld [vmem:[#allocation2 + $0x4c8] sm:$0xff]
    %v298 = vld [vmem:[#allocation2 + $0x4d0] sm:$0xff]
    %v299 = vld [vmem:[#allocation2 + $0x4d8] sm:$0xff]
    %v300 = vld [vmem:[#allocation2 + $0x4e0] sm:$0xff]
    %v301 = vld [vmem:[#allocation2 + $0x4e8] sm:$0xff]
    %v302 = vld [vmem:[#allocation2 + $0x4f0] sm:$0xff]
    %v303 = vld [vmem:[#allocation2 + $0x4f8] sm:$0xff]
    %v304 = vld [vmem:[#allocation2 + $0x500] sm:$0xff]
    %v305 = vld [vmem:[#allocation2 + $0x508] sm:$0xff]
    %v306 = vld [vmem:[#allocation2 + $0x510] sm:$0xff]
    %v307 = vld [vmem:[#allocation2 + $0x518] sm:$0xff]
    %v308 = vld [vmem:[#allocation2 + $0x520] sm:$0xff]
    %v309 = vld [vmem:[#allocation2 + $0x528] sm:$0xff]
    %v310 = vld [vmem:[#allocation2 + $0x530] sm:$0xff]
    %v311 = vld [vmem:[#allocation2 + $0x538] sm:$0xff]
    %v312 = vld [vmem:[#allocation2 + $0x540] sm:$0xff]
    %v313 = vld [vmem:[#allocation2 + $0x548] sm:$0xff]
    %v314 = vld [vmem:[#allocation2 + $0x550] sm:$0xff]
    %v315 = vld [vmem:[#allocation2 + $0x558] sm:$0xff]
    %v316 = vld [vmem:[#allocation2 + $0x560] sm:$0xff]
    %v317 = vld [vmem:[#allocation2 + $0x568] sm:$0xff]
    %v318 = vld [vmem:[#allocation2 + $0x570] sm:$0xff]
    %v319 = vld [vmem:[#allocation2 + $0x578] sm:$0xff]
    %v320 = vld [vmem:[#allocation2 + $0x580] sm:$0xff]
    %v321 = vld [vmem:[#allocation2 + $0x588] sm:$0xff]
    %v322 = vld [vmem:[#allocation2 + $0x590] sm:$0xff]
    %v323 = vld [vmem:[#allocation2 + $0x598] sm:$0xff]
    %v324 = vld [vmem:[#allocation2 + $0x5a0] sm:$0xff]
    %v325 = vld [vmem:[#allocation2 + $0x5a8] sm:$0xff]
    %v326 = vld [vmem:[#allocation2 + $0x5b0] sm:$0xff]
    %v327 = vld [vmem:[#allocation2 + $0x5b8] sm:$0xff]
    %v328 = vld [vmem:[#allocation2 + $0x5c0] sm:$0xff]
    %v329 = vld [vmem:[#allocation2 + $0x5c8] sm:$0xff]
    %v330 = vld [vmem:[#allocation2 + $0x5d0] sm:$0xff]
    %v331 = vld [vmem:[#allocation2 + $0x5d8] sm:$0xff]
    %v332 = vld [vmem:[#allocation2 + $0x5e0] sm:$0xff]
    %v333 = vld [vmem:[#allocation2 + $0x5e8] sm:$0xff]
    %v334 = vld [vmem:[#allocation2 + $0x5f0] sm:$0xff]
    %v335 = vld [vmem:[#allocation2 + $0x5f8] sm:$0xff]
    %v336 = vld [vmem:[#allocation2 + $0x600] sm:$0xff]
    %v337 = vld [vmem:[#allocation2 + $0x608] sm:$0xff]
    %v338 = vld [vmem:[#allocation2 + $0x610] sm:$0xff]
    %v339 = vld [vmem:[#allocation2 + $0x618] sm:$0xff]
    %v340 = vld [vmem:[#allocation2 + $0x620] sm:$0xff]
    %v341 = vld [vmem:[#allocation2 + $0x628] sm:$0xff]
    %v342 = vld [vmem:[#allocation2 + $0x630] sm:$0xff]
    %v343 = vld [vmem:[#allocation2 + $0x638] sm:$0xff]
    %v344 = vld [vmem:[#allocation2 + $0x640] sm:$0xff]
    %v345 = vld [vmem:[#allocation2 + $0x648] sm:$0xff]
    %v346 = vld [vmem:[#allocation2 + $0x650] sm:$0xff]
    %v347 = vld [vmem:[#allocation2 + $0x658] sm:$0xff]
    %v348 = vld [vmem:[#allocation2 + $0x660] sm:$0xff]
    %v349 = vld [vmem:[#allocation2 + $0x668] sm:$0xff]
    %v350 = vld [vmem:[#allocation2 + $0x670] sm:$0xff]
    %v351 = vld [vmem:[#allocation2 + $0x678] sm:$0xff]
    %v352 = vld [vmem:[#allocation2 + $0x680] sm:$0xff]
    %v353 = vld [vmem:[#allocation2 + $0x688] sm:$0xff]
    %v354 = vld [vmem:[#allocation2 + $0x690] sm:$0xff]
    %v355 = vld [vmem:[#allocation2 + $0x698] sm:$0xff]
    %v356 = vld [vmem:[#allocation2 + $0x6a0] sm:$0xff]
    %v357 = vld [vmem:[#allocation2 + $0x6a8] sm:$0xff]
    %v358 = vld [vmem:[#allocation2 + $0x6b0] sm:$0xff]
    %v359 = vld [vmem:[#allocation2 + $0x6b8] sm:$0xff]
    %v360 = vld [vmem:[#allocation2 + $0x6c0] sm:$0xff]
    %v361 = vld [vmem:[#allocation2 + $0x6c8] sm:$0xff]
    %v362 = vld [vmem:[#allocation2 + $0x6d0] sm:$0xff]
    %v363 = vld [vmem:[#allocation2 + $0x6d8] sm:$0xff]
    %v364 = vld [vmem:[#allocation2 + $0x6e0] sm:$0xff]
    %v365 = vld [vmem:[#allocation2 + $0x6e8] sm:$0xff]
    %v366 = vld [vmem:[#allocation2 + $0x6f0] sm:$0xff]
    %v367 = vld [vmem:[#allocation2 + $0x6f8] sm:$0xff]
    %v368 = vld [vmem:[#allocation2 + $0x700] sm:$0xff]
    %v369 = vld [vmem:[#allocation2 + $0x708] sm:$0xff]
    %v370 = vld [vmem:[#allocation2 + $0x710] sm:$0xff]
    %v371 = vld [vmem:[#allocation2 + $0x718] sm:$0xff]
    %v372 = vld [vmem:[#allocation2 + $0x720] sm:$0xff]
    %v373 = vld [vmem:[#allocation2 + $0x728] sm:$0xff]
    %v374 = vld [vmem:[#allocation2 + $0x730] sm:$0xff]
    %v375 = vld [vmem:[#allocation2 + $0x738] sm:$0xff]
    %v376 = vld [vmem:[#allocation2 + $0x740] sm:$0xff]
    %v377 = vld [vmem:[#allocation2 + $0x748] sm:$0xff]
    %v378 = vld [vmem:[#allocation2 + $0x750] sm:$0xff]
    %v379 = vld [vmem:[#allocation2 + $0x758] sm:$0xff]
    %v380 = vld [vmem:[#allocation2 + $0x760] sm:$0xff]
    %v381 = vld [vmem:[#allocation2 + $0x768] sm:$0xff]
    %v382 = vld [vmem:[#allocation2 + $0x770] sm:$0xff]
    %v383 = vld [vmem:[#allocation2 + $0x778] sm:$0xff]
    %v384 = vld [vmem:[#allocation2 + $0x780] sm:$0xff]
    %v385 = vld [vmem:[#allocation2 + $0x788] sm:$0xff]
    %v386 = vld [vmem:[#allocation2 + $0x790] sm:$0xff]
    %v387 = vld [vmem:[#allocation2 + $0x798] sm:$0xff]
    %v388 = vld [vmem:[#allocation2 + $0x7a0] sm:$0xff]
    %v389 = vld [vmem:[#allocation2 + $0x7a8] sm:$0xff]
    %v390 = vld [vmem:[#allocation2 + $0x7b0] sm:$0xff]
    %v391 = vld [vmem:[#allocation2 + $0x7b8] sm:$0xff]
    %v392 = vld [vmem:[#allocation2 + $0x7c0] sm:$0xff]
    %v393 = vld [vmem:[#allocation2 + $0x7c8] sm:$0xff]
    %v394 = vld [vmem:[#allocation2 + $0x7d0] sm:$0xff]
    %v395 = vld [vmem:[#allocation2 + $0x7d8] sm:$0xff]
    %v396 = vld [vmem:[#allocation2 + $0x7e0] sm:$0xff]
    %v397 = vld [vmem:[#allocation2 + $0x7e8] sm:$0xff]
    %v398 = vld [vmem:[#allocation2 + $0x7f0] sm:$0xff]
    %v399 = vld [vmem:[#allocation2 + $0x7f8] sm:$0xff]
    %v400 = vld [vmem:[#allocation2 + $0x800] sm:$0xff]
    %v401 = vld [vmem:[#allocation2 + $0x808] sm:$0xff]
    %v402 = vld [vmem:[#allocation2 + $0x810] sm:$0xff]
    %v403 = vld [vmem:[#allocation2 + $0x818] sm:$0xff]
    %v404 = vld [vmem:[#allocation2 + $0x820] sm:$0xff]
    %v405 = vld [vmem:[#allocation2 + $0x828] sm:$0xff]
    %v406 = vld [vmem:[#allocation2 + $0x830] sm:$0xff]
    %v407 = vld [vmem:[#allocation2 + $0x838] sm:$0xff]
    %v408 = vld [vmem:[#allocation2 + $0x840] sm:$0xff]
    %v409 = vld [vmem:[#allocation2 + $0x848] sm:$0xff]
    %v410 = vld [vmem:[#allocation2 + $0x850] sm:$0xff]
    %v411 = vld [vmem:[#allocation2 + $0x858] sm:$0xff]
    %v412 = vld [vmem:[#allocation2 + $0x860] sm:$0xff]
    %v413 = vld [vmem:[#allocation2 + $0x868] sm:$0xff]
    %v414 = vld [vmem:[#allocation2 + $0x870] sm:$0xff]
    %v415 = vld [vmem:[#allocation2 + $0x878] sm:$0xff]
    %v416 = vld [vmem:[#allocation2 + $0x880] sm:$0xff]
    %v417 = vld [vmem:[#allocation2 + $0x888] sm:$0xff]
    %v418 = vld [vmem:[#allocation2 + $0x890] sm:$0xff]
    %v419 = vld [vmem:[#allocation2 + $0x898] sm:$0xff]
    %v420 = vld [vmem:[#allocation2 + $0x8a0] sm:$0xff]
    %v421 = vld [vmem:[#allocation2 + $0x8a8] sm:$0xff]
    %v422 = vld [vmem:[#allocation2 + $0x8b0] sm:$0xff]
    %v423 = vld [vmem:[#allocation2 + $0x8b8] sm:$0xff]
    %v424 = vld [vmem:[#allocation2 + $0x8c0] sm:$0xff]
    %v425 = vld [vmem:[#allocation2 + $0x8c8] sm:$0xff]
    %v426 = vld [vmem:[#allocation2 + $0x8d0] sm:$0xff]
    %v427 = vld [vmem:[#allocation2 + $0x8d8] sm:$0xff]
    %v428 = vld [vmem:[#allocation2 + $0x8e0] sm:$0xff]
    %v429 = vld [vmem:[#allocation2 + $0x8e8] sm:$0xff]
    %v430 = vld [vmem:[#allocation2 + $0x8f0] sm:$0xff]
    %v431 = vld [vmem:[#allocation2 + $0x8f8] sm:$0xff]
    %v432 = vld [vmem:[#allocation2 + $0x900] sm:$0xff]
    %v433 = vld [vmem:[#allocation2 + $0x908] sm:$0xff]
    %v434 = vld [vmem:[#allocation2 + $0x910] sm:$0xff]
    %v435 = vld [vmem:[#allocation2 + $0x918] sm:$0xff]
    %v436 = vld [vmem:[#allocation2 + $0x920] sm:$0xff]
    %v437 = vld [vmem:[#allocation2 + $0x928] sm:$0xff]
    %v438 = vld [vmem:[#allocation2 + $0x930] sm:$0xff]
    %v439 = vld [vmem:[#allocation2 + $0x938] sm:$0xff]
    %v440 = vld [vmem:[#allocation2 + $0x940] sm:$0xff]
    %v441 = vld [vmem:[#allocation2 + $0x948] sm:$0xff]
    %v442 = vld [vmem:[#allocation2 + $0x950] sm:$0xff]
    %v443 = vld [vmem:[#allocation2 + $0x958] sm:$0xff]
    %v444 = vld [vmem:[#allocation2 + $0x960] sm:$0xff]
    %v445 = vld [vmem:[#allocation2 + $0x968] sm:$0xff]
    %v446 = vld [vmem:[#allocation2 + $0x970] sm:$0xff]
    %v447 = vld [vmem:[#allocation2 + $0x978] sm:$0xff]
    %v448 = vld [vmem:[#allocation2 + $0x980] sm:$0xff]
    %v449 = vld [vmem:[#allocation2 + $0x988] sm:$0xff]
    %v450 = vld [vmem:[#allocation2 + $0x990] sm:$0xff]
    %v451 = vld [vmem:[#allocation2 + $0x998] sm:$0xff]
    %v452 = vld [vmem:[#allocation2 + $0x9a0] sm:$0xff]
    %v453 = vld [vmem:[#allocation2 + $0x9a8] sm:$0xff]
    %v454 = vld [vmem:[#allocation2 + $0x9b0] sm:$0xff]
    %v455 = vld [vmem:[#allocation2 + $0x9b8] sm:$0xff]
    %v456 = vld [vmem:[#allocation2 + $0x9c0] sm:$0xff]
    %v457 = vld [vmem:[#allocation2 + $0x9c8] sm:$0xff]
    %v458 = vld [vmem:[#allocation2 + $0x9d0] sm:$0xff]
    %v459 = vld [vmem:[#allocation2 + $0x9d8] sm:$0xff]
    %v460 = vld [vmem:[#allocation2 + $0x9e0] sm:$0xff]
    %v461 = vld [vmem:[#allocation2 + $0x9e8] sm:$0xff]
    %v462 = vld [vmem:[#allocation2 + $0x9f0] sm:$0xff]
    %v463 = vld [vmem:[#allocation2 + $0x9f8] sm:$0xff]
    %v464 = vld [vmem:[#allocation2 + $0xa00] sm:$0xff]
    %v465 = vld [vmem:[#allocation2 + $0xa08] sm:$0xff]
    %v466 = vld [vmem:[#allocation2 + $0xa10] sm:$0xff]
    %v467 = vld [vmem:[#allocation2 + $0xa18] sm:$0xff]
    %v468 = vld [vmem:[#allocation2 + $0xa20] sm:$0xff]
    %v469 = vld [vmem:[#allocation2 + $0xa28] sm:$0xff]
    %v470 = vld [vmem:[#allocation2 + $0xa30] sm:$0xff]
    %v471 = vld [vmem:[#allocation2 + $0xa38] sm:$0xff]
    %v472 = vld [vmem:[#allocation2 + $0xa40] sm:$0xff]
    %v473 = vld [vmem:[#allocation2 + $0xa48] sm:$0xff]
    %v474 = vld [vmem:[#allocation2 + $0xa50] sm:$0xff]
    %v475 = vld [vmem:[#allocation2 + $0xa58] sm:$0xff]
    %v476 = vld [vmem:[#allocation2 + $0xa60] sm:$0xff]
    %v477 = vld [vmem:[#allocation2 + $0xa68] sm:$0xff]
    %v478 = vld [vmem:[#allocation2 + $0xa70] sm:$0xff]
    %v479 = vld [vmem:[#allocation2 + $0xa78] sm:$0xff]
    %v480 = vld [vmem:[#allocation2 + $0xa80] sm:$0xff]
    %v481 = vld [vmem:[#allocation2 + $0xa88] sm:$0xff]
    %v482 = vld [vmem:[#allocation2 + $0xa90] sm:$0xff]
    %v483 = vld [vmem:[#allocation2 + $0xa98] sm:$0xff]
    %v484 = vld [vmem:[#allocation2 + $0xaa0] sm:$0xff]
    %v485 = vld [vmem:[#allocation2 + $0xaa8] sm:$0xff]
    %v486 = vld [vmem:[#allocation2 + $0xab0] sm:$0xff]
    %v487 = vld [vmem:[#allocation2 + $0xab8] sm:$0xff]
    %v488 = vld [vmem:[#allocation2 + $0xac0] sm:$0xff]
    %v489 = vld [vmem:[#allocation2 + $0xac8] sm:$0xff]
    %v490 = vld [vmem:[#allocation2 + $0xad0] sm:$0xff]
    %v491 = vld [vmem:[#allocation2 + $0xad8] sm:$0xff]
    %v492 = vld [vmem:[#allocation2 + $0xae0] sm:$0xff]
    %v493 = vld [vmem:[#allocation2 + $0xae8] sm:$0xff]
    %v494 = vld [vmem:[#allocation2 + $0xaf0] sm:$0xff]
    %v495 = vld [vmem:[#allocation2 + $0xaf8] sm:$0xff]
    %v496 = vld [vmem:[#allocation2 + $0xb00] sm:$0xff]
    %v497 = vld [vmem:[#allocation2 + $0xb08] sm:$0xff]
    %v498 = vld [vmem:[#allocation2 + $0xb10] sm:$0xff]
    %v499 = vld [vmem:[#allocation2 + $0xb18] sm:$0xff]
    %v500 = vld [vmem:[#allocation2 + $0xb20] sm:$0xff]
    %v501 = vld [vmem:[#allocation2 + $0xb28] sm:$0xff]
    %v502 = vld [vmem:[#allocation2 + $0xb30] sm:$0xff]
    %v503 = vld [vmem:[#allocation2 + $0xb38] sm:$0xff]
    %v504 = vld [vmem:[#allocation2 + $0xb40] sm:$0xff]
    %v505 = vld [vmem:[#allocation2 + $0xb48] sm:$0xff]
    %v506 = vld [vmem:[#allocation2 + $0xb50] sm:$0xff]
    %v507 = vld [vmem:[#allocation2 + $0xb58] sm:$0xff]
    %v508 = vld [vmem:[#allocation2 + $0xb60] sm:$0xff]
    %v509 = vld [vmem:[#allocation2 + $0xb68] sm:$0xff]
    %v510 = vld [vmem:[#allocation2 + $0xb70] sm:$0xff]
    %v511 = vld [vmem:[#allocation2 + $0xb78] sm:$0xff]
    %v512 = vld [vmem:[#allocation2 + $0xb80] sm:$0xff]
    %v513 = vld [vmem:[#allocation2 + $0xb88] sm:$0xff]
    %v514 = vld [vmem:[#allocation2 + $0xb90] sm:$0xff]
    %v515 = vld [vmem:[#allocation2 + $0xb98] sm:$0xff]
    %v516 = vld [vmem:[#allocation2 + $0xba0] sm:$0xff]
    %v517 = vld [vmem:[#allocation2 + $0xba8] sm:$0xff]
    %v518 = vld [vmem:[#allocation2 + $0xbb0] sm:$0xff]
    %v519 = vld [vmem:[#allocation2 + $0xbb8] sm:$0xff]
    %v520 = vld [vmem:[#allocation2 + $0xbc0] sm:$0xff]
    %v521 = vld [vmem:[#allocation2 + $0xbc8] sm:$0xff]
    %v522 = vld [vmem:[#allocation2 + $0xbd0] sm:$0xff]
    %v523 = vld [vmem:[#allocation2 + $0xbd8] sm:$0xff]
    %v524 = vld [vmem:[#allocation2 + $0xbe0] sm:$0xff]
    %v525 = vld [vmem:[#allocation2 + $0xbe8] sm:$0xff]
    %v526 = vld [vmem:[#allocation2 + $0xbf0] sm:$0xff]
    %v527 = vld [vmem:[#allocation2 + $0xbf8] sm:$0xff]
    %v528 = vld [vmem:[#allocation2 + $0xc00] sm:$0xff]
    %v529 = vld [vmem:[#allocation2 + $0xc08] sm:$0xff]
    %v530 = vld [vmem:[#allocation2 + $0xc10] sm:$0xff]
    %v531 = vld [vmem:[#allocation2 + $0xc18] sm:$0xff]
    %v532 = vld [vmem:[#allocation2 + $0xc20] sm:$0xff]
    %v533 = vld [vmem:[#allocation2 + $0xc28] sm:$0xff]
    %v534 = vld [vmem:[#allocation2 + $0xc30] sm:$0xff]
    %v535 = vld [vmem:[#allocation2 + $0xc38] sm:$0xff]
    %v536 = vld [vmem:[#allocation2 + $0xc40] sm:$0xff]
    %v537 = vld [vmem:[#allocation2 + $0xc48] sm:$0xff]
    %v538 = vld [vmem:[#allocation2 + $0xc50] sm:$0xff]
    %v539 = vld [vmem:[#allocation2 + $0xc58] sm:$0xff]
    %v540 = vld [vmem:[#allocation2 + $0xc60] sm:$0xff]
    %v541 = vld [vmem:[#allocation2 + $0xc68] sm:$0xff]
    %v542 = vld [vmem:[#allocation2 + $0xc70] sm:$0xff]
    %v543 = vld [vmem:[#allocation2 + $0xc78] sm:$0xff]
    %v544 = vld [vmem:[#allocation2 + $0xc80] sm:$0xff]
    %v545 = vld [vmem:[#allocation2 + $0xc88] sm:$0xff]
    %v546 = vld [vmem:[#allocation2 + $0xc90] sm:$0xff]
    %v547 = vld [vmem:[#allocation2 + $0xc98] sm:$0xff]
    %v548 = vld [vmem:[#allocation2 + $0xca0] sm:$0xff]
    %v549 = vld [vmem:[#allocation2 + $0xca8] sm:$0xff]
    %v550 = vld [vmem:[#allocation2 + $0xcb0] sm:$0xff]
    %v551 = vld [vmem:[#allocation2 + $0xcb8] sm:$0xff]
    %v552 = vld [vmem:[#allocation2 + $0xcc0] sm:$0xff]
    %v553 = vld [vmem:[#allocation2 + $0xcc8] sm:$0xff]
    %v554 = vld [vmem:[#allocation2 + $0xcd0] sm:$0xff]
    %v555 = vld [vmem:[#allocation2 + $0xcd8] sm:$0xff]
    %v556 = vld [vmem:[#allocation2 + $0xce0] sm:$0xff]
    %v557 = vld [vmem:[#allocation2 + $0xce8] sm:$0xff]
    %v558 = vld [vmem:[#allocation2 + $0xcf0] sm:$0xff]
    %v559 = vld [vmem:[#allocation2 + $0xcf8] sm:$0xff]
    %v560 = vld [vmem:[#allocation2 + $0xd00] sm:$0xff]
    %v561 = vld [vmem:[#allocation2 + $0xd08] sm:$0xff]
    %v562 = vld [vmem:[#allocation2 + $0xd10] sm:$0xff]
    %v563 = vld [vmem:[#allocation2 + $0xd18] sm:$0xff]
    %v564 = vld [vmem:[#allocation2 + $0xd20] sm:$0xff]
    %v565 = vld [vmem:[#allocation2 + $0xd28] sm:$0xff]
    %v566 = vld [vmem:[#allocation2 + $0xd30] sm:$0xff]
    %v567 = vld [vmem:[#allocation2 + $0xd38] sm:$0xff]
    %v568 = vld [vmem:[#allocation2 + $0xd40] sm:$0xff]
    %v569 = vld [vmem:[#allocation2 + $0xd48] sm:$0xff]
    %v570 = vld [vmem:[#allocation2 + $0xd50] sm:$0xff]
    %v571 = vld [vmem:[#allocation2 + $0xd58] sm:$0xff]
    %v572 = vld [vmem:[#allocation2 + $0xd60] sm:$0xff]
    %v573 = vld [vmem:[#allocation2 + $0xd68] sm:$0xff]
    %v574 = vld [vmem:[#allocation2 + $0xd70] sm:$0xff]
    %v575 = vld [vmem:[#allocation2 + $0xd78] sm:$0xff]
    %v576 = vld [vmem:[#allocation2 + $0xd80] sm:$0xff]
    %v577 = vld [vmem:[#allocation2 + $0xd88] sm:$0xff]
    %v578 = vld [vmem:[#allocation2 + $0xd90] sm:$0xff]
    %v579 = vld [vmem:[#allocation2 + $0xd98] sm:$0xff]
    %v580 = vld [vmem:[#allocation2 + $0xda0] sm:$0xff]
    %v581 = vld [vmem:[#allocation2 + $0xda8] sm:$0xff]
    %v582 = vld [vmem:[#allocation2 + $0xdb0] sm:$0xff]
    %v583 = vld [vmem:[#allocation2 + $0xdb8] sm:$0xff]
    %v584 = vld [vmem:[#allocation2 + $0xdc0] sm:$0xff]
    %v585 = vld [vmem:[#allocation2 + $0xdc8] sm:$0xff]
    %v586 = vld [vmem:[#allocation2 + $0xdd0] sm:$0xff]
    %v587 = vld [vmem:[#allocation2 + $0xdd8] sm:$0xff]
    %v588 = vld [vmem:[#allocation2 + $0xde0] sm:$0xff]
    %v589 = vld [vmem:[#allocation2 + $0xde8] sm:$0xff]
    %v590 = vld [vmem:[#allocation2 + $0xdf0] sm:$0xff]
    %v591 = vld [vmem:[#allocation2 + $0xdf8] sm:$0xff]
    %v592 = vld [vmem:[#allocation2 + $0xe00] sm:$0xff]
    %v593 = vld [vmem:[#allocation2 + $0xe08] sm:$0xff]
    %v594 = vld [vmem:[#allocation2 + $0xe10] sm:$0xff]
    %v595 = vld [vmem:[#allocation2 + $0xe18] sm:$0xff]
    %v596 = vld [vmem:[#allocation2 + $0xe20] sm:$0xff]
    %v597 = vld [vmem:[#allocation2 + $0xe28] sm:$0xff]
    %v598 = vld [vmem:[#allocation2 + $0xe30] sm:$0xff]
    %v599 = vld [vmem:[#allocation2 + $0xe38] sm:$0xff]
    %v600 = vld [vmem:[#allocation2 + $0xe40] sm:$0xff]
    %v601 = vld [vmem:[#allocation2 + $0xe48] sm:$0xff]
    %v602 = vld [vmem:[#allocation2 + $0xe50] sm:$0xff]
    %v603 = vld [vmem:[#allocation2 + $0xe58] sm:$0xff]
    %v604 = vld [vmem:[#allocation2 + $0xe60] sm:$0xff]
    %v605 = vld [vmem:[#allocation2 + $0xe68] sm:$0xff]
    %v606 = vld [vmem:[#allocation2 + $0xe70] sm:$0xff]
    %v607 = vld [vmem:[#allocation2 + $0xe78] sm:$0xff]
    %v608 = vld [vmem:[#allocation2 + $0xe80] sm:$0xff]
    %v609 = vld [vmem:[#allocation2 + $0xe88] sm:$0xff]
    %v610 = vld [vmem:[#allocation2 + $0xe90] sm:$0xff]
    %v611 = vld [vmem:[#allocation2 + $0xe98] sm:$0xff]
    %v612 = vld [vmem:[#allocation2 + $0xea0] sm:$0xff]
    %v613 = vld [vmem:[#allocation2 + $0xea8] sm:$0xff]
    %v614 = vld [vmem:[#allocation2 + $0xeb0] sm:$0xff]
    %v615 = vld [vmem:[#allocation2 + $0xeb8] sm:$0xff]
    %v616 = vld [vmem:[#allocation2 + $0xec0] sm:$0xff]
    %v617 = vld [vmem:[#allocation2 + $0xec8] sm:$0xff]
    %v618 = vld [vmem:[#allocation2 + $0xed0] sm:$0xff]
    %v619 = vld [vmem:[#allocation2 + $0xed8] sm:$0xff]
    %v620 = vld [vmem:[#allocation2 + $0xee0] sm:$0xff]
    %v621 = vld [vmem:[#allocation2 + $0xee8] sm:$0xff]
    %v622 = vld [vmem:[#allocation2 + $0xef0] sm:$0xff]
    %v623 = vld [vmem:[#allocation2 + $0xef8] sm:$0xff]
    %v624 = vld [vmem:[#allocation2 + $0xf00] sm:$0xff]
    %v625 = vld [vmem:[#allocation2 + $0xf08] sm:$0xff]
    %v626 = vld [vmem:[#allocation2 + $0xf10] sm:$0xff]
    %v627 = vld [vmem:[#allocation2 + $0xf18] sm:$0xff]
    %v628 = vld [vmem:[#allocation2 + $0xf20] sm:$0xff]
    %v629 = vld [vmem:[#allocation2 + $0xf28] sm:$0xff]
    %v630 = vld [vmem:[#allocation2 + $0xf30] sm:$0xff]
    %v631 = vld [vmem:[#allocation2 + $0xf38] sm:$0xff]
    %v632 = vld [vmem:[#allocation2 + $0xf40] sm:$0xff]
    %v633 = vld [vmem:[#allocation2 + $0xf48] sm:$0xff]
    %v634 = vld [vmem:[#allocation2 + $0xf50] sm:$0xff]
    %v635 = vld [vmem:[#allocation2 + $0xf58] sm:$0xff]
    %v636 = vld [vmem:[#allocation2 + $0xf60] sm:$0xff]
    %v637 = vld [vmem:[#allocation2 + $0xf68] sm:$0xff]
    %v638 = vld [vmem:[#allocation2 + $0xf70] sm:$0xff]
    %v639 = vld [vmem:[#allocation2 + $0xf78] sm:$0xff]
    %v640 = vld [vmem:[#allocation2 + $0xf80] sm:$0xff]
    %v641 = vld [vmem:[#allocation2 + $0xf88] sm:$0xff]
    %v642 = vld [vmem:[#allocation2 + $0xf90] sm:$0xff]
    %v643 = vld [vmem:[#allocation2 + $0xf98] sm:$0xff]
    %v644 = vld [vmem:[#allocation2 + $0xfa0] sm:$0xff]
    %v645 = vld [vmem:[#allocation2 + $0xfa8] sm:$0xff]
    %v646 = vld [vmem:[#allocation2 + $0xfb0] sm:$0xff]
    %v647 = vld [vmem:[#allocation2 + $0xfb8] sm:$0xff]
    %v648 = vld [vmem:[#allocation2 + $0xfc0] sm:$0xff]
    %v649 = vld [vmem:[#allocation2 + $0xfc8] sm:$0xff]
    %v650 = vld [vmem:[#allocation2 + $0xfd0] sm:$0xff]
    %v651 = vld [vmem:[#allocation2 + $0xfd8] sm:$0xff]
    %v652 = vld [vmem:[#allocation2 + $0xfe0] sm:$0xff]
    %v653 = vld [vmem:[#allocation2 + $0xfe8] sm:$0xff]
    %v654 = vld [vmem:[#allocation2 + $0xff0] sm:$0xff]
    %v655 = vld [vmem:[#allocation2 + $0xff8] sm:$0xff]
    %v656 = vld [vmem:[#allocation4] sm:$0xff]
    %v658 = vlaneseq
    %v659 = vshrl.u32 %v658, 7
    %v660 = vsub.s32 0, %v659
    %v661 = vrot.slane %v656, %v660
    %v662 = vlaneseq
    %v663 = vshrl.u32 %v662, 7
    %v664 = vsub.s32 1, %v663
    %v665 = vrot.slane %v656, %v664
    %v666 = vlaneseq
    %v667 = vshrl.u32 %v666, 7
    %v668 = vsub.s32 2, %v667
    %v669 = vrot.slane %v656, %v668
    %v670 = vlaneseq
    %v671 = vshrl.u32 %v670, 7
    %v672 = vsub.s32 3, %v671
    %v673 = vrot.slane %v656, %v672
    %v674 = vlaneseq
    %v675 = vshrl.u32 %v674, 7
    %v676 = vsub.s32 4, %v675
    %v677 = vrot.slane %v656, %v676
    %v678 = vlaneseq
    %v679 = vshrl.u32 %v678, 7
    %v680 = vsub.s32 5, %v679
    %v681 = vrot.slane %v656, %v680
    %v682 = vlaneseq
    %v683 = vshrl.u32 %v682, 7
    %v684 = vsub.s32 6, %v683
    %v685 = vrot.slane %v656, %v684
    %v686 = vlaneseq
    %v687 = vshrl.u32 %v686, 7
    %v688 = vsub.s32 7, %v687
    %v689 = vrot.slane %v656, %v688
    %v706 = vunpack.c.l.b16 %v136
    %v707 = vunpack.c.h.b16 %v136
    %v708 = vunpack.c.l.b16 %v137
    %v709 = vunpack.c.h.b16 %v137
    %v710 = vunpack.c.l.b16 %v138
    %v711 = vunpack.c.h.b16 %v138
    %v712 = vunpack.c.l.b16 %v139
    %v713 = vunpack.c.h.b16 %v139
    %v714 = vunpack.c.l.b16 %v140
    %v715 = vunpack.c.h.b16 %v140
    %v716 = vunpack.c.l.b16 %v141
    %v717 = vunpack.c.h.b16 %v141
    %v718 = vunpack.c.l.b16 %v142
    %v719 = vunpack.c.h.b16 %v142
    %v720 = vunpack.c.l.b16 %v143
    %v721 = vunpack.c.h.b16 %v143
    %v722 = vpack.c.b16 %v714, %v706
    %v723 = vpack.c.b16 %v715, %v707
    %v724 = vpack.c.b16 %v716, %v708
    %v725 = vpack.c.b16 %v717, %v709
    %v726 = vpack.c.b16 %v718, %v710
    %v727 = vpack.c.b16 %v719, %v711
    %v728 = vpack.c.b16 %v720, %v712
    %v729 = vpack.c.b16 %v721, %v713
    %v1250 = vunpack.c.l.b16 %v144
    %v1251 = vunpack.c.h.b16 %v144
    %v1252 = vunpack.c.l.b16 %v145
    %v1253 = vunpack.c.h.b16 %v145
    %v1254 = vunpack.c.l.b16 %v146
    %v1255 = vunpack.c.h.b16 %v146
    %v1256 = vunpack.c.l.b16 %v147
    %v1257 = vunpack.c.h.b16 %v147
    %v1258 = vunpack.c.l.b16 %v148
    %v1259 = vunpack.c.h.b16 %v148
    %v1260 = vunpack.c.l.b16 %v149
    %v1261 = vunpack.c.h.b16 %v149
    %v1262 = vunpack.c.l.b16 %v150
    %v1263 = vunpack.c.h.b16 %v150
    %v1264 = vunpack.c.l.b16 %v151
    %v1265 = vunpack.c.h.b16 %v151
    %v1266 = vunpack.c.l.b16 %v152
    %v1267 = vunpack.c.h.b16 %v152
    %v1268 = vunpack.c.l.b16 %v153
    %v1269 = vunpack.c.h.b16 %v153
    %v1270 = vunpack.c.l.b16 %v154
    %v1271 = vunpack.c.h.b16 %v154
    %v1272 = vunpack.c.l.b16 %v155
    %v1273 = vunpack.c.h.b16 %v155
    %v1274 = vunpack.c.l.b16 %v156
    %v1275 = vunpack.c.h.b16 %v156
    %v1276 = vunpack.c.l.b16 %v157
    %v1277 = vunpack.c.h.b16 %v157
    %v1278 = vunpack.c.l.b16 %v158
    %v1279 = vunpack.c.h.b16 %v158
    %v1280 = vunpack.c.l.b16 %v159
    %v1281 = vunpack.c.h.b16 %v159
    %v1282 = vunpack.c.l.b16 %v160
    %v1283 = vunpack.c.h.b16 %v160
    %v1284 = vunpack.c.l.b16 %v161
    %v1285 = vunpack.c.h.b16 %v161
    %v1286 = vunpack.c.l.b16 %v162
    %v1287 = vunpack.c.h.b16 %v162
    %v1288 = vunpack.c.l.b16 %v163
    %v1289 = vunpack.c.h.b16 %v163
    %v1290 = vunpack.c.l.b16 %v164
    %v1291 = vunpack.c.h.b16 %v164
    %v1292 = vunpack.c.l.b16 %v165
    %v1293 = vunpack.c.h.b16 %v165
    %v1294 = vunpack.c.l.b16 %v166
    %v1295 = vunpack.c.h.b16 %v166
    %v1296 = vunpack.c.l.b16 %v167
    %v1297 = vunpack.c.h.b16 %v167
    %v1298 = vunpack.c.l.b16 %v168
    %v1299 = vunpack.c.h.b16 %v168
    %v1300 = vunpack.c.l.b16 %v169
    %v1301 = vunpack.c.h.b16 %v169
    %v1302 = vunpack.c.l.b16 %v170
    %v1303 = vunpack.c.h.b16 %v170
    %v1304 = vunpack.c.l.b16 %v171
    %v1305 = vunpack.c.h.b16 %v171
    %v1306 = vunpack.c.l.b16 %v172
    %v1307 = vunpack.c.h.b16 %v172
    %v1308 = vunpack.c.l.b16 %v173
    %v1309 = vunpack.c.h.b16 %v173
    %v1310 = vunpack.c.l.b16 %v174
    %v1311 = vunpack.c.h.b16 %v174
    %v1312 = vunpack.c.l.b16 %v175
    %v1313 = vunpack.c.h.b16 %v175
    %v1314 = vunpack.c.l.b16 %v176
    %v1315 = vunpack.c.h.b16 %v176
    %v1316 = vunpack.c.l.b16 %v177
    %v1317 = vunpack.c.h.b16 %v177
    %v1318 = vunpack.c.l.b16 %v178
    %v1319 = vunpack.c.h.b16 %v178
    %v1320 = vunpack.c.l.b16 %v179
    %v1321 = vunpack.c.h.b16 %v179
    %v1322 = vunpack.c.l.b16 %v180
    %v1323 = vunpack.c.h.b16 %v180
    %v1324 = vunpack.c.l.b16 %v181
    %v1325 = vunpack.c.h.b16 %v181
    %v1326 = vunpack.c.l.b16 %v182
    %v1327 = vunpack.c.h.b16 %v182
    %v1328 = vunpack.c.l.b16 %v183
    %v1329 = vunpack.c.h.b16 %v183
    %v1330 = vunpack.c.l.b16 %v184
    %v1331 = vunpack.c.h.b16 %v184
    %v1332 = vunpack.c.l.b16 %v185
    %v1333 = vunpack.c.h.b16 %v185
    %v1334 = vunpack.c.l.b16 %v186
    %v1335 = vunpack.c.h.b16 %v186
    %v1336 = vunpack.c.l.b16 %v187
    %v1337 = vunpack.c.h.b16 %v187
    %v1338 = vunpack.c.l.b16 %v188
    %v1339 = vunpack.c.h.b16 %v188
    %v1340 = vunpack.c.l.b16 %v189
    %v1341 = vunpack.c.h.b16 %v189
    %v1342 = vunpack.c.l.b16 %v190
    %v1343 = vunpack.c.h.b16 %v190
    %v1344 = vunpack.c.l.b16 %v191
    %v1345 = vunpack.c.h.b16 %v191
    %v1346 = vunpack.c.l.b16 %v192
    %v1347 = vunpack.c.h.b16 %v192
    %v1348 = vunpack.c.l.b16 %v193
    %v1349 = vunpack.c.h.b16 %v193
    %v1350 = vunpack.c.l.b16 %v194
    %v1351 = vunpack.c.h.b16 %v194
    %v1352 = vunpack.c.l.b16 %v195
    %v1353 = vunpack.c.h.b16 %v195
    %v1354 = vunpack.c.l.b16 %v196
    %v1355 = vunpack.c.h.b16 %v196
    %v1356 = vunpack.c.l.b16 %v197
    %v1357 = vunpack.c.h.b16 %v197
    %v1358 = vunpack.c.l.b16 %v198
    %v1359 = vunpack.c.h.b16 %v198
    %v1360 = vunpack.c.l.b16 %v199
    %v1361 = vunpack.c.h.b16 %v199
    %v1362 = vunpack.c.l.b16 %v200
    %v1363 = vunpack.c.h.b16 %v200
    %v1364 = vunpack.c.l.b16 %v201
    %v1365 = vunpack.c.h.b16 %v201
    %v1366 = vunpack.c.l.b16 %v202
    %v1367 = vunpack.c.h.b16 %v202
    %v1368 = vunpack.c.l.b16 %v203
    %v1369 = vunpack.c.h.b16 %v203
    %v1370 = vunpack.c.l.b16 %v204
    %v1371 = vunpack.c.h.b16 %v204
    %v1372 = vunpack.c.l.b16 %v205
    %v1373 = vunpack.c.h.b16 %v205
    %v1374 = vunpack.c.l.b16 %v206
    %v1375 = vunpack.c.h.b16 %v206
    %v1376 = vunpack.c.l.b16 %v207
    %v1377 = vunpack.c.h.b16 %v207
    %v1378 = vunpack.c.l.b16 %v208
    %v1379 = vunpack.c.h.b16 %v208
    %v1380 = vunpack.c.l.b16 %v209
    %v1381 = vunpack.c.h.b16 %v209
    %v1382 = vunpack.c.l.b16 %v210
    %v1383 = vunpack.c.h.b16 %v210
    %v1384 = vunpack.c.l.b16 %v211
    %v1385 = vunpack.c.h.b16 %v211
    %v1386 = vunpack.c.l.b16 %v212
    %v1387 = vunpack.c.h.b16 %v212
    %v1388 = vunpack.c.l.b16 %v213
    %v1389 = vunpack.c.h.b16 %v213
    %v1390 = vunpack.c.l.b16 %v214
    %v1391 = vunpack.c.h.b16 %v214
    %v1392 = vunpack.c.l.b16 %v215
    %v1393 = vunpack.c.h.b16 %v215
    %v1394 = vunpack.c.l.b16 %v216
    %v1395 = vunpack.c.h.b16 %v216
    %v1396 = vunpack.c.l.b16 %v217
    %v1397 = vunpack.c.h.b16 %v217
    %v1398 = vunpack.c.l.b16 %v218
    %v1399 = vunpack.c.h.b16 %v218
    %v1400 = vunpack.c.l.b16 %v219
    %v1401 = vunpack.c.h.b16 %v219
    %v1402 = vunpack.c.l.b16 %v220
    %v1403 = vunpack.c.h.b16 %v220
    %v1404 = vunpack.c.l.b16 %v221
    %v1405 = vunpack.c.h.b16 %v221
    %v1406 = vunpack.c.l.b16 %v222
    %v1407 = vunpack.c.h.b16 %v222
    %v1408 = vunpack.c.l.b16 %v223
    %v1409 = vunpack.c.h.b16 %v223
    %v1410 = vunpack.c.l.b16 %v224
    %v1411 = vunpack.c.h.b16 %v224
    %v1412 = vunpack.c.l.b16 %v225
    %v1413 = vunpack.c.h.b16 %v225
    %v1414 = vunpack.c.l.b16 %v226
    %v1415 = vunpack.c.h.b16 %v226
    %v1416 = vunpack.c.l.b16 %v227
    %v1417 = vunpack.c.h.b16 %v227
    %v1418 = vunpack.c.l.b16 %v228
    %v1419 = vunpack.c.h.b16 %v228
    %v1420 = vunpack.c.l.b16 %v229
    %v1421 = vunpack.c.h.b16 %v229
    %v1422 = vunpack.c.l.b16 %v230
    %v1423 = vunpack.c.h.b16 %v230
    %v1424 = vunpack.c.l.b16 %v231
    %v1425 = vunpack.c.h.b16 %v231
    %v1426 = vunpack.c.l.b16 %v232
    %v1427 = vunpack.c.h.b16 %v232
    %v1428 = vunpack.c.l.b16 %v233
    %v1429 = vunpack.c.h.b16 %v233
    %v1430 = vunpack.c.l.b16 %v234
    %v1431 = vunpack.c.h.b16 %v234
    %v1432 = vunpack.c.l.b16 %v235
    %v1433 = vunpack.c.h.b16 %v235
    %v1434 = vunpack.c.l.b16 %v236
    %v1435 = vunpack.c.h.b16 %v236
    %v1436 = vunpack.c.l.b16 %v237
    %v1437 = vunpack.c.h.b16 %v237
    %v1438 = vunpack.c.l.b16 %v238
    %v1439 = vunpack.c.h.b16 %v238
    %v1440 = vunpack.c.l.b16 %v239
    %v1441 = vunpack.c.h.b16 %v239
    %v1442 = vunpack.c.l.b16 %v240
    %v1443 = vunpack.c.h.b16 %v240
    %v1444 = vunpack.c.l.b16 %v241
    %v1445 = vunpack.c.h.b16 %v241
    %v1446 = vunpack.c.l.b16 %v242
    %v1447 = vunpack.c.h.b16 %v242
    %v1448 = vunpack.c.l.b16 %v243
    %v1449 = vunpack.c.h.b16 %v243
    %v1450 = vunpack.c.l.b16 %v244
    %v1451 = vunpack.c.h.b16 %v244
    %v1452 = vunpack.c.l.b16 %v245
    %v1453 = vunpack.c.h.b16 %v245
    %v1454 = vunpack.c.l.b16 %v246
    %v1455 = vunpack.c.h.b16 %v246
    %v1456 = vunpack.c.l.b16 %v247
    %v1457 = vunpack.c.h.b16 %v247
    %v1458 = vunpack.c.l.b16 %v248
    %v1459 = vunpack.c.h.b16 %v248
    %v1460 = vunpack.c.l.b16 %v249
    %v1461 = vunpack.c.h.b16 %v249
    %v1462 = vunpack.c.l.b16 %v250
    %v1463 = vunpack.c.h.b16 %v250
    %v1464 = vunpack.c.l.b16 %v251
    %v1465 = vunpack.c.h.b16 %v251
    %v1466 = vunpack.c.l.b16 %v252
    %v1467 = vunpack.c.h.b16 %v252
    %v1468 = vunpack.c.l.b16 %v253
    %v1469 = vunpack.c.h.b16 %v253
    %v1470 = vunpack.c.l.b16 %v254
    %v1471 = vunpack.c.h.b16 %v254
    %v1472 = vunpack.c.l.b16 %v255
    %v1473 = vunpack.c.h.b16 %v255
    %v1474 = vunpack.c.l.b16 %v256
    %v1475 = vunpack.c.h.b16 %v256
    %v1476 = vunpack.c.l.b16 %v257
    %v1477 = vunpack.c.h.b16 %v257
    %v1478 = vunpack.c.l.b16 %v258
    %v1479 = vunpack.c.h.b16 %v258
    %v1480 = vunpack.c.l.b16 %v259
    %v1481 = vunpack.c.h.b16 %v259
    %v1482 = vunpack.c.l.b16 %v260
    %v1483 = vunpack.c.h.b16 %v260
    %v1484 = vunpack.c.l.b16 %v261
    %v1485 = vunpack.c.h.b16 %v261
    %v1486 = vunpack.c.l.b16 %v262
    %v1487 = vunpack.c.h.b16 %v262
    %v1488 = vunpack.c.l.b16 %v263
    %v1489 = vunpack.c.h.b16 %v263
    %v1490 = vunpack.c.l.b16 %v264
    %v1491 = vunpack.c.h.b16 %v264
    %v1492 = vunpack.c.l.b16 %v265
    %v1493 = vunpack.c.h.b16 %v265
    %v1494 = vunpack.c.l.b16 %v266
    %v1495 = vunpack.c.h.b16 %v266
    %v1496 = vunpack.c.l.b16 %v267
    %v1497 = vunpack.c.h.b16 %v267
    %v1498 = vunpack.c.l.b16 %v268
    %v1499 = vunpack.c.h.b16 %v268
    %v1500 = vunpack.c.l.b16 %v269
    %v1501 = vunpack.c.h.b16 %v269
    %v1502 = vunpack.c.l.b16 %v270
    %v1503 = vunpack.c.h.b16 %v270
    %v1504 = vunpack.c.l.b16 %v271
    %v1505 = vunpack.c.h.b16 %v271
    %v1506 = vunpack.c.l.b16 %v272
    %v1507 = vunpack.c.h.b16 %v272
    %v1508 = vunpack.c.l.b16 %v273
    %v1509 = vunpack.c.h.b16 %v273
    %v1510 = vunpack.c.l.b16 %v274
    %v1511 = vunpack.c.h.b16 %v274
    %v1512 = vunpack.c.l.b16 %v275
    %v1513 = vunpack.c.h.b16 %v275
    %v1514 = vunpack.c.l.b16 %v276
    %v1515 = vunpack.c.h.b16 %v276
    %v1516 = vunpack.c.l.b16 %v277
    %v1517 = vunpack.c.h.b16 %v277
    %v1518 = vunpack.c.l.b16 %v278
    %v1519 = vunpack.c.h.b16 %v278
    %v1520 = vunpack.c.l.b16 %v279
    %v1521 = vunpack.c.h.b16 %v279
    %v1522 = vunpack.c.l.b16 %v280
    %v1523 = vunpack.c.h.b16 %v280
    %v1524 = vunpack.c.l.b16 %v281
    %v1525 = vunpack.c.h.b16 %v281
    %v1526 = vunpack.c.l.b16 %v282
    %v1527 = vunpack.c.h.b16 %v282
    %v1528 = vunpack.c.l.b16 %v283
    %v1529 = vunpack.c.h.b16 %v283
    %v1530 = vunpack.c.l.b16 %v284
    %v1531 = vunpack.c.h.b16 %v284
    %v1532 = vunpack.c.l.b16 %v285
    %v1533 = vunpack.c.h.b16 %v285
    %v1534 = vunpack.c.l.b16 %v286
    %v1535 = vunpack.c.h.b16 %v286
    %v1536 = vunpack.c.l.b16 %v287
    %v1537 = vunpack.c.h.b16 %v287
    %v1538 = vunpack.c.l.b16 %v288
    %v1539 = vunpack.c.h.b16 %v288
    %v1540 = vunpack.c.l.b16 %v289
    %v1541 = vunpack.c.h.b16 %v289
    %v1542 = vunpack.c.l.b16 %v290
    %v1543 = vunpack.c.h.b16 %v290
    %v1544 = vunpack.c.l.b16 %v291
    %v1545 = vunpack.c.h.b16 %v291
    %v1546 = vunpack.c.l.b16 %v292
    %v1547 = vunpack.c.h.b16 %v292
    %v1548 = vunpack.c.l.b16 %v293
    %v1549 = vunpack.c.h.b16 %v293
    %v1550 = vunpack.c.l.b16 %v294
    %v1551 = vunpack.c.h.b16 %v294
    %v1552 = vunpack.c.l.b16 %v295
    %v1553 = vunpack.c.h.b16 %v295
    %v1554 = vunpack.c.l.b16 %v296
    %v1555 = vunpack.c.h.b16 %v296
    %v1556 = vunpack.c.l.b16 %v297
    %v1557 = vunpack.c.h.b16 %v297
    %v1558 = vunpack.c.l.b16 %v298
    %v1559 = vunpack.c.h.b16 %v298
    %v1560 = vunpack.c.l.b16 %v299
    %v1561 = vunpack.c.h.b16 %v299
    %v1562 = vunpack.c.l.b16 %v300
    %v1563 = vunpack.c.h.b16 %v300
    %v1564 = vunpack.c.l.b16 %v301
    %v1565 = vunpack.c.h.b16 %v301
    %v1566 = vunpack.c.l.b16 %v302
    %v1567 = vunpack.c.h.b16 %v302
    %v1568 = vunpack.c.l.b16 %v303
    %v1569 = vunpack.c.h.b16 %v303
    %v1570 = vunpack.c.l.b16 %v304
    %v1571 = vunpack.c.h.b16 %v304
    %v1572 = vunpack.c.l.b16 %v305
    %v1573 = vunpack.c.h.b16 %v305
    %v1574 = vunpack.c.l.b16 %v306
    %v1575 = vunpack.c.h.b16 %v306
    %v1576 = vunpack.c.l.b16 %v307
    %v1577 = vunpack.c.h.b16 %v307
    %v1578 = vunpack.c.l.b16 %v308
    %v1579 = vunpack.c.h.b16 %v308
    %v1580 = vunpack.c.l.b16 %v309
    %v1581 = vunpack.c.h.b16 %v309
    %v1582 = vunpack.c.l.b16 %v310
    %v1583 = vunpack.c.h.b16 %v310
    %v1584 = vunpack.c.l.b16 %v311
    %v1585 = vunpack.c.h.b16 %v311
    %v1586 = vunpack.c.l.b16 %v312
    %v1587 = vunpack.c.h.b16 %v312
    %v1588 = vunpack.c.l.b16 %v313
    %v1589 = vunpack.c.h.b16 %v313
    %v1590 = vunpack.c.l.b16 %v314
    %v1591 = vunpack.c.h.b16 %v314
    %v1592 = vunpack.c.l.b16 %v315
    %v1593 = vunpack.c.h.b16 %v315
    %v1594 = vunpack.c.l.b16 %v316
    %v1595 = vunpack.c.h.b16 %v316
    %v1596 = vunpack.c.l.b16 %v317
    %v1597 = vunpack.c.h.b16 %v317
    %v1598 = vunpack.c.l.b16 %v318
    %v1599 = vunpack.c.h.b16 %v318
    %v1600 = vunpack.c.l.b16 %v319
    %v1601 = vunpack.c.h.b16 %v319
    %v1602 = vunpack.c.l.b16 %v320
    %v1603 = vunpack.c.h.b16 %v320
    %v1604 = vunpack.c.l.b16 %v321
    %v1605 = vunpack.c.h.b16 %v321
    %v1606 = vunpack.c.l.b16 %v322
    %v1607 = vunpack.c.h.b16 %v322
    %v1608 = vunpack.c.l.b16 %v323
    %v1609 = vunpack.c.h.b16 %v323
    %v1610 = vunpack.c.l.b16 %v324
    %v1611 = vunpack.c.h.b16 %v324
    %v1612 = vunpack.c.l.b16 %v325
    %v1613 = vunpack.c.h.b16 %v325
    %v1614 = vunpack.c.l.b16 %v326
    %v1615 = vunpack.c.h.b16 %v326
    %v1616 = vunpack.c.l.b16 %v327
    %v1617 = vunpack.c.h.b16 %v327
    %v1618 = vunpack.c.l.b16 %v328
    %v1619 = vunpack.c.h.b16 %v328
    %v1620 = vunpack.c.l.b16 %v329
    %v1621 = vunpack.c.h.b16 %v329
    %v1622 = vunpack.c.l.b16 %v330
    %v1623 = vunpack.c.h.b16 %v330
    %v1624 = vunpack.c.l.b16 %v331
    %v1625 = vunpack.c.h.b16 %v331
    %v1626 = vunpack.c.l.b16 %v332
    %v1627 = vunpack.c.h.b16 %v332
    %v1628 = vunpack.c.l.b16 %v333
    %v1629 = vunpack.c.h.b16 %v333
    %v1630 = vunpack.c.l.b16 %v334
    %v1631 = vunpack.c.h.b16 %v334
    %v1632 = vunpack.c.l.b16 %v335
    %v1633 = vunpack.c.h.b16 %v335
    %v1634 = vunpack.c.l.b16 %v336
    %v1635 = vunpack.c.h.b16 %v336
    %v1636 = vunpack.c.l.b16 %v337
    %v1637 = vunpack.c.h.b16 %v337
    %v1638 = vunpack.c.l.b16 %v338
    %v1639 = vunpack.c.h.b16 %v338
    %v1640 = vunpack.c.l.b16 %v339
    %v1641 = vunpack.c.h.b16 %v339
    %v1642 = vunpack.c.l.b16 %v340
    %v1643 = vunpack.c.h.b16 %v340
    %v1644 = vunpack.c.l.b16 %v341
    %v1645 = vunpack.c.h.b16 %v341
    %v1646 = vunpack.c.l.b16 %v342
    %v1647 = vunpack.c.h.b16 %v342
    %v1648 = vunpack.c.l.b16 %v343
    %v1649 = vunpack.c.h.b16 %v343
    %v1650 = vunpack.c.l.b16 %v344
    %v1651 = vunpack.c.h.b16 %v344
    %v1652 = vunpack.c.l.b16 %v345
    %v1653 = vunpack.c.h.b16 %v345
    %v1654 = vunpack.c.l.b16 %v346
    %v1655 = vunpack.c.h.b16 %v346
    %v1656 = vunpack.c.l.b16 %v347
    %v1657 = vunpack.c.h.b16 %v347
    %v1658 = vunpack.c.l.b16 %v348
    %v1659 = vunpack.c.h.b16 %v348
    %v1660 = vunpack.c.l.b16 %v349
    %v1661 = vunpack.c.h.b16 %v349
    %v1662 = vunpack.c.l.b16 %v350
    %v1663 = vunpack.c.h.b16 %v350
    %v1664 = vunpack.c.l.b16 %v351
    %v1665 = vunpack.c.h.b16 %v351
    %v1666 = vunpack.c.l.b16 %v352
    %v1667 = vunpack.c.h.b16 %v352
    %v1668 = vunpack.c.l.b16 %v353
    %v1669 = vunpack.c.h.b16 %v353
    %v1670 = vunpack.c.l.b16 %v354
    %v1671 = vunpack.c.h.b16 %v354
    %v1672 = vunpack.c.l.b16 %v355
    %v1673 = vunpack.c.h.b16 %v355
    %v1674 = vunpack.c.l.b16 %v356
    %v1675 = vunpack.c.h.b16 %v356
    %v1676 = vunpack.c.l.b16 %v357
    %v1677 = vunpack.c.h.b16 %v357
    %v1678 = vunpack.c.l.b16 %v358
    %v1679 = vunpack.c.h.b16 %v358
    %v1680 = vunpack.c.l.b16 %v359
    %v1681 = vunpack.c.h.b16 %v359
    %v1682 = vunpack.c.l.b16 %v360
    %v1683 = vunpack.c.h.b16 %v360
    %v1684 = vunpack.c.l.b16 %v361
    %v1685 = vunpack.c.h.b16 %v361
    %v1686 = vunpack.c.l.b16 %v362
    %v1687 = vunpack.c.h.b16 %v362
    %v1688 = vunpack.c.l.b16 %v363
    %v1689 = vunpack.c.h.b16 %v363
    %v1690 = vunpack.c.l.b16 %v364
    %v1691 = vunpack.c.h.b16 %v364
    %v1692 = vunpack.c.l.b16 %v365
    %v1693 = vunpack.c.h.b16 %v365
    %v1694 = vunpack.c.l.b16 %v366
    %v1695 = vunpack.c.h.b16 %v366
    %v1696 = vunpack.c.l.b16 %v367
    %v1697 = vunpack.c.h.b16 %v367
    %v1698 = vunpack.c.l.b16 %v368
    %v1699 = vunpack.c.h.b16 %v368
    %v1700 = vunpack.c.l.b16 %v369
    %v1701 = vunpack.c.h.b16 %v369
    %v1702 = vunpack.c.l.b16 %v370
    %v1703 = vunpack.c.h.b16 %v370
    %v1704 = vunpack.c.l.b16 %v371
    %v1705 = vunpack.c.h.b16 %v371
    %v1706 = vunpack.c.l.b16 %v372
    %v1707 = vunpack.c.h.b16 %v372
    %v1708 = vunpack.c.l.b16 %v373
    %v1709 = vunpack.c.h.b16 %v373
    %v1710 = vunpack.c.l.b16 %v374
    %v1711 = vunpack.c.h.b16 %v374
    %v1712 = vunpack.c.l.b16 %v375
    %v1713 = vunpack.c.h.b16 %v375
    %v1714 = vunpack.c.l.b16 %v376
    %v1715 = vunpack.c.h.b16 %v376
    %v1716 = vunpack.c.l.b16 %v377
    %v1717 = vunpack.c.h.b16 %v377
    %v1718 = vunpack.c.l.b16 %v378
    %v1719 = vunpack.c.h.b16 %v378
    %v1720 = vunpack.c.l.b16 %v379
    %v1721 = vunpack.c.h.b16 %v379
    %v1722 = vunpack.c.l.b16 %v380
    %v1723 = vunpack.c.h.b16 %v380
    %v1724 = vunpack.c.l.b16 %v381
    %v1725 = vunpack.c.h.b16 %v381
    %v1726 = vunpack.c.l.b16 %v382
    %v1727 = vunpack.c.h.b16 %v382
    %v1728 = vunpack.c.l.b16 %v383
    %v1729 = vunpack.c.h.b16 %v383
    %v1730 = vunpack.c.l.b16 %v384
    %v1731 = vunpack.c.h.b16 %v384
    %v1732 = vunpack.c.l.b16 %v385
    %v1733 = vunpack.c.h.b16 %v385
    %v1734 = vunpack.c.l.b16 %v386
    %v1735 = vunpack.c.h.b16 %v386
    %v1736 = vunpack.c.l.b16 %v387
    %v1737 = vunpack.c.h.b16 %v387
    %v1738 = vunpack.c.l.b16 %v388
    %v1739 = vunpack.c.h.b16 %v388
    %v1740 = vunpack.c.l.b16 %v389
    %v1741 = vunpack.c.h.b16 %v389
    %v1742 = vunpack.c.l.b16 %v390
    %v1743 = vunpack.c.h.b16 %v390
    %v1744 = vunpack.c.l.b16 %v391
    %v1745 = vunpack.c.h.b16 %v391
    %v1746 = vunpack.c.l.b16 %v392
    %v1747 = vunpack.c.h.b16 %v392
    %v1748 = vunpack.c.l.b16 %v393
    %v1749 = vunpack.c.h.b16 %v393
    %v1750 = vunpack.c.l.b16 %v394
    %v1751 = vunpack.c.h.b16 %v394
    %v1752 = vunpack.c.l.b16 %v395
    %v1753 = vunpack.c.h.b16 %v395
    %v1754 = vunpack.c.l.b16 %v396
    %v1755 = vunpack.c.h.b16 %v396
    %v1756 = vunpack.c.l.b16 %v397
    %v1757 = vunpack.c.h.b16 %v397
    %v1758 = vunpack.c.l.b16 %v398
    %v1759 = vunpack.c.h.b16 %v398
    %v1760 = vunpack.c.l.b16 %v399
    %v1761 = vunpack.c.h.b16 %v399
    %v1762 = vunpack.c.l.b16 %v400
    %v1763 = vunpack.c.h.b16 %v400
    %v1764 = vunpack.c.l.b16 %v401
    %v1765 = vunpack.c.h.b16 %v401
    %v1766 = vunpack.c.l.b16 %v402
    %v1767 = vunpack.c.h.b16 %v402
    %v1768 = vunpack.c.l.b16 %v403
    %v1769 = vunpack.c.h.b16 %v403
    %v1770 = vunpack.c.l.b16 %v404
    %v1771 = vunpack.c.h.b16 %v404
    %v1772 = vunpack.c.l.b16 %v405
    %v1773 = vunpack.c.h.b16 %v405
    %v1774 = vunpack.c.l.b16 %v406
    %v1775 = vunpack.c.h.b16 %v406
    %v1776 = vunpack.c.l.b16 %v407
    %v1777 = vunpack.c.h.b16 %v407
    %v1778 = vunpack.c.l.b16 %v408
    %v1779 = vunpack.c.h.b16 %v408
    %v1780 = vunpack.c.l.b16 %v409
    %v1781 = vunpack.c.h.b16 %v409
    %v1782 = vunpack.c.l.b16 %v410
    %v1783 = vunpack.c.h.b16 %v410
    %v1784 = vunpack.c.l.b16 %v411
    %v1785 = vunpack.c.h.b16 %v411
    %v1786 = vunpack.c.l.b16 %v412
    %v1787 = vunpack.c.h.b16 %v412
    %v1788 = vunpack.c.l.b16 %v413
    %v1789 = vunpack.c.h.b16 %v413
    %v1790 = vunpack.c.l.b16 %v414
    %v1791 = vunpack.c.h.b16 %v414
    %v1792 = vunpack.c.l.b16 %v415
    %v1793 = vunpack.c.h.b16 %v415
    %v1794 = vunpack.c.l.b16 %v416
    %v1795 = vunpack.c.h.b16 %v416
    %v1796 = vunpack.c.l.b16 %v417
    %v1797 = vunpack.c.h.b16 %v417
    %v1798 = vunpack.c.l.b16 %v418
    %v1799 = vunpack.c.h.b16 %v418
    %v1800 = vunpack.c.l.b16 %v419
    %v1801 = vunpack.c.h.b16 %v419
    %v1802 = vunpack.c.l.b16 %v420
    %v1803 = vunpack.c.h.b16 %v420
    %v1804 = vunpack.c.l.b16 %v421
    %v1805 = vunpack.c.h.b16 %v421
    %v1806 = vunpack.c.l.b16 %v422
    %v1807 = vunpack.c.h.b16 %v422
    %v1808 = vunpack.c.l.b16 %v423
    %v1809 = vunpack.c.h.b16 %v423
    %v1810 = vunpack.c.l.b16 %v424
    %v1811 = vunpack.c.h.b16 %v424
    %v1812 = vunpack.c.l.b16 %v425
    %v1813 = vunpack.c.h.b16 %v425
    %v1814 = vunpack.c.l.b16 %v426
    %v1815 = vunpack.c.h.b16 %v426
    %v1816 = vunpack.c.l.b16 %v427
    %v1817 = vunpack.c.h.b16 %v427
    %v1818 = vunpack.c.l.b16 %v428
    %v1819 = vunpack.c.h.b16 %v428
    %v1820 = vunpack.c.l.b16 %v429
    %v1821 = vunpack.c.h.b16 %v429
    %v1822 = vunpack.c.l.b16 %v430
    %v1823 = vunpack.c.h.b16 %v430
    %v1824 = vunpack.c.l.b16 %v431
    %v1825 = vunpack.c.h.b16 %v431
    %v1826 = vunpack.c.l.b16 %v432
    %v1827 = vunpack.c.h.b16 %v432
    %v1828 = vunpack.c.l.b16 %v433
    %v1829 = vunpack.c.h.b16 %v433
    %v1830 = vunpack.c.l.b16 %v434
    %v1831 = vunpack.c.h.b16 %v434
    %v1832 = vunpack.c.l.b16 %v435
    %v1833 = vunpack.c.h.b16 %v435
    %v1834 = vunpack.c.l.b16 %v436
    %v1835 = vunpack.c.h.b16 %v436
    %v1836 = vunpack.c.l.b16 %v437
    %v1837 = vunpack.c.h.b16 %v437
    %v1838 = vunpack.c.l.b16 %v438
    %v1839 = vunpack.c.h.b16 %v438
    %v1840 = vunpack.c.l.b16 %v439
    %v1841 = vunpack.c.h.b16 %v439
    %v1842 = vunpack.c.l.b16 %v440
    %v1843 = vunpack.c.h.b16 %v440
    %v1844 = vunpack.c.l.b16 %v441
    %v1845 = vunpack.c.h.b16 %v441
    %v1846 = vunpack.c.l.b16 %v442
    %v1847 = vunpack.c.h.b16 %v442
    %v1848 = vunpack.c.l.b16 %v443
    %v1849 = vunpack.c.h.b16 %v443
    %v1850 = vunpack.c.l.b16 %v444
    %v1851 = vunpack.c.h.b16 %v444
    %v1852 = vunpack.c.l.b16 %v445
    %v1853 = vunpack.c.h.b16 %v445
    %v1854 = vunpack.c.l.b16 %v446
    %v1855 = vunpack.c.h.b16 %v446
    %v1856 = vunpack.c.l.b16 %v447
    %v1857 = vunpack.c.h.b16 %v447
    %v1858 = vunpack.c.l.b16 %v448
    %v1859 = vunpack.c.h.b16 %v448
    %v1860 = vunpack.c.l.b16 %v449
    %v1861 = vunpack.c.h.b16 %v449
    %v1862 = vunpack.c.l.b16 %v450
    %v1863 = vunpack.c.h.b16 %v450
    %v1864 = vunpack.c.l.b16 %v451
    %v1865 = vunpack.c.h.b16 %v451
    %v1866 = vunpack.c.l.b16 %v452
    %v1867 = vunpack.c.h.b16 %v452
    %v1868 = vunpack.c.l.b16 %v453
    %v1869 = vunpack.c.h.b16 %v453
    %v1870 = vunpack.c.l.b16 %v454
    %v1871 = vunpack.c.h.b16 %v454
    %v1872 = vunpack.c.l.b16 %v455
    %v1873 = vunpack.c.h.b16 %v455
    %v1874 = vunpack.c.l.b16 %v456
    %v1875 = vunpack.c.h.b16 %v456
    %v1876 = vunpack.c.l.b16 %v457
    %v1877 = vunpack.c.h.b16 %v457
    %v1878 = vunpack.c.l.b16 %v458
    %v1879 = vunpack.c.h.b16 %v458
    %v1880 = vunpack.c.l.b16 %v459
    %v1881 = vunpack.c.h.b16 %v459
    %v1882 = vunpack.c.l.b16 %v460
    %v1883 = vunpack.c.h.b16 %v460
    %v1884 = vunpack.c.l.b16 %v461
    %v1885 = vunpack.c.h.b16 %v461
    %v1886 = vunpack.c.l.b16 %v462
    %v1887 = vunpack.c.h.b16 %v462
    %v1888 = vunpack.c.l.b16 %v463
    %v1889 = vunpack.c.h.b16 %v463
    %v1890 = vunpack.c.l.b16 %v464
    %v1891 = vunpack.c.h.b16 %v464
    %v1892 = vunpack.c.l.b16 %v465
    %v1893 = vunpack.c.h.b16 %v465
    %v1894 = vunpack.c.l.b16 %v466
    %v1895 = vunpack.c.h.b16 %v466
    %v1896 = vunpack.c.l.b16 %v467
    %v1897 = vunpack.c.h.b16 %v467
    %v1898 = vunpack.c.l.b16 %v468
    %v1899 = vunpack.c.h.b16 %v468
    %v1900 = vunpack.c.l.b16 %v469
    %v1901 = vunpack.c.h.b16 %v469
    %v1902 = vunpack.c.l.b16 %v470
    %v1903 = vunpack.c.h.b16 %v470
    %v1904 = vunpack.c.l.b16 %v471
    %v1905 = vunpack.c.h.b16 %v471
    %v1906 = vunpack.c.l.b16 %v472
    %v1907 = vunpack.c.h.b16 %v472
    %v1908 = vunpack.c.l.b16 %v473
    %v1909 = vunpack.c.h.b16 %v473
    %v1910 = vunpack.c.l.b16 %v474
    %v1911 = vunpack.c.h.b16 %v474
    %v1912 = vunpack.c.l.b16 %v475
    %v1913 = vunpack.c.h.b16 %v475
    %v1914 = vunpack.c.l.b16 %v476
    %v1915 = vunpack.c.h.b16 %v476
    %v1916 = vunpack.c.l.b16 %v477
    %v1917 = vunpack.c.h.b16 %v477
    %v1918 = vunpack.c.l.b16 %v478
    %v1919 = vunpack.c.h.b16 %v478
    %v1920 = vunpack.c.l.b16 %v479
    %v1921 = vunpack.c.h.b16 %v479
    %v1922 = vunpack.c.l.b16 %v480
    %v1923 = vunpack.c.h.b16 %v480
    %v1924 = vunpack.c.l.b16 %v481
    %v1925 = vunpack.c.h.b16 %v481
    %v1926 = vunpack.c.l.b16 %v482
    %v1927 = vunpack.c.h.b16 %v482
    %v1928 = vunpack.c.l.b16 %v483
    %v1929 = vunpack.c.h.b16 %v483
    %v1930 = vunpack.c.l.b16 %v484
    %v1931 = vunpack.c.h.b16 %v484
    %v1932 = vunpack.c.l.b16 %v485
    %v1933 = vunpack.c.h.b16 %v485
    %v1934 = vunpack.c.l.b16 %v486
    %v1935 = vunpack.c.h.b16 %v486
    %v1936 = vunpack.c.l.b16 %v487
    %v1937 = vunpack.c.h.b16 %v487
    %v1938 = vunpack.c.l.b16 %v488
    %v1939 = vunpack.c.h.b16 %v488
    %v1940 = vunpack.c.l.b16 %v489
    %v1941 = vunpack.c.h.b16 %v489
    %v1942 = vunpack.c.l.b16 %v490
    %v1943 = vunpack.c.h.b16 %v490
    %v1944 = vunpack.c.l.b16 %v491
    %v1945 = vunpack.c.h.b16 %v491
    %v1946 = vunpack.c.l.b16 %v492
    %v1947 = vunpack.c.h.b16 %v492
    %v1948 = vunpack.c.l.b16 %v493
    %v1949 = vunpack.c.h.b16 %v493
    %v1950 = vunpack.c.l.b16 %v494
    %v1951 = vunpack.c.h.b16 %v494
    %v1952 = vunpack.c.l.b16 %v495
    %v1953 = vunpack.c.h.b16 %v495
    %v1954 = vunpack.c.l.b16 %v496
    %v1955 = vunpack.c.h.b16 %v496
    %v1956 = vunpack.c.l.b16 %v497
    %v1957 = vunpack.c.h.b16 %v497
    %v1958 = vunpack.c.l.b16 %v498
    %v1959 = vunpack.c.h.b16 %v498
    %v1960 = vunpack.c.l.b16 %v499
    %v1961 = vunpack.c.h.b16 %v499
    %v1962 = vunpack.c.l.b16 %v500
    %v1963 = vunpack.c.h.b16 %v500
    %v1964 = vunpack.c.l.b16 %v501
    %v1965 = vunpack.c.h.b16 %v501
    %v1966 = vunpack.c.l.b16 %v502
    %v1967 = vunpack.c.h.b16 %v502
    %v1968 = vunpack.c.l.b16 %v503
    %v1969 = vunpack.c.h.b16 %v503
    %v1970 = vunpack.c.l.b16 %v504
    %v1971 = vunpack.c.h.b16 %v504
    %v1972 = vunpack.c.l.b16 %v505
    %v1973 = vunpack.c.h.b16 %v505
    %v1974 = vunpack.c.l.b16 %v506
    %v1975 = vunpack.c.h.b16 %v506
    %v1976 = vunpack.c.l.b16 %v507
    %v1977 = vunpack.c.h.b16 %v507
    %v1978 = vunpack.c.l.b16 %v508
    %v1979 = vunpack.c.h.b16 %v508
    %v1980 = vunpack.c.l.b16 %v509
    %v1981 = vunpack.c.h.b16 %v509
    %v1982 = vunpack.c.l.b16 %v510
    %v1983 = vunpack.c.h.b16 %v510
    %v1984 = vunpack.c.l.b16 %v511
    %v1985 = vunpack.c.h.b16 %v511
    %v1986 = vunpack.c.l.b16 %v512
    %v1987 = vunpack.c.h.b16 %v512
    %v1988 = vunpack.c.l.b16 %v513
    %v1989 = vunpack.c.h.b16 %v513
    %v1990 = vunpack.c.l.b16 %v514
    %v1991 = vunpack.c.h.b16 %v514
    %v1992 = vunpack.c.l.b16 %v515
    %v1993 = vunpack.c.h.b16 %v515
    %v1994 = vunpack.c.l.b16 %v516
    %v1995 = vunpack.c.h.b16 %v516
    %v1996 = vunpack.c.l.b16 %v517
    %v1997 = vunpack.c.h.b16 %v517
    %v1998 = vunpack.c.l.b16 %v518
    %v1999 = vunpack.c.h.b16 %v518
    %v2000 = vunpack.c.l.b16 %v519
    %v2001 = vunpack.c.h.b16 %v519
    %v2002 = vunpack.c.l.b16 %v520
    %v2003 = vunpack.c.h.b16 %v520
    %v2004 = vunpack.c.l.b16 %v521
    %v2005 = vunpack.c.h.b16 %v521
    %v2006 = vunpack.c.l.b16 %v522
    %v2007 = vunpack.c.h.b16 %v522
    %v2008 = vunpack.c.l.b16 %v523
    %v2009 = vunpack.c.h.b16 %v523
    %v2010 = vunpack.c.l.b16 %v524
    %v2011 = vunpack.c.h.b16 %v524
    %v2012 = vunpack.c.l.b16 %v525
    %v2013 = vunpack.c.h.b16 %v525
    %v2014 = vunpack.c.l.b16 %v526
    %v2015 = vunpack.c.h.b16 %v526
    %v2016 = vunpack.c.l.b16 %v527
    %v2017 = vunpack.c.h.b16 %v527
    %v2018 = vunpack.c.l.b16 %v528
    %v2019 = vunpack.c.h.b16 %v528
    %v2020 = vunpack.c.l.b16 %v529
    %v2021 = vunpack.c.h.b16 %v529
    %v2022 = vunpack.c.l.b16 %v530
    %v2023 = vunpack.c.h.b16 %v530
    %v2024 = vunpack.c.l.b16 %v531
    %v2025 = vunpack.c.h.b16 %v531
    %v2026 = vunpack.c.l.b16 %v532
    %v2027 = vunpack.c.h.b16 %v532
    %v2028 = vunpack.c.l.b16 %v533
    %v2029 = vunpack.c.h.b16 %v533
    %v2030 = vunpack.c.l.b16 %v534
    %v2031 = vunpack.c.h.b16 %v534
    %v2032 = vunpack.c.l.b16 %v535
    %v2033 = vunpack.c.h.b16 %v535
    %v2034 = vunpack.c.l.b16 %v536
    %v2035 = vunpack.c.h.b16 %v536
    %v2036 = vunpack.c.l.b16 %v537
    %v2037 = vunpack.c.h.b16 %v537
    %v2038 = vunpack.c.l.b16 %v538
    %v2039 = vunpack.c.h.b16 %v538
    %v2040 = vunpack.c.l.b16 %v539
    %v2041 = vunpack.c.h.b16 %v539
    %v2042 = vunpack.c.l.b16 %v540
    %v2043 = vunpack.c.h.b16 %v540
    %v2044 = vunpack.c.l.b16 %v541
    %v2045 = vunpack.c.h.b16 %v541
    %v2046 = vunpack.c.l.b16 %v542
    %v2047 = vunpack.c.h.b16 %v542
    %v2048 = vunpack.c.l.b16 %v543
    %v2049 = vunpack.c.h.b16 %v543
    %v2050 = vunpack.c.l.b16 %v544
    %v2051 = vunpack.c.h.b16 %v544
    %v2052 = vunpack.c.l.b16 %v545
    %v2053 = vunpack.c.h.b16 %v545
    %v2054 = vunpack.c.l.b16 %v546
    %v2055 = vunpack.c.h.b16 %v546
    %v2056 = vunpack.c.l.b16 %v547
    %v2057 = vunpack.c.h.b16 %v547
    %v2058 = vunpack.c.l.b16 %v548
    %v2059 = vunpack.c.h.b16 %v548
    %v2060 = vunpack.c.l.b16 %v549
    %v2061 = vunpack.c.h.b16 %v549
    %v2062 = vunpack.c.l.b16 %v550
    %v2063 = vunpack.c.h.b16 %v550
    %v2064 = vunpack.c.l.b16 %v551
    %v2065 = vunpack.c.h.b16 %v551
    %v2066 = vunpack.c.l.b16 %v552
    %v2067 = vunpack.c.h.b16 %v552
    %v2068 = vunpack.c.l.b16 %v553
    %v2069 = vunpack.c.h.b16 %v553
    %v2070 = vunpack.c.l.b16 %v554
    %v2071 = vunpack.c.h.b16 %v554
    %v2072 = vunpack.c.l.b16 %v555
    %v2073 = vunpack.c.h.b16 %v555
    %v2074 = vunpack.c.l.b16 %v556
    %v2075 = vunpack.c.h.b16 %v556
    %v2076 = vunpack.c.l.b16 %v557
    %v2077 = vunpack.c.h.b16 %v557
    %v2078 = vunpack.c.l.b16 %v558
    %v2079 = vunpack.c.h.b16 %v558
    %v2080 = vunpack.c.l.b16 %v559
    %v2081 = vunpack.c.h.b16 %v559
    %v2082 = vunpack.c.l.b16 %v560
    %v2083 = vunpack.c.h.b16 %v560
    %v2084 = vunpack.c.l.b16 %v561
    %v2085 = vunpack.c.h.b16 %v561
    %v2086 = vunpack.c.l.b16 %v562
    %v2087 = vunpack.c.h.b16 %v562
    %v2088 = vunpack.c.l.b16 %v563
    %v2089 = vunpack.c.h.b16 %v563
    %v2090 = vunpack.c.l.b16 %v564
    %v2091 = vunpack.c.h.b16 %v564
    %v2092 = vunpack.c.l.b16 %v565
    %v2093 = vunpack.c.h.b16 %v565
    %v2094 = vunpack.c.l.b16 %v566
    %v2095 = vunpack.c.h.b16 %v566
    %v2096 = vunpack.c.l.b16 %v567
    %v2097 = vunpack.c.h.b16 %v567
    %v2098 = vunpack.c.l.b16 %v568
    %v2099 = vunpack.c.h.b16 %v568
    %v2100 = vunpack.c.l.b16 %v569
    %v2101 = vunpack.c.h.b16 %v569
    %v2102 = vunpack.c.l.b16 %v570
    %v2103 = vunpack.c.h.b16 %v570
    %v2104 = vunpack.c.l.b16 %v571
    %v2105 = vunpack.c.h.b16 %v571
    %v2106 = vunpack.c.l.b16 %v572
    %v2107 = vunpack.c.h.b16 %v572
    %v2108 = vunpack.c.l.b16 %v573
    %v2109 = vunpack.c.h.b16 %v573
    %v2110 = vunpack.c.l.b16 %v574
    %v2111 = vunpack.c.h.b16 %v574
    %v2112 = vunpack.c.l.b16 %v575
    %v2113 = vunpack.c.h.b16 %v575
    %v2114 = vunpack.c.l.b16 %v576
    %v2115 = vunpack.c.h.b16 %v576
    %v2116 = vunpack.c.l.b16 %v577
    %v2117 = vunpack.c.h.b16 %v577
    %v2118 = vunpack.c.l.b16 %v578
    %v2119 = vunpack.c.h.b16 %v578
    %v2120 = vunpack.c.l.b16 %v579
    %v2121 = vunpack.c.h.b16 %v579
    %v2122 = vunpack.c.l.b16 %v580
    %v2123 = vunpack.c.h.b16 %v580
    %v2124 = vunpack.c.l.b16 %v581
    %v2125 = vunpack.c.h.b16 %v581
    %v2126 = vunpack.c.l.b16 %v582
    %v2127 = vunpack.c.h.b16 %v582
    %v2128 = vunpack.c.l.b16 %v583
    %v2129 = vunpack.c.h.b16 %v583
    %v2130 = vunpack.c.l.b16 %v584
    %v2131 = vunpack.c.h.b16 %v584
    %v2132 = vunpack.c.l.b16 %v585
    %v2133 = vunpack.c.h.b16 %v585
    %v2134 = vunpack.c.l.b16 %v586
    %v2135 = vunpack.c.h.b16 %v586
    %v2136 = vunpack.c.l.b16 %v587
    %v2137 = vunpack.c.h.b16 %v587
    %v2138 = vunpack.c.l.b16 %v588
    %v2139 = vunpack.c.h.b16 %v588
    %v2140 = vunpack.c.l.b16 %v589
    %v2141 = vunpack.c.h.b16 %v589
    %v2142 = vunpack.c.l.b16 %v590
    %v2143 = vunpack.c.h.b16 %v590
    %v2144 = vunpack.c.l.b16 %v591
    %v2145 = vunpack.c.h.b16 %v591
    %v2146 = vunpack.c.l.b16 %v592
    %v2147 = vunpack.c.h.b16 %v592
    %v2148 = vunpack.c.l.b16 %v593
    %v2149 = vunpack.c.h.b16 %v593
    %v2150 = vunpack.c.l.b16 %v594
    %v2151 = vunpack.c.h.b16 %v594
    %v2152 = vunpack.c.l.b16 %v595
    %v2153 = vunpack.c.h.b16 %v595
    %v2154 = vunpack.c.l.b16 %v596
    %v2155 = vunpack.c.h.b16 %v596
    %v2156 = vunpack.c.l.b16 %v597
    %v2157 = vunpack.c.h.b16 %v597
    %v2158 = vunpack.c.l.b16 %v598
    %v2159 = vunpack.c.h.b16 %v598
    %v2160 = vunpack.c.l.b16 %v599
    %v2161 = vunpack.c.h.b16 %v599
    %v2162 = vunpack.c.l.b16 %v600
    %v2163 = vunpack.c.h.b16 %v600
    %v2164 = vunpack.c.l.b16 %v601
    %v2165 = vunpack.c.h.b16 %v601
    %v2166 = vunpack.c.l.b16 %v602
    %v2167 = vunpack.c.h.b16 %v602
    %v2168 = vunpack.c.l.b16 %v603
    %v2169 = vunpack.c.h.b16 %v603
    %v2170 = vunpack.c.l.b16 %v604
    %v2171 = vunpack.c.h.b16 %v604
    %v2172 = vunpack.c.l.b16 %v605
    %v2173 = vunpack.c.h.b16 %v605
    %v2174 = vunpack.c.l.b16 %v606
    %v2175 = vunpack.c.h.b16 %v606
    %v2176 = vunpack.c.l.b16 %v607
    %v2177 = vunpack.c.h.b16 %v607
    %v2178 = vunpack.c.l.b16 %v608
    %v2179 = vunpack.c.h.b16 %v608
    %v2180 = vunpack.c.l.b16 %v609
    %v2181 = vunpack.c.h.b16 %v609
    %v2182 = vunpack.c.l.b16 %v610
    %v2183 = vunpack.c.h.b16 %v610
    %v2184 = vunpack.c.l.b16 %v611
    %v2185 = vunpack.c.h.b16 %v611
    %v2186 = vunpack.c.l.b16 %v612
    %v2187 = vunpack.c.h.b16 %v612
    %v2188 = vunpack.c.l.b16 %v613
    %v2189 = vunpack.c.h.b16 %v613
    %v2190 = vunpack.c.l.b16 %v614
    %v2191 = vunpack.c.h.b16 %v614
    %v2192 = vunpack.c.l.b16 %v615
    %v2193 = vunpack.c.h.b16 %v615
    %v2194 = vunpack.c.l.b16 %v616
    %v2195 = vunpack.c.h.b16 %v616
    %v2196 = vunpack.c.l.b16 %v617
    %v2197 = vunpack.c.h.b16 %v617
    %v2198 = vunpack.c.l.b16 %v618
    %v2199 = vunpack.c.h.b16 %v618
    %v2200 = vunpack.c.l.b16 %v619
    %v2201 = vunpack.c.h.b16 %v619
    %v2202 = vunpack.c.l.b16 %v620
    %v2203 = vunpack.c.h.b16 %v620
    %v2204 = vunpack.c.l.b16 %v621
    %v2205 = vunpack.c.h.b16 %v621
    %v2206 = vunpack.c.l.b16 %v622
    %v2207 = vunpack.c.h.b16 %v622
    %v2208 = vunpack.c.l.b16 %v623
    %v2209 = vunpack.c.h.b16 %v623
    %v2210 = vunpack.c.l.b16 %v624
    %v2211 = vunpack.c.h.b16 %v624
    %v2212 = vunpack.c.l.b16 %v625
    %v2213 = vunpack.c.h.b16 %v625
    %v2214 = vunpack.c.l.b16 %v626
    %v2215 = vunpack.c.h.b16 %v626
    %v2216 = vunpack.c.l.b16 %v627
    %v2217 = vunpack.c.h.b16 %v627
    %v2218 = vunpack.c.l.b16 %v628
    %v2219 = vunpack.c.h.b16 %v628
    %v2220 = vunpack.c.l.b16 %v629
    %v2221 = vunpack.c.h.b16 %v629
    %v2222 = vunpack.c.l.b16 %v630
    %v2223 = vunpack.c.h.b16 %v630
    %v2224 = vunpack.c.l.b16 %v631
    %v2225 = vunpack.c.h.b16 %v631
    %v2226 = vunpack.c.l.b16 %v632
    %v2227 = vunpack.c.h.b16 %v632
    %v2228 = vunpack.c.l.b16 %v633
    %v2229 = vunpack.c.h.b16 %v633
    %v2230 = vunpack.c.l.b16 %v634
    %v2231 = vunpack.c.h.b16 %v634
    %v2232 = vunpack.c.l.b16 %v635
    %v2233 = vunpack.c.h.b16 %v635
    %v2234 = vunpack.c.l.b16 %v636
    %v2235 = vunpack.c.h.b16 %v636
    %v2236 = vunpack.c.l.b16 %v637
    %v2237 = vunpack.c.h.b16 %v637
    %v2238 = vunpack.c.l.b16 %v638
    %v2239 = vunpack.c.h.b16 %v638
    %v2240 = vunpack.c.l.b16 %v639
    %v2241 = vunpack.c.h.b16 %v639
    %v2242 = vunpack.c.l.b16 %v640
    %v2243 = vunpack.c.h.b16 %v640
    %v2244 = vunpack.c.l.b16 %v641
    %v2245 = vunpack.c.h.b16 %v641
    %v2246 = vunpack.c.l.b16 %v642
    %v2247 = vunpack.c.h.b16 %v642
    %v2248 = vunpack.c.l.b16 %v643
    %v2249 = vunpack.c.h.b16 %v643
    %v2250 = vunpack.c.l.b16 %v644
    %v2251 = vunpack.c.h.b16 %v644
    %v2252 = vunpack.c.l.b16 %v645
    %v2253 = vunpack.c.h.b16 %v645
    %v2254 = vunpack.c.l.b16 %v646
    %v2255 = vunpack.c.h.b16 %v646
    %v2256 = vunpack.c.l.b16 %v647
    %v2257 = vunpack.c.h.b16 %v647
    %v2258 = vunpack.c.l.b16 %v648
    %v2259 = vunpack.c.h.b16 %v648
    %v2260 = vunpack.c.l.b16 %v649
    %v2261 = vunpack.c.h.b16 %v649
    %v2262 = vunpack.c.l.b16 %v650
    %v2263 = vunpack.c.h.b16 %v650
    %v2264 = vunpack.c.l.b16 %v651
    %v2265 = vunpack.c.h.b16 %v651
    %v2266 = vunpack.c.l.b16 %v652
    %v2267 = vunpack.c.h.b16 %v652
    %v2268 = vunpack.c.l.b16 %v653
    %v2269 = vunpack.c.h.b16 %v653
    %v2270 = vunpack.c.l.b16 %v654
    %v2271 = vunpack.c.h.b16 %v654
    %v2272 = vunpack.c.l.b16 %v655
    %v2273 = vunpack.c.h.b16 %v655
    %v2274 = vpack.c.b16 %v1258, %v1250
    %v2275 = vpack.c.b16 %v1259, %v1251
    %v2276 = vpack.c.b16 %v1260, %v1252
    %v2277 = vpack.c.b16 %v1261, %v1253
    %v2278 = vpack.c.b16 %v1262, %v1254
    %v2279 = vpack.c.b16 %v1263, %v1255
    %v2280 = vpack.c.b16 %v1264, %v1256
    %v2281 = vpack.c.b16 %v1265, %v1257
    %v2282 = vpack.c.b16 %v1274, %v1266
    %v2283 = vpack.c.b16 %v1275, %v1267
    %v2284 = vpack.c.b16 %v1276, %v1268
    %v2285 = vpack.c.b16 %v1277, %v1269
    %v2286 = vpack.c.b16 %v1278, %v1270
    %v2287 = vpack.c.b16 %v1279, %v1271
    %v2288 = vpack.c.b16 %v1280, %v1272
    %v2289 = vpack.c.b16 %v1281, %v1273
    %v2290 = vpack.c.b16 %v1290, %v1282
    %v2291 = vpack.c.b16 %v1291, %v1283
    %v2292 = vpack.c.b16 %v1292, %v1284
    %v2293 = vpack.c.b16 %v1293, %v1285
    %v2294 = vpack.c.b16 %v1294, %v1286
    %v2295 = vpack.c.b16 %v1295, %v1287
    %v2296 = vpack.c.b16 %v1296, %v1288
    %v2297 = vpack.c.b16 %v1297, %v1289
    %v2298 = vpack.c.b16 %v1306, %v1298
    %v2299 = vpack.c.b16 %v1307, %v1299
    %v2300 = vpack.c.b16 %v1308, %v1300
    %v2301 = vpack.c.b16 %v1309, %v1301
    %v2302 = vpack.c.b16 %v1310, %v1302
    %v2303 = vpack.c.b16 %v1311, %v1303
    %v2304 = vpack.c.b16 %v1312, %v1304
    %v2305 = vpack.c.b16 %v1313, %v1305
    %v2306 = vpack.c.b16 %v1322, %v1314
    %v2307 = vpack.c.b16 %v1323, %v1315
    %v2308 = vpack.c.b16 %v1324, %v1316
    %v2309 = vpack.c.b16 %v1325, %v1317
    %v2310 = vpack.c.b16 %v1326, %v1318
    %v2311 = vpack.c.b16 %v1327, %v1319
    %v2312 = vpack.c.b16 %v1328, %v1320
    %v2313 = vpack.c.b16 %v1329, %v1321
    %v2314 = vpack.c.b16 %v1338, %v1330
    %v2315 = vpack.c.b16 %v1339, %v1331
    %v2316 = vpack.c.b16 %v1340, %v1332
    %v2317 = vpack.c.b16 %v1341, %v1333
    %v2318 = vpack.c.b16 %v1342, %v1334
    %v2319 = vpack.c.b16 %v1343, %v1335
    %v2320 = vpack.c.b16 %v1344, %v1336
    %v2321 = vpack.c.b16 %v1345, %v1337
    %v2322 = vpack.c.b16 %v1354, %v1346
    %v2323 = vpack.c.b16 %v1355, %v1347
    %v2324 = vpack.c.b16 %v1356, %v1348
    %v2325 = vpack.c.b16 %v1357, %v1349
    %v2326 = vpack.c.b16 %v1358, %v1350
    %v2327 = vpack.c.b16 %v1359, %v1351
    %v2328 = vpack.c.b16 %v1360, %v1352
    %v2329 = vpack.c.b16 %v1361, %v1353
    %v2330 = vpack.c.b16 %v1370, %v1362
    %v2331 = vpack.c.b16 %v1371, %v1363
    %v2332 = vpack.c.b16 %v1372, %v1364
    %v2333 = vpack.c.b16 %v1373, %v1365
    %v2334 = vpack.c.b16 %v1374, %v1366
    %v2335 = vpack.c.b16 %v1375, %v1367
    %v2336 = vpack.c.b16 %v1376, %v1368
    %v2337 = vpack.c.b16 %v1377, %v1369
    %v2338 = vpack.c.b16 %v1386, %v1378
    %v2339 = vpack.c.b16 %v1387, %v1379
    %v2340 = vpack.c.b16 %v1388, %v1380
    %v2341 = vpack.c.b16 %v1389, %v1381
    %v2342 = vpack.c.b16 %v1390, %v1382
    %v2343 = vpack.c.b16 %v1391, %v1383
    %v2344 = vpack.c.b16 %v1392, %v1384
    %v2345 = vpack.c.b16 %v1393, %v1385
    %v2346 = vpack.c.b16 %v1402, %v1394
    %v2347 = vpack.c.b16 %v1403, %v1395
    %v2348 = vpack.c.b16 %v1404, %v1396
    %v2349 = vpack.c.b16 %v1405, %v1397
    %v2350 = vpack.c.b16 %v1406, %v1398
    %v2351 = vpack.c.b16 %v1407, %v1399
    %v2352 = vpack.c.b16 %v1408, %v1400
    %v2353 = vpack.c.b16 %v1409, %v1401
    %v2354 = vpack.c.b16 %v1418, %v1410
    %v2355 = vpack.c.b16 %v1419, %v1411
    %v2356 = vpack.c.b16 %v1420, %v1412
    %v2357 = vpack.c.b16 %v1421, %v1413
    %v2358 = vpack.c.b16 %v1422, %v1414
    %v2359 = vpack.c.b16 %v1423, %v1415
    %v2360 = vpack.c.b16 %v1424, %v1416
    %v2361 = vpack.c.b16 %v1425, %v1417
    %v2362 = vpack.c.b16 %v1434, %v1426
    %v2363 = vpack.c.b16 %v1435, %v1427
    %v2364 = vpack.c.b16 %v1436, %v1428
    %v2365 = vpack.c.b16 %v1437, %v1429
    %v2366 = vpack.c.b16 %v1438, %v1430
    %v2367 = vpack.c.b16 %v1439, %v1431
    %v2368 = vpack.c.b16 %v1440, %v1432
    %v2369 = vpack.c.b16 %v1441, %v1433
    %v2370 = vpack.c.b16 %v1450, %v1442
    %v2371 = vpack.c.b16 %v1451, %v1443
    %v2372 = vpack.c.b16 %v1452, %v1444
    %v2373 = vpack.c.b16 %v1453, %v1445
    %v2374 = vpack.c.b16 %v1454, %v1446
    %v2375 = vpack.c.b16 %v1455, %v1447
    %v2376 = vpack.c.b16 %v1456, %v1448
    %v2377 = vpack.c.b16 %v1457, %v1449
    %v2378 = vpack.c.b16 %v1466, %v1458
    %v2379 = vpack.c.b16 %v1467, %v1459
    %v2380 = vpack.c.b16 %v1468, %v1460
    %v2381 = vpack.c.b16 %v1469, %v1461
    %v2382 = vpack.c.b16 %v1470, %v1462
    %v2383 = vpack.c.b16 %v1471, %v1463
    %v2384 = vpack.c.b16 %v1472, %v1464
    %v2385 = vpack.c.b16 %v1473, %v1465
    %v2386 = vpack.c.b16 %v1482, %v1474
    %v2387 = vpack.c.b16 %v1483, %v1475
    %v2388 = vpack.c.b16 %v1484, %v1476
    %v2389 = vpack.c.b16 %v1485, %v1477
    %v2390 = vpack.c.b16 %v1486, %v1478
    %v2391 = vpack.c.b16 %v1487, %v1479
    %v2392 = vpack.c.b16 %v1488, %v1480
    %v2393 = vpack.c.b16 %v1489, %v1481
    %v2394 = vpack.c.b16 %v1498, %v1490
    %v2395 = vpack.c.b16 %v1499, %v1491
    %v2396 = vpack.c.b16 %v1500, %v1492
    %v2397 = vpack.c.b16 %v1501, %v1493
    %v2398 = vpack.c.b16 %v1502, %v1494
    %v2399 = vpack.c.b16 %v1503, %v1495
    %v2400 = vpack.c.b16 %v1504, %v1496
    %v2401 = vpack.c.b16 %v1505, %v1497
    %v2402 = vpack.c.b16 %v1514, %v1506
    %v2403 = vpack.c.b16 %v1515, %v1507
    %v2404 = vpack.c.b16 %v1516, %v1508
    %v2405 = vpack.c.b16 %v1517, %v1509
    %v2406 = vpack.c.b16 %v1518, %v1510
    %v2407 = vpack.c.b16 %v1519, %v1511
    %v2408 = vpack.c.b16 %v1520, %v1512
    %v2409 = vpack.c.b16 %v1521, %v1513
    %v2410 = vpack.c.b16 %v1530, %v1522
    %v2411 = vpack.c.b16 %v1531, %v1523
    %v2412 = vpack.c.b16 %v1532, %v1524
    %v2413 = vpack.c.b16 %v1533, %v1525
    %v2414 = vpack.c.b16 %v1534, %v1526
    %v2415 = vpack.c.b16 %v1535, %v1527
    %v2416 = vpack.c.b16 %v1536, %v1528
    %v2417 = vpack.c.b16 %v1537, %v1529
    %v2418 = vpack.c.b16 %v1546, %v1538
    %v2419 = vpack.c.b16 %v1547, %v1539
    %v2420 = vpack.c.b16 %v1548, %v1540
    %v2421 = vpack.c.b16 %v1549, %v1541
    %v2422 = vpack.c.b16 %v1550, %v1542
    %v2423 = vpack.c.b16 %v1551, %v1543
    %v2424 = vpack.c.b16 %v1552, %v1544
    %v2425 = vpack.c.b16 %v1553, %v1545
    %v2426 = vpack.c.b16 %v1562, %v1554
    %v2427 = vpack.c.b16 %v1563, %v1555
    %v2428 = vpack.c.b16 %v1564, %v1556
    %v2429 = vpack.c.b16 %v1565, %v1557
    %v2430 = vpack.c.b16 %v1566, %v1558
    %v2431 = vpack.c.b16 %v1567, %v1559
    %v2432 = vpack.c.b16 %v1568, %v1560
    %v2433 = vpack.c.b16 %v1569, %v1561
    %v2434 = vpack.c.b16 %v1578, %v1570
    %v2435 = vpack.c.b16 %v1579, %v1571
    %v2436 = vpack.c.b16 %v1580, %v1572
    %v2437 = vpack.c.b16 %v1581, %v1573
    %v2438 = vpack.c.b16 %v1582, %v1574
    %v2439 = vpack.c.b16 %v1583, %v1575
    %v2440 = vpack.c.b16 %v1584, %v1576
    %v2441 = vpack.c.b16 %v1585, %v1577
    %v2442 = vpack.c.b16 %v1594, %v1586
    %v2443 = vpack.c.b16 %v1595, %v1587
    %v2444 = vpack.c.b16 %v1596, %v1588
    %v2445 = vpack.c.b16 %v1597, %v1589
    %v2446 = vpack.c.b16 %v1598, %v1590
    %v2447 = vpack.c.b16 %v1599, %v1591
    %v2448 = vpack.c.b16 %v1600, %v1592
    %v2449 = vpack.c.b16 %v1601, %v1593
    %v2450 = vpack.c.b16 %v1610, %v1602
    %v2451 = vpack.c.b16 %v1611, %v1603
    %v2452 = vpack.c.b16 %v1612, %v1604
    %v2453 = vpack.c.b16 %v1613, %v1605
    %v2454 = vpack.c.b16 %v1614, %v1606
    %v2455 = vpack.c.b16 %v1615, %v1607
    %v2456 = vpack.c.b16 %v1616, %v1608
    %v2457 = vpack.c.b16 %v1617, %v1609
    %v2458 = vpack.c.b16 %v1626, %v1618
    %v2459 = vpack.c.b16 %v1627, %v1619
    %v2460 = vpack.c.b16 %v1628, %v1620
    %v2461 = vpack.c.b16 %v1629, %v1621
    %v2462 = vpack.c.b16 %v1630, %v1622
    %v2463 = vpack.c.b16 %v1631, %v1623
    %v2464 = vpack.c.b16 %v1632, %v1624
    %v2465 = vpack.c.b16 %v1633, %v1625
    %v2466 = vpack.c.b16 %v1642, %v1634
    %v2467 = vpack.c.b16 %v1643, %v1635
    %v2468 = vpack.c.b16 %v1644, %v1636
    %v2469 = vpack.c.b16 %v1645, %v1637
    %v2470 = vpack.c.b16 %v1646, %v1638
    %v2471 = vpack.c.b16 %v1647, %v1639
    %v2472 = vpack.c.b16 %v1648, %v1640
    %v2473 = vpack.c.b16 %v1649, %v1641
    %v2474 = vpack.c.b16 %v1658, %v1650
    %v2475 = vpack.c.b16 %v1659, %v1651
    %v2476 = vpack.c.b16 %v1660, %v1652
    %v2477 = vpack.c.b16 %v1661, %v1653
    %v2478 = vpack.c.b16 %v1662, %v1654
    %v2479 = vpack.c.b16 %v1663, %v1655
    %v2480 = vpack.c.b16 %v1664, %v1656
    %v2481 = vpack.c.b16 %v1665, %v1657
    %v2482 = vpack.c.b16 %v1674, %v1666
    %v2483 = vpack.c.b16 %v1675, %v1667
    %v2484 = vpack.c.b16 %v1676, %v1668
    %v2485 = vpack.c.b16 %v1677, %v1669
    %v2486 = vpack.c.b16 %v1678, %v1670
    %v2487 = vpack.c.b16 %v1679, %v1671
    %v2488 = vpack.c.b16 %v1680, %v1672
    %v2489 = vpack.c.b16 %v1681, %v1673
    %v2490 = vpack.c.b16 %v1690, %v1682
    %v2491 = vpack.c.b16 %v1691, %v1683
    %v2492 = vpack.c.b16 %v1692, %v1684
    %v2493 = vpack.c.b16 %v1693, %v1685
    %v2494 = vpack.c.b16 %v1694, %v1686
    %v2495 = vpack.c.b16 %v1695, %v1687
    %v2496 = vpack.c.b16 %v1696, %v1688
    %v2497 = vpack.c.b16 %v1697, %v1689
    %v2498 = vpack.c.b16 %v1706, %v1698
    %v2499 = vpack.c.b16 %v1707, %v1699
    %v2500 = vpack.c.b16 %v1708, %v1700
    %v2501 = vpack.c.b16 %v1709, %v1701
    %v2502 = vpack.c.b16 %v1710, %v1702
    %v2503 = vpack.c.b16 %v1711, %v1703
    %v2504 = vpack.c.b16 %v1712, %v1704
    %v2505 = vpack.c.b16 %v1713, %v1705
    %v2506 = vpack.c.b16 %v1722, %v1714
    %v2507 = vpack.c.b16 %v1723, %v1715
    %v2508 = vpack.c.b16 %v1724, %v1716
    %v2509 = vpack.c.b16 %v1725, %v1717
    %v2510 = vpack.c.b16 %v1726, %v1718
    %v2511 = vpack.c.b16 %v1727, %v1719
    %v2512 = vpack.c.b16 %v1728, %v1720
    %v2513 = vpack.c.b16 %v1729, %v1721
    %v2514 = vpack.c.b16 %v1738, %v1730
    %v2515 = vpack.c.b16 %v1739, %v1731
    %v2516 = vpack.c.b16 %v1740, %v1732
    %v2517 = vpack.c.b16 %v1741, %v1733
    %v2518 = vpack.c.b16 %v1742, %v1734
    %v2519 = vpack.c.b16 %v1743, %v1735
    %v2520 = vpack.c.b16 %v1744, %v1736
    %v2521 = vpack.c.b16 %v1745, %v1737
    %v2522 = vpack.c.b16 %v1754, %v1746
    %v2523 = vpack.c.b16 %v1755, %v1747
    %v2524 = vpack.c.b16 %v1756, %v1748
    %v2525 = vpack.c.b16 %v1757, %v1749
    %v2526 = vpack.c.b16 %v1758, %v1750
    %v2527 = vpack.c.b16 %v1759, %v1751
    %v2528 = vpack.c.b16 %v1760, %v1752
    %v2529 = vpack.c.b16 %v1761, %v1753
    %v2530 = vpack.c.b16 %v1770, %v1762
    %v2531 = vpack.c.b16 %v1771, %v1763
    %v2532 = vpack.c.b16 %v1772, %v1764
    %v2533 = vpack.c.b16 %v1773, %v1765
    %v2534 = vpack.c.b16 %v1774, %v1766
    %v2535 = vpack.c.b16 %v1775, %v1767
    %v2536 = vpack.c.b16 %v1776, %v1768
    %v2537 = vpack.c.b16 %v1777, %v1769
    %v2538 = vpack.c.b16 %v1786, %v1778
    %v2539 = vpack.c.b16 %v1787, %v1779
    %v2540 = vpack.c.b16 %v1788, %v1780
    %v2541 = vpack.c.b16 %v1789, %v1781
    %v2542 = vpack.c.b16 %v1790, %v1782
    %v2543 = vpack.c.b16 %v1791, %v1783
    %v2544 = vpack.c.b16 %v1792, %v1784
    %v2545 = vpack.c.b16 %v1793, %v1785
    %v2546 = vpack.c.b16 %v1802, %v1794
    %v2547 = vpack.c.b16 %v1803, %v1795
    %v2548 = vpack.c.b16 %v1804, %v1796
    %v2549 = vpack.c.b16 %v1805, %v1797
    %v2550 = vpack.c.b16 %v1806, %v1798
    %v2551 = vpack.c.b16 %v1807, %v1799
    %v2552 = vpack.c.b16 %v1808, %v1800
    %v2553 = vpack.c.b16 %v1809, %v1801
    %v2554 = vpack.c.b16 %v1818, %v1810
    %v2555 = vpack.c.b16 %v1819, %v1811
    %v2556 = vpack.c.b16 %v1820, %v1812
    %v2557 = vpack.c.b16 %v1821, %v1813
    %v2558 = vpack.c.b16 %v1822, %v1814
    %v2559 = vpack.c.b16 %v1823, %v1815
    %v2560 = vpack.c.b16 %v1824, %v1816
    %v2561 = vpack.c.b16 %v1825, %v1817
    %v2562 = vpack.c.b16 %v1834, %v1826
    %v2563 = vpack.c.b16 %v1835, %v1827
    %v2564 = vpack.c.b16 %v1836, %v1828
    %v2565 = vpack.c.b16 %v1837, %v1829
    %v2566 = vpack.c.b16 %v1838, %v1830
    %v2567 = vpack.c.b16 %v1839, %v1831
    %v2568 = vpack.c.b16 %v1840, %v1832
    %v2569 = vpack.c.b16 %v1841, %v1833
    %v2570 = vpack.c.b16 %v1850, %v1842
    %v2571 = vpack.c.b16 %v1851, %v1843
    %v2572 = vpack.c.b16 %v1852, %v1844
    %v2573 = vpack.c.b16 %v1853, %v1845
    %v2574 = vpack.c.b16 %v1854, %v1846
    %v2575 = vpack.c.b16 %v1855, %v1847
    %v2576 = vpack.c.b16 %v1856, %v1848
    %v2577 = vpack.c.b16 %v1857, %v1849
    %v2578 = vpack.c.b16 %v1866, %v1858
    %v2579 = vpack.c.b16 %v1867, %v1859
    %v2580 = vpack.c.b16 %v1868, %v1860
    %v2581 = vpack.c.b16 %v1869, %v1861
    %v2582 = vpack.c.b16 %v1870, %v1862
    %v2583 = vpack.c.b16 %v1871, %v1863
    %v2584 = vpack.c.b16 %v1872, %v1864
    %v2585 = vpack.c.b16 %v1873, %v1865
    %v2586 = vpack.c.b16 %v1882, %v1874
    %v2587 = vpack.c.b16 %v1883, %v1875
    %v2588 = vpack.c.b16 %v1884, %v1876
    %v2589 = vpack.c.b16 %v1885, %v1877
    %v2590 = vpack.c.b16 %v1886, %v1878
    %v2591 = vpack.c.b16 %v1887, %v1879
    %v2592 = vpack.c.b16 %v1888, %v1880
    %v2593 = vpack.c.b16 %v1889, %v1881
    %v2594 = vpack.c.b16 %v1898, %v1890
    %v2595 = vpack.c.b16 %v1899, %v1891
    %v2596 = vpack.c.b16 %v1900, %v1892
    %v2597 = vpack.c.b16 %v1901, %v1893
    %v2598 = vpack.c.b16 %v1902, %v1894
    %v2599 = vpack.c.b16 %v1903, %v1895
    %v2600 = vpack.c.b16 %v1904, %v1896
    %v2601 = vpack.c.b16 %v1905, %v1897
    %v2602 = vpack.c.b16 %v1914, %v1906
    %v2603 = vpack.c.b16 %v1915, %v1907
    %v2604 = vpack.c.b16 %v1916, %v1908
    %v2605 = vpack.c.b16 %v1917, %v1909
    %v2606 = vpack.c.b16 %v1918, %v1910
    %v2607 = vpack.c.b16 %v1919, %v1911
    %v2608 = vpack.c.b16 %v1920, %v1912
    %v2609 = vpack.c.b16 %v1921, %v1913
    %v2610 = vpack.c.b16 %v1930, %v1922
    %v2611 = vpack.c.b16 %v1931, %v1923
    %v2612 = vpack.c.b16 %v1932, %v1924
    %v2613 = vpack.c.b16 %v1933, %v1925
    %v2614 = vpack.c.b16 %v1934, %v1926
    %v2615 = vpack.c.b16 %v1935, %v1927
    %v2616 = vpack.c.b16 %v1936, %v1928
    %v2617 = vpack.c.b16 %v1937, %v1929
    %v2618 = vpack.c.b16 %v1946, %v1938
    %v2619 = vpack.c.b16 %v1947, %v1939
    %v2620 = vpack.c.b16 %v1948, %v1940
    %v2621 = vpack.c.b16 %v1949, %v1941
    %v2622 = vpack.c.b16 %v1950, %v1942
    %v2623 = vpack.c.b16 %v1951, %v1943
    %v2624 = vpack.c.b16 %v1952, %v1944
    %v2625 = vpack.c.b16 %v1953, %v1945
    %v2626 = vpack.c.b16 %v1962, %v1954
    %v2627 = vpack.c.b16 %v1963, %v1955
    %v2628 = vpack.c.b16 %v1964, %v1956
    %v2629 = vpack.c.b16 %v1965, %v1957
    %v2630 = vpack.c.b16 %v1966, %v1958
    %v2631 = vpack.c.b16 %v1967, %v1959
    %v2632 = vpack.c.b16 %v1968, %v1960
    %v2633 = vpack.c.b16 %v1969, %v1961
    %v2634 = vpack.c.b16 %v1978, %v1970
    %v2635 = vpack.c.b16 %v1979, %v1971
    %v2636 = vpack.c.b16 %v1980, %v1972
    %v2637 = vpack.c.b16 %v1981, %v1973
    %v2638 = vpack.c.b16 %v1982, %v1974
    %v2639 = vpack.c.b16 %v1983, %v1975
    %v2640 = vpack.c.b16 %v1984, %v1976
    %v2641 = vpack.c.b16 %v1985, %v1977
    %v2642 = vpack.c.b16 %v1994, %v1986
    %v2643 = vpack.c.b16 %v1995, %v1987
    %v2644 = vpack.c.b16 %v1996, %v1988
    %v2645 = vpack.c.b16 %v1997, %v1989
    %v2646 = vpack.c.b16 %v1998, %v1990
    %v2647 = vpack.c.b16 %v1999, %v1991
    %v2648 = vpack.c.b16 %v2000, %v1992
    %v2649 = vpack.c.b16 %v2001, %v1993
    %v2650 = vpack.c.b16 %v2010, %v2002
    %v2651 = vpack.c.b16 %v2011, %v2003
    %v2652 = vpack.c.b16 %v2012, %v2004
    %v2653 = vpack.c.b16 %v2013, %v2005
    %v2654 = vpack.c.b16 %v2014, %v2006
    %v2655 = vpack.c.b16 %v2015, %v2007
    %v2656 = vpack.c.b16 %v2016, %v2008
    %v2657 = vpack.c.b16 %v2017, %v2009
    %v2658 = vpack.c.b16 %v2026, %v2018
    %v2659 = vpack.c.b16 %v2027, %v2019
    %v2660 = vpack.c.b16 %v2028, %v2020
    %v2661 = vpack.c.b16 %v2029, %v2021
    %v2662 = vpack.c.b16 %v2030, %v2022
    %v2663 = vpack.c.b16 %v2031, %v2023
    %v2664 = vpack.c.b16 %v2032, %v2024
    %v2665 = vpack.c.b16 %v2033, %v2025
    %v2666 = vpack.c.b16 %v2042, %v2034
    %v2667 = vpack.c.b16 %v2043, %v2035
    %v2668 = vpack.c.b16 %v2044, %v2036
    %v2669 = vpack.c.b16 %v2045, %v2037
    %v2670 = vpack.c.b16 %v2046, %v2038
    %v2671 = vpack.c.b16 %v2047, %v2039
    %v2672 = vpack.c.b16 %v2048, %v2040
    %v2673 = vpack.c.b16 %v2049, %v2041
    %v2674 = vpack.c.b16 %v2058, %v2050
    %v2675 = vpack.c.b16 %v2059, %v2051
    %v2676 = vpack.c.b16 %v2060, %v2052
    %v2677 = vpack.c.b16 %v2061, %v2053
    %v2678 = vpack.c.b16 %v2062, %v2054
    %v2679 = vpack.c.b16 %v2063, %v2055
    %v2680 = vpack.c.b16 %v2064, %v2056
    %v2681 = vpack.c.b16 %v2065, %v2057
    %v2682 = vpack.c.b16 %v2074, %v2066
    %v2683 = vpack.c.b16 %v2075, %v2067
    %v2684 = vpack.c.b16 %v2076, %v2068
    %v2685 = vpack.c.b16 %v2077, %v2069
    %v2686 = vpack.c.b16 %v2078, %v2070
    %v2687 = vpack.c.b16 %v2079, %v2071
    %v2688 = vpack.c.b16 %v2080, %v2072
    %v2689 = vpack.c.b16 %v2081, %v2073
    %v2690 = vpack.c.b16 %v2090, %v2082
    %v2691 = vpack.c.b16 %v2091, %v2083
    %v2692 = vpack.c.b16 %v2092, %v2084
    %v2693 = vpack.c.b16 %v2093, %v2085
    %v2694 = vpack.c.b16 %v2094, %v2086
    %v2695 = vpack.c.b16 %v2095, %v2087
    %v2696 = vpack.c.b16 %v2096, %v2088
    %v2697 = vpack.c.b16 %v2097, %v2089
    %v2698 = vpack.c.b16 %v2106, %v2098
    %v2699 = vpack.c.b16 %v2107, %v2099
    %v2700 = vpack.c.b16 %v2108, %v2100
    %v2701 = vpack.c.b16 %v2109, %v2101
    %v2702 = vpack.c.b16 %v2110, %v2102
    %v2703 = vpack.c.b16 %v2111, %v2103
    %v2704 = vpack.c.b16 %v2112, %v2104
    %v2705 = vpack.c.b16 %v2113, %v2105
    %v2706 = vpack.c.b16 %v2122, %v2114
    %v2707 = vpack.c.b16 %v2123, %v2115
    %v2708 = vpack.c.b16 %v2124, %v2116
    %v2709 = vpack.c.b16 %v2125, %v2117
    %v2710 = vpack.c.b16 %v2126, %v2118
    %v2711 = vpack.c.b16 %v2127, %v2119
    %v2712 = vpack.c.b16 %v2128, %v2120
    %v2713 = vpack.c.b16 %v2129, %v2121
    %v2714 = vpack.c.b16 %v2138, %v2130
    %v2715 = vpack.c.b16 %v2139, %v2131
    %v2716 = vpack.c.b16 %v2140, %v2132
    %v2717 = vpack.c.b16 %v2141, %v2133
    %v2718 = vpack.c.b16 %v2142, %v2134
    %v2719 = vpack.c.b16 %v2143, %v2135
    %v2720 = vpack.c.b16 %v2144, %v2136
    %v2721 = vpack.c.b16 %v2145, %v2137
    %v2722 = vpack.c.b16 %v2154, %v2146
    %v2723 = vpack.c.b16 %v2155, %v2147
    %v2724 = vpack.c.b16 %v2156, %v2148
    %v2725 = vpack.c.b16 %v2157, %v2149
    %v2726 = vpack.c.b16 %v2158, %v2150
    %v2727 = vpack.c.b16 %v2159, %v2151
    %v2728 = vpack.c.b16 %v2160, %v2152
    %v2729 = vpack.c.b16 %v2161, %v2153
    %v2730 = vpack.c.b16 %v2170, %v2162
    %v2731 = vpack.c.b16 %v2171, %v2163
    %v2732 = vpack.c.b16 %v2172, %v2164
    %v2733 = vpack.c.b16 %v2173, %v2165
    %v2734 = vpack.c.b16 %v2174, %v2166
    %v2735 = vpack.c.b16 %v2175, %v2167
    %v2736 = vpack.c.b16 %v2176, %v2168
    %v2737 = vpack.c.b16 %v2177, %v2169
    %v2738 = vpack.c.b16 %v2186, %v2178
    %v2739 = vpack.c.b16 %v2187, %v2179
    %v2740 = vpack.c.b16 %v2188, %v2180
    %v2741 = vpack.c.b16 %v2189, %v2181
    %v2742 = vpack.c.b16 %v2190, %v2182
    %v2743 = vpack.c.b16 %v2191, %v2183
    %v2744 = vpack.c.b16 %v2192, %v2184
    %v2745 = vpack.c.b16 %v2193, %v2185
    %v2746 = vpack.c.b16 %v2202, %v2194
    %v2747 = vpack.c.b16 %v2203, %v2195
    %v2748 = vpack.c.b16 %v2204, %v2196
    %v2749 = vpack.c.b16 %v2205, %v2197
    %v2750 = vpack.c.b16 %v2206, %v2198
    %v2751 = vpack.c.b16 %v2207, %v2199
    %v2752 = vpack.c.b16 %v2208, %v2200
    %v2753 = vpack.c.b16 %v2209, %v2201
    %v2754 = vpack.c.b16 %v2218, %v2210
    %v2755 = vpack.c.b16 %v2219, %v2211
    %v2756 = vpack.c.b16 %v2220, %v2212
    %v2757 = vpack.c.b16 %v2221, %v2213
    %v2758 = vpack.c.b16 %v2222, %v2214
    %v2759 = vpack.c.b16 %v2223, %v2215
    %v2760 = vpack.c.b16 %v2224, %v2216
    %v2761 = vpack.c.b16 %v2225, %v2217
    %v2762 = vpack.c.b16 %v2234, %v2226
    %v2763 = vpack.c.b16 %v2235, %v2227
    %v2764 = vpack.c.b16 %v2236, %v2228
    %v2765 = vpack.c.b16 %v2237, %v2229
    %v2766 = vpack.c.b16 %v2238, %v2230
    %v2767 = vpack.c.b16 %v2239, %v2231
    %v2768 = vpack.c.b16 %v2240, %v2232
    %v2769 = vpack.c.b16 %v2241, %v2233
    %v2770 = vpack.c.b16 %v2250, %v2242
    %v2771 = vpack.c.b16 %v2251, %v2243
    %v2772 = vpack.c.b16 %v2252, %v2244
    %v2773 = vpack.c.b16 %v2253, %v2245
    %v2774 = vpack.c.b16 %v2254, %v2246
    %v2775 = vpack.c.b16 %v2255, %v2247
    %v2776 = vpack.c.b16 %v2256, %v2248
    %v2777 = vpack.c.b16 %v2257, %v2249
    %v2778 = vpack.c.b16 %v2266, %v2258
    %v2779 = vpack.c.b16 %v2267, %v2259
    %v2780 = vpack.c.b16 %v2268, %v2260
    %v2781 = vpack.c.b16 %v2269, %v2261
    %v2782 = vpack.c.b16 %v2270, %v2262
    %v2783 = vpack.c.b16 %v2271, %v2263
    %v2784 = vpack.c.b16 %v2272, %v2264
    %v2785 = vpack.c.b16 %v2273, %v2265
    %3298 = vmatprep.subr.bf16.mxu0 %v2275
    %3299 = vmatpush1.bf16.msra.mxu0 %v2274
    %3300 = vmatprep.subr.bf16.mxu0 %v2283
    %3301 = vmatpush1.bf16.msra.mxu0 %v2282
    %3302 = vmatprep.subr.bf16.mxu0 %v2291
    %3303 = vmatpush1.bf16.msra.mxu0 %v2290
    %3304 = vmatprep.subr.bf16.mxu0 %v2299
    %3305 = vmatpush1.bf16.msra.mxu0 %v2298
    %3306 = vmatprep.subr.bf16.mxu0 %v2307
    %3307 = vmatpush1.bf16.msra.mxu0 %v2306
    %3308 = vmatprep.subr.bf16.mxu0 %v2315
    %3309 = vmatpush1.bf16.msra.mxu0 %v2314
    %3310 = vmatprep.subr.bf16.mxu0 %v2323
    %3311 = vmatpush1.bf16.msra.mxu0 %v2322
    %3312 = vmatprep.subr.bf16.mxu0 %v2331
    %3313 = vmatpush1.bf16.msra.mxu0 %v2330
    %3314 = vmatprep.subr.bf16.mxu0 %v2339
    %3315 = vmatpush1.bf16.msra.mxu0 %v2338
    %3316 = vmatprep.subr.bf16.mxu0 %v2347
    %3317 = vmatpush1.bf16.msra.mxu0 %v2346
    %3318 = vmatprep.subr.bf16.mxu0 %v2355
    %3319 = vmatpush1.bf16.msra.mxu0 %v2354
    %3320 = vmatprep.subr.bf16.mxu0 %v2363
    %3321 = vmatpush1.bf16.msra.mxu0 %v2362
    %3322 = vmatprep.subr.bf16.mxu0 %v2371
    %3323 = vmatpush1.bf16.msra.mxu0 %v2370
    %3324 = vmatprep.subr.bf16.mxu0 %v2379
    %3325 = vmatpush1.bf16.msra.mxu0 %v2378
    %3326 = vmatprep.subr.bf16.mxu0 %v2387
    %3327 = vmatpush1.bf16.msra.mxu0 %v2386
    %3328 = vmatprep.subr.bf16.mxu0 %v2395
    %3329 = vmatpush1.bf16.msra.mxu0 %v2394
    %3330 = vmatprep.mubr.bf16.mxu0 %v723
    %3331 = vmatmul.mubr.bf16.gmra.mrb[0].mxu0 %v722
    %v3332 = vpop.f32.mrb[0].mxu0
    %v3333 = vadd.f32 %v661, %v3332
    %v3334 = vpop.f32.mrb[0].mxu0
    %v3335 = vadd.f32 %v665, %v3334
    %v3336 = vpop.f32.mrb[0].mxu0
    %v3337 = vadd.f32 %v661, %v3336
    %v3338 = vpop.f32.mrb[0].mxu0
    %v3339 = vadd.f32 %v665, %v3338
    %3340 = vdwg.mxu0
    %3341 = vmatprep.subr.bf16.mxu0 %v2403
    %3342 = vmatpush1.bf16.msra.mxu0 %v2402
    %3343 = vmatprep.subr.bf16.mxu0 %v2411
    %3344 = vmatpush1.bf16.msra.mxu0 %v2410
    %3345 = vmatprep.subr.bf16.mxu0 %v2419
    %3346 = vmatpush1.bf16.msra.mxu0 %v2418
    %3347 = vmatprep.subr.bf16.mxu0 %v2427
    %3348 = vmatpush1.bf16.msra.mxu0 %v2426
    %3349 = vmatprep.subr.bf16.mxu0 %v2435
    %3350 = vmatpush1.bf16.msra.mxu0 %v2434
    %3351 = vmatprep.subr.bf16.mxu0 %v2443
    %3352 = vmatpush1.bf16.msra.mxu0 %v2442
    %3353 = vmatprep.subr.bf16.mxu0 %v2451
    %3354 = vmatpush1.bf16.msra.mxu0 %v2450
    %3355 = vmatprep.subr.bf16.mxu0 %v2459
    %3356 = vmatpush1.bf16.msra.mxu0 %v2458
    %3357 = vmatprep.subr.bf16.mxu0 %v2467
    %3358 = vmatpush1.bf16.msra.mxu0 %v2466
    %3359 = vmatprep.subr.bf16.mxu0 %v2475
    %3360 = vmatpush1.bf16.msra.mxu0 %v2474
    %3361 = vmatprep.subr.bf16.mxu0 %v2483
    %3362 = vmatpush1.bf16.msra.mxu0 %v2482
    %3363 = vmatprep.subr.bf16.mxu0 %v2491
    %3364 = vmatpush1.bf16.msra.mxu0 %v2490
    %3365 = vmatprep.subr.bf16.mxu0 %v2499
    %3366 = vmatpush1.bf16.msra.mxu0 %v2498
    %3367 = vmatprep.subr.bf16.mxu0 %v2507
    %3368 = vmatpush1.bf16.msra.mxu0 %v2506
    %3369 = vmatprep.subr.bf16.mxu0 %v2515
    %3370 = vmatpush1.bf16.msra.mxu0 %v2514
    %3371 = vmatprep.subr.bf16.mxu0 %v2523
    %3372 = vmatpush1.bf16.msra.mxu0 %v2522
    %3373 = vmatprep.mubr.bf16.mxu0 %v725
    %3374 = vmatmul.mubr.bf16.gmra.mrb[0].mxu0 %v724
    %v3375 = vpop.f32.mrb[0].mxu0
    %v3376 = vadd.f32 %v3333, %v3375
    %v3377 = vpop.f32.mrb[0].mxu0
    %v3378 = vadd.f32 %v3335, %v3377
    %v3379 = vpop.f32.mrb[0].mxu0
    %v3380 = vadd.f32 %v3337, %v3379
    %v3381 = vpop.f32.mrb[0].mxu0
    %v3382 = vadd.f32 %v3339, %v3381
    %3383 = vdwg.mxu0
    %3384 = vmatprep.subr.bf16.mxu0 %v2531
    %3385 = vmatpush1.bf16.msra.mxu0 %v2530
    %3386 = vmatprep.subr.bf16.mxu0 %v2539
    %3387 = vmatpush1.bf16.msra.mxu0 %v2538
    %3388 = vmatprep.subr.bf16.mxu0 %v2547
    %3389 = vmatpush1.bf16.msra.mxu0 %v2546
    %3390 = vmatprep.subr.bf16.mxu0 %v2555
    %3391 = vmatpush1.bf16.msra.mxu0 %v2554
    %3392 = vmatprep.subr.bf16.mxu0 %v2563
    %3393 = vmatpush1.bf16.msra.mxu0 %v2562
    %3394 = vmatprep.subr.bf16.mxu0 %v2571
    %3395 = vmatpush1.bf16.msra.mxu0 %v2570
    %3396 = vmatprep.subr.bf16.mxu0 %v2579
    %3397 = vmatpush1.bf16.msra.mxu0 %v2578
    %3398 = vmatprep.subr.bf16.mxu0 %v2587
    %3399 = vmatpush1.bf16.msra.mxu0 %v2586
    %3400 = vmatprep.subr.bf16.mxu0 %v2595
    %3401 = vmatpush1.bf16.msra.mxu0 %v2594
    %3402 = vmatprep.subr.bf16.mxu0 %v2603
    %3403 = vmatpush1.bf16.msra.mxu0 %v2602
    %3404 = vmatprep.subr.bf16.mxu0 %v2611
    %3405 = vmatpush1.bf16.msra.mxu0 %v2610
    %3406 = vmatprep.subr.bf16.mxu0 %v2619
    %3407 = vmatpush1.bf16.msra.mxu0 %v2618
    %3408 = vmatprep.subr.bf16.mxu0 %v2627
    %3409 = vmatpush1.bf16.msra.mxu0 %v2626
    %3410 = vmatprep.subr.bf16.mxu0 %v2635
    %3411 = vmatpush1.bf16.msra.mxu0 %v2634
    %3412 = vmatprep.subr.bf16.mxu0 %v2643
    %3413 = vmatpush1.bf16.msra.mxu0 %v2642
    %3414 = vmatprep.subr.bf16.mxu0 %v2651
    %3415 = vmatpush1.bf16.msra.mxu0 %v2650
    %3416 = vmatprep.mubr.bf16.mxu0 %v727
    %3417 = vmatmul.mubr.bf16.gmra.mrb[0].mxu0 %v726
    %v3418 = vpop.f32.mrb[0].mxu0
    %v3419 = vadd.f32 %v3376, %v3418
    %v3420 = vpop.f32.mrb[0].mxu0
    %v3421 = vadd.f32 %v3378, %v3420
    %v3422 = vpop.f32.mrb[0].mxu0
    %v3423 = vadd.f32 %v3380, %v3422
    %v3424 = vpop.f32.mrb[0].mxu0
    %v3425 = vadd.f32 %v3382, %v3424
    %3426 = vdwg.mxu0
    %3427 = vmatprep.subr.bf16.mxu0 %v2659
    %3428 = vmatpush1.bf16.msra.mxu0 %v2658
    %3429 = vmatprep.subr.bf16.mxu0 %v2667
    %3430 = vmatpush1.bf16.msra.mxu0 %v2666
    %3431 = vmatprep.subr.bf16.mxu0 %v2675
    %3432 = vmatpush1.bf16.msra.mxu0 %v2674
    %3433 = vmatprep.subr.bf16.mxu0 %v2683
    %3434 = vmatpush1.bf16.msra.mxu0 %v2682
    %3435 = vmatprep.subr.bf16.mxu0 %v2691
    %3436 = vmatpush1.bf16.msra.mxu0 %v2690
    %3437 = vmatprep.subr.bf16.mxu0 %v2699
    %3438 = vmatpush1.bf16.msra.mxu0 %v2698
    %3439 = vmatprep.subr.bf16.mxu0 %v2707
    %3440 = vmatpush1.bf16.msra.mxu0 %v2706
    %3441 = vmatprep.subr.bf16.mxu0 %v2715
    %3442 = vmatpush1.bf16.msra.mxu0 %v2714
    %3443 = vmatprep.subr.bf16.mxu0 %v2723
    %3444 = vmatpush1.bf16.msra.mxu0 %v2722
    %3445 = vmatprep.subr.bf16.mxu0 %v2731
    %3446 = vmatpush1.bf16.msra.mxu0 %v2730
    %3447 = vmatprep.subr.bf16.mxu0 %v2739
    %3448 = vmatpush1.bf16.msra.mxu0 %v2738
    %3449 = vmatprep.subr.bf16.mxu0 %v2747
    %3450 = vmatpush1.bf16.msra.mxu0 %v2746
    %3451 = vmatprep.subr.bf16.mxu0 %v2755
    %3452 = vmatpush1.bf16.msra.mxu0 %v2754
    %3453 = vmatprep.subr.bf16.mxu0 %v2763
    %3454 = vmatpush1.bf16.msra.mxu0 %v2762
    %3455 = vmatprep.subr.bf16.mxu0 %v2771
    %3456 = vmatpush1.bf16.msra.mxu0 %v2770
    %3457 = vmatprep.subr.bf16.mxu0 %v2779
    %3458 = vmatpush1.bf16.msra.mxu0 %v2778
    %3459 = vmatprep.mubr.bf16.mxu0 %v729
    %3460 = vmatmul.mubr.bf16.gmra.mrb[0].mxu0 %v728
    %v3461 = vpop.f32.mrb[0].mxu0
    %v3462 = vadd.f32 %v3419, %v3461
    %v3463 = vpop.f32.mrb[0].mxu0
    %v3464 = vadd.f32 %v3421, %v3463
    %v3465 = vpop.f32.mrb[0].mxu0
    %v3466 = vadd.f32 %v3423, %v3465
    %v3467 = vpop.f32.mrb[0].mxu0
    %v3468 = vadd.f32 %v3425, %v3467
    %3469 = vdwg.mxu0
    %3470 = vmatprep.subr.bf16.mxu0 %v2277
    %3471 = vmatpush1.bf16.msra.mxu0 %v2276
    %3472 = vmatprep.subr.bf16.mxu0 %v2285
    %3473 = vmatpush1.bf16.msra.mxu0 %v2284
    %3474 = vmatprep.subr.bf16.mxu0 %v2293
    %3475 = vmatpush1.bf16.msra.mxu0 %v2292
    %3476 = vmatprep.subr.bf16.mxu0 %v2301
    %3477 = vmatpush1.bf16.msra.mxu0 %v2300
    %3478 = vmatprep.subr.bf16.mxu0 %v2309
    %3479 = vmatpush1.bf16.msra.mxu0 %v2308
    %3480 = vmatprep.subr.bf16.mxu0 %v2317
    %3481 = vmatpush1.bf16.msra.mxu0 %v2316
    %3482 = vmatprep.subr.bf16.mxu0 %v2325
    %3483 = vmatpush1.bf16.msra.mxu0 %v2324
    %3484 = vmatprep.subr.bf16.mxu0 %v2333
    %3485 = vmatpush1.bf16.msra.mxu0 %v2332
    %3486 = vmatprep.subr.bf16.mxu0 %v2341
    %3487 = vmatpush1.bf16.msra.mxu0 %v2340
    %3488 = vmatprep.subr.bf16.mxu0 %v2349
    %3489 = vmatpush1.bf16.msra.mxu0 %v2348
    %3490 = vmatprep.subr.bf16.mxu0 %v2357
    %3491 = vmatpush1.bf16.msra.mxu0 %v2356
    %3492 = vmatprep.subr.bf16.mxu0 %v2365
    %3493 = vmatpush1.bf16.msra.mxu0 %v2364
    %3494 = vmatprep.subr.bf16.mxu0 %v2373
    %3495 = vmatpush1.bf16.msra.mxu0 %v2372
    %3496 = vmatprep.subr.bf16.mxu0 %v2381
    %3497 = vmatpush1.bf16.msra.mxu0 %v2380
    %3498 = vmatprep.subr.bf16.mxu0 %v2389
    %3499 = vmatpush1.bf16.msra.mxu0 %v2388
    %3500 = vmatprep.subr.bf16.mxu0 %v2397
    %3501 = vmatpush1.bf16.msra.mxu0 %v2396
    %3502 = vmatprep.mubr.bf16.mxu0 %v723
    %3503 = vmatmul.mubr.bf16.gmra.mrb[0].mxu0 %v722
    %v3504 = vpop.f32.mrb[0].mxu0
    %v3505 = vadd.f32 %v669, %v3504
    %v3506 = vpop.f32.mrb[0].mxu0
    %v3507 = vadd.f32 %v673, %v3506
    %v3508 = vpop.f32.mrb[0].mxu0
    %v3509 = vadd.f32 %v669, %v3508
    %v3510 = vpop.f32.mrb[0].mxu0
    %v3511 = vadd.f32 %v673, %v3510
    %3512 = vdwg.mxu0
    %3513 = vmatprep.subr.bf16.mxu0 %v2405
    %3514 = vmatpush1.bf16.msra.mxu0 %v2404
    %3515 = vmatprep.subr.bf16.mxu0 %v2413
    %3516 = vmatpush1.bf16.msra.mxu0 %v2412
    %3517 = vmatprep.subr.bf16.mxu0 %v2421
    %3518 = vmatpush1.bf16.msra.mxu0 %v2420
    %3519 = vmatprep.subr.bf16.mxu0 %v2429
    %3520 = vmatpush1.bf16.msra.mxu0 %v2428
    %3521 = vmatprep.subr.bf16.mxu0 %v2437
    %3522 = vmatpush1.bf16.msra.mxu0 %v2436
    %3523 = vmatprep.subr.bf16.mxu0 %v2445
    %3524 = vmatpush1.bf16.msra.mxu0 %v2444
    %3525 = vmatprep.subr.bf16.mxu0 %v2453
    %3526 = vmatpush1.bf16.msra.mxu0 %v2452
    %3527 = vmatprep.subr.bf16.mxu0 %v2461
    %3528 = vmatpush1.bf16.msra.mxu0 %v2460
    %3529 = vmatprep.subr.bf16.mxu0 %v2469
    %3530 = vmatpush1.bf16.msra.mxu0 %v2468
    %3531 = vmatprep.subr.bf16.mxu0 %v2477
    %3532 = vmatpush1.bf16.msra.mxu0 %v2476
    %3533 = vmatprep.subr.bf16.mxu0 %v2485
    %3534 = vmatpush1.bf16.msra.mxu0 %v2484
    %3535 = vmatprep.subr.bf16.mxu0 %v2493
    %3536 = vmatpush1.bf16.msra.mxu0 %v2492
    %3537 = vmatprep.subr.bf16.mxu0 %v2501
    %3538 = vmatpush1.bf16.msra.mxu0 %v2500
    %3539 = vmatprep.subr.bf16.mxu0 %v2509
    %3540 = vmatpush1.bf16.msra.mxu0 %v2508
    %3541 = vmatprep.subr.bf16.mxu0 %v2517
    %3542 = vmatpush1.bf16.msra.mxu0 %v2516
    %3543 = vmatprep.subr.bf16.mxu0 %v2525
    %3544 = vmatpush1.bf16.msra.mxu0 %v2524
    %3545 = vmatprep.mubr.bf16.mxu0 %v725
    %3546 = vmatmul.mubr.bf16.gmra.mrb[0].mxu0 %v724
    %v3547 = vpop.f32.mrb[0].mxu0
    %v3548 = vadd.f32 %v3505, %v3547
    %v3549 = vpop.f32.mrb[0].mxu0
    %v3550 = vadd.f32 %v3507, %v3549
    %v3551 = vpop.f32.mrb[0].mxu0
    %v3552 = vadd.f32 %v3509, %v3551
    %v3553 = vpop.f32.mrb[0].mxu0
    %v3554 = vadd.f32 %v3511, %v3553
    %3555 = vdwg.mxu0
    %3556 = vmatprep.subr.bf16.mxu0 %v2533
    %3557 = vmatpush1.bf16.msra.mxu0 %v2532
    %3558 = vmatprep.subr.bf16.mxu0 %v2541
    %3559 = vmatpush1.bf16.msra.mxu0 %v2540
    %3560 = vmatprep.subr.bf16.mxu0 %v2549
    %3561 = vmatpush1.bf16.msra.mxu0 %v2548
    %3562 = vmatprep.subr.bf16.mxu0 %v2557
    %3563 = vmatpush1.bf16.msra.mxu0 %v2556
    %3564 = vmatprep.subr.bf16.mxu0 %v2565
    %3565 = vmatpush1.bf16.msra.mxu0 %v2564
    %3566 = vmatprep.subr.bf16.mxu0 %v2573
    %3567 = vmatpush1.bf16.msra.mxu0 %v2572
    %3568 = vmatprep.subr.bf16.mxu0 %v2581
    %3569 = vmatpush1.bf16.msra.mxu0 %v2580
    %3570 = vmatprep.subr.bf16.mxu0 %v2589
    %3571 = vmatpush1.bf16.msra.mxu0 %v2588
    %3572 = vmatprep.subr.bf16.mxu0 %v2597
    %3573 = vmatpush1.bf16.msra.mxu0 %v2596
    %3574 = vmatprep.subr.bf16.mxu0 %v2605
    %3575 = vmatpush1.bf16.msra.mxu0 %v2604
    %3576 = vmatprep.subr.bf16.mxu0 %v2613
    %3577 = vmatpush1.bf16.msra.mxu0 %v2612
    %3578 = vmatprep.subr.bf16.mxu0 %v2621
    %3579 = vmatpush1.bf16.msra.mxu0 %v2620
    %3580 = vmatprep.subr.bf16.mxu0 %v2629
    %3581 = vmatpush1.bf16.msra.mxu0 %v2628
    %3582 = vmatprep.subr.bf16.mxu0 %v2637
    %3583 = vmatpush1.bf16.msra.mxu0 %v2636
    %3584 = vmatprep.subr.bf16.mxu0 %v2645
    %3585 = vmatpush1.bf16.msra.mxu0 %v2644
    %3586 = vmatprep.subr.bf16.mxu0 %v2653
    %3587 = vmatpush1.bf16.msra.mxu0 %v2652
    %3588 = vmatprep.mubr.bf16.mxu0 %v727
    %3589 = vmatmul.mubr.bf16.gmra.mrb[0].mxu0 %v726
    %v3590 = vpop.f32.mrb[0].mxu0
    %v3591 = vadd.f32 %v3548, %v3590
    %v3592 = vpop.f32.mrb[0].mxu0
    %v3593 = vadd.f32 %v3550, %v3592
    %v3594 = vpop.f32.mrb[0].mxu0
    %v3595 = vadd.f32 %v3552, %v3594
    %v3596 = vpop.f32.mrb[0].mxu0
    %v3597 = vadd.f32 %v3554, %v3596
    %3598 = vdwg.mxu0
    %3599 = vmatprep.subr.bf16.mxu0 %v2661
    %3600 = vmatpush1.bf16.msra.mxu0 %v2660
    %3601 = vmatprep.subr.bf16.mxu0 %v2669
    %3602 = vmatpush1.bf16.msra.mxu0 %v2668
    %3603 = vmatprep.subr.bf16.mxu0 %v2677
    %3604 = vmatpush1.bf16.msra.mxu0 %v2676
    %3605 = vmatprep.subr.bf16.mxu0 %v2685
    %3606 = vmatpush1.bf16.msra.mxu0 %v2684
    %3607 = vmatprep.subr.bf16.mxu0 %v2693
    %3608 = vmatpush1.bf16.msra.mxu0 %v2692
    %3609 = vmatprep.subr.bf16.mxu0 %v2701
    %3610 = vmatpush1.bf16.msra.mxu0 %v2700
    %3611 = vmatprep.subr.bf16.mxu0 %v2709
    %3612 = vmatpush1.bf16.msra.mxu0 %v2708
    %3613 = vmatprep.subr.bf16.mxu0 %v2717
    %3614 = vmatpush1.bf16.msra.mxu0 %v2716
    %3615 = vmatprep.subr.bf16.mxu0 %v2725
    %3616 = vmatpush1.bf16.msra.mxu0 %v2724
    %3617 = vmatprep.subr.bf16.mxu0 %v2733
    %3618 = vmatpush1.bf16.msra.mxu0 %v2732
    %3619 = vmatprep.subr.bf16.mxu0 %v2741
    %3620 = vmatpush1.bf16.msra.mxu0 %v2740
    %3621 = vmatprep.subr.bf16.mxu0 %v2749
    %3622 = vmatpush1.bf16.msra.mxu0 %v2748
    %3623 = vmatprep.subr.bf16.mxu0 %v2757
    %3624 = vmatpush1.bf16.msra.mxu0 %v2756
    %3625 = vmatprep.subr.bf16.mxu0 %v2765
    %3626 = vmatpush1.bf16.msra.mxu0 %v2764
    %3627 = vmatprep.subr.bf16.mxu0 %v2773
    %3628 = vmatpush1.bf16.msra.mxu0 %v2772
    %3629 = vmatprep.subr.bf16.mxu0 %v2781
    %3630 = vmatpush1.bf16.msra.mxu0 %v2780
    %3631 = vmatprep.mubr.bf16.mxu0 %v729
    %3632 = vmatmul.mubr.bf16.gmra.mrb[0].mxu0 %v728
    %v3633 = vpop.f32.mrb[0].mxu0
    %v3634 = vadd.f32 %v3591, %v3633
    %v3635 = vpop.f32.mrb[0].mxu0
    %v3636 = vadd.f32 %v3593, %v3635
    %v3637 = vpop.f32.mrb[0].mxu0
    %v3638 = vadd.f32 %v3595, %v3637
    %v3639 = vpop.f32.mrb[0].mxu0
    %v3640 = vadd.f32 %v3597, %v3639
    %3641 = vdwg.mxu0
    %3642 = vmatprep.subr.bf16.mxu0 %v2279
    %3643 = vmatpush1.bf16.msra.mxu0 %v2278
    %3644 = vmatprep.subr.bf16.mxu0 %v2287
    %3645 = vmatpush1.bf16.msra.mxu0 %v2286
    %3646 = vmatprep.subr.bf16.mxu0 %v2295
    %3647 = vmatpush1.bf16.msra.mxu0 %v2294
    %3648 = vmatprep.subr.bf16.mxu0 %v2303
    %3649 = vmatpush1.bf16.msra.mxu0 %v2302
    %3650 = vmatprep.subr.bf16.mxu0 %v2311
    %3651 = vmatpush1.bf16.msra.mxu0 %v2310
    %3652 = vmatprep.subr.bf16.mxu0 %v2319
    %3653 = vmatpush1.bf16.msra.mxu0 %v2318
    %3654 = vmatprep.subr.bf16.mxu0 %v2327
    %3655 = vmatpush1.bf16.msra.mxu0 %v2326
    %3656 = vmatprep.subr.bf16.mxu0 %v2335
    %3657 = vmatpush1.bf16.msra.mxu0 %v2334
    %3658 = vmatprep.subr.bf16.mxu0 %v2343
    %3659 = vmatpush1.bf16.msra.mxu0 %v2342
    %3660 = vmatprep.subr.bf16.mxu0 %v2351
    %3661 = vmatpush1.bf16.msra.mxu0 %v2350
    %3662 = vmatprep.subr.bf16.mxu0 %v2359
    %3663 = vmatpush1.bf16.msra.mxu0 %v2358
    %3664 = vmatprep.subr.bf16.mxu0 %v2367
    %3665 = vmatpush1.bf16.msra.mxu0 %v2366
    %3666 = vmatprep.subr.bf16.mxu0 %v2375
    %3667 = vmatpush1.bf16.msra.mxu0 %v2374
    %3668 = vmatprep.subr.bf16.mxu0 %v2383
    %3669 = vmatpush1.bf16.msra.mxu0 %v2382
    %3670 = vmatprep.subr.bf16.mxu0 %v2391
    %3671 = vmatpush1.bf16.msra.mxu0 %v2390
    %3672 = vmatprep.subr.bf16.mxu0 %v2399
    %3673 = vmatpush1.bf16.msra.mxu0 %v2398
    %3674 = vmatprep.mubr.bf16.mxu0 %v723
    %3675 = vmatmul.mubr.bf16.gmra.mrb[0].mxu0 %v722
    %v3676 = vpop.f32.mrb[0].mxu0
    %v3677 = vadd.f32 %v677, %v3676
    %v3678 = vpop.f32.mrb[0].mxu0
    %v3679 = vadd.f32 %v681, %v3678
    %v3680 = vpop.f32.mrb[0].mxu0
    %v3681 = vadd.f32 %v677, %v3680
    %v3682 = vpop.f32.mrb[0].mxu0
    %v3683 = vadd.f32 %v681, %v3682
    %3684 = vdwg.mxu0
    %3685 = vmatprep.subr.bf16.mxu0 %v2407
    %3686 = vmatpush1.bf16.msra.mxu0 %v2406
    %3687 = vmatprep.subr.bf16.mxu0 %v2415
    %3688 = vmatpush1.bf16.msra.mxu0 %v2414
    %3689 = vmatprep.subr.bf16.mxu0 %v2423
    %3690 = vmatpush1.bf16.msra.mxu0 %v2422
    %3691 = vmatprep.subr.bf16.mxu0 %v2431
    %3692 = vmatpush1.bf16.msra.mxu0 %v2430
    %3693 = vmatprep.subr.bf16.mxu0 %v2439
    %3694 = vmatpush1.bf16.msra.mxu0 %v2438
    %3695 = vmatprep.subr.bf16.mxu0 %v2447
    %3696 = vmatpush1.bf16.msra.mxu0 %v2446
    %3697 = vmatprep.subr.bf16.mxu0 %v2455
    %3698 = vmatpush1.bf16.msra.mxu0 %v2454
    %3699 = vmatprep.subr.bf16.mxu0 %v2463
    %3700 = vmatpush1.bf16.msra.mxu0 %v2462
    %3701 = vmatprep.subr.bf16.mxu0 %v2471
    %3702 = vmatpush1.bf16.msra.mxu0 %v2470
    %3703 = vmatprep.subr.bf16.mxu0 %v2479
    %3704 = vmatpush1.bf16.msra.mxu0 %v2478
    %3705 = vmatprep.subr.bf16.mxu0 %v2487
    %3706 = vmatpush1.bf16.msra.mxu0 %v2486
    %3707 = vmatprep.subr.bf16.mxu0 %v2495
    %3708 = vmatpush1.bf16.msra.mxu0 %v2494
    %3709 = vmatprep.subr.bf16.mxu0 %v2503
    %3710 = vmatpush1.bf16.msra.mxu0 %v2502
    %3711 = vmatprep.subr.bf16.mxu0 %v2511
    %3712 = vmatpush1.bf16.msra.mxu0 %v2510
    %3713 = vmatprep.subr.bf16.mxu0 %v2519
    %3714 = vmatpush1.bf16.msra.mxu0 %v2518
    %3715 = vmatprep.subr.bf16.mxu0 %v2527
    %3716 = vmatpush1.bf16.msra.mxu0 %v2526
    %3717 = vmatprep.mubr.bf16.mxu0 %v725
    %3718 = vmatmul.mubr.bf16.gmra.mrb[0].mxu0 %v724
    %v3719 = vpop.f32.mrb[0].mxu0
    %v3720 = vadd.f32 %v3677, %v3719
    %v3721 = vpop.f32.mrb[0].mxu0
    %v3722 = vadd.f32 %v3679, %v3721
    %v3723 = vpop.f32.mrb[0].mxu0
    %v3724 = vadd.f32 %v3681, %v3723
    %v3725 = vpop.f32.mrb[0].mxu0
    %v3726 = vadd.f32 %v3683, %v3725
    %3727 = vdwg.mxu0
    %3728 = vmatprep.subr.bf16.mxu0 %v2535
    %3729 = vmatpush1.bf16.msra.mxu0 %v2534
    %3730 = vmatprep.subr.bf16.mxu0 %v2543
    %3731 = vmatpush1.bf16.msra.mxu0 %v2542
    %3732 = vmatprep.subr.bf16.mxu0 %v2551
    %3733 = vmatpush1.bf16.msra.mxu0 %v2550
    %3734 = vmatprep.subr.bf16.mxu0 %v2559
    %3735 = vmatpush1.bf16.msra.mxu0 %v2558
    %3736 = vmatprep.subr.bf16.mxu0 %v2567
    %3737 = vmatpush1.bf16.msra.mxu0 %v2566
    %3738 = vmatprep.subr.bf16.mxu0 %v2575
    %3739 = vmatpush1.bf16.msra.mxu0 %v2574
    %3740 = vmatprep.subr.bf16.mxu0 %v2583
    %3741 = vmatpush1.bf16.msra.mxu0 %v2582
    %3742 = vmatprep.subr.bf16.mxu0 %v2591
    %3743 = vmatpush1.bf16.msra.mxu0 %v2590
    %3744 = vmatprep.subr.bf16.mxu0 %v2599
    %3745 = vmatpush1.bf16.msra.mxu0 %v2598
    %3746 = vmatprep.subr.bf16.mxu0 %v2607
    %3747 = vmatpush1.bf16.msra.mxu0 %v2606
    %3748 = vmatprep.subr.bf16.mxu0 %v2615
    %3749 = vmatpush1.bf16.msra.mxu0 %v2614
    %3750 = vmatprep.subr.bf16.mxu0 %v2623
    %3751 = vmatpush1.bf16.msra.mxu0 %v2622
    %3752 = vmatprep.subr.bf16.mxu0 %v2631
    %3753 = vmatpush1.bf16.msra.mxu0 %v2630
    %3754 = vmatprep.subr.bf16.mxu0 %v2639
    %3755 = vmatpush1.bf16.msra.mxu0 %v2638
    %3756 = vmatprep.subr.bf16.mxu0 %v2647
    %3757 = vmatpush1.bf16.msra.mxu0 %v2646
    %3758 = vmatprep.subr.bf16.mxu0 %v2655
    %3759 = vmatpush1.bf16.msra.mxu0 %v2654
    %3760 = vmatprep.mubr.bf16.mxu0 %v727
    %3761 = vmatmul.mubr.bf16.gmra.mrb[0].mxu0 %v726
    %v3762 = vpop.f32.mrb[0].mxu0
    %v3763 = vadd.f32 %v3720, %v3762
    %v3764 = vpop.f32.mrb[0].mxu0
    %v3765 = vadd.f32 %v3722, %v3764
    %v3766 = vpop.f32.mrb[0].mxu0
    %v3767 = vadd.f32 %v3724, %v3766
    %v3768 = vpop.f32.mrb[0].mxu0
    %v3769 = vadd.f32 %v3726, %v3768
    %3770 = vdwg.mxu0
    %3771 = vmatprep.subr.bf16.mxu0 %v2663
    %3772 = vmatpush1.bf16.msra.mxu0 %v2662
    %3773 = vmatprep.subr.bf16.mxu0 %v2671
    %3774 = vmatpush1.bf16.msra.mxu0 %v2670
    %3775 = vmatprep.subr.bf16.mxu0 %v2679
    %3776 = vmatpush1.bf16.msra.mxu0 %v2678
    %3777 = vmatprep.subr.bf16.mxu0 %v2687
    %3778 = vmatpush1.bf16.msra.mxu0 %v2686
    %3779 = vmatprep.subr.bf16.mxu0 %v2695
    %3780 = vmatpush1.bf16.msra.mxu0 %v2694
    %3781 = vmatprep.subr.bf16.mxu0 %v2703
    %3782 = vmatpush1.bf16.msra.mxu0 %v2702
    %3783 = vmatprep.subr.bf16.mxu0 %v2711
    %3784 = vmatpush1.bf16.msra.mxu0 %v2710
    %3785 = vmatprep.subr.bf16.mxu0 %v2719
    %3786 = vmatpush1.bf16.msra.mxu0 %v2718
    %3787 = vmatprep.subr.bf16.mxu0 %v2727
    %3788 = vmatpush1.bf16.msra.mxu0 %v2726
    %3789 = vmatprep.subr.bf16.mxu0 %v2735
    %3790 = vmatpush1.bf16.msra.mxu0 %v2734
    %3791 = vmatprep.subr.bf16.mxu0 %v2743
    %3792 = vmatpush1.bf16.msra.mxu0 %v2742
    %3793 = vmatprep.subr.bf16.mxu0 %v2751
    %3794 = vmatpush1.bf16.msra.mxu0 %v2750
    %3795 = vmatprep.subr.bf16.mxu0 %v2759
    %3796 = vmatpush1.bf16.msra.mxu0 %v2758
    %3797 = vmatprep.subr.bf16.mxu0 %v2767
    %3798 = vmatpush1.bf16.msra.mxu0 %v2766
    %3799 = vmatprep.subr.bf16.mxu0 %v2775
    %3800 = vmatpush1.bf16.msra.mxu0 %v2774
    %3801 = vmatprep.subr.bf16.mxu0 %v2783
    %3802 = vmatpush1.bf16.msra.mxu0 %v2782
    %3803 = vmatprep.mubr.bf16.mxu0 %v729
    %3804 = vmatmul.mubr.bf16.gmra.mrb[0].mxu0 %v728
    %v3805 = vpop.f32.mrb[0].mxu0
    %v3806 = vadd.f32 %v3763, %v3805
    %v3807 = vpop.f32.mrb[0].mxu0
    %v3808 = vadd.f32 %v3765, %v3807
    %v3809 = vpop.f32.mrb[0].mxu0
    %v3810 = vadd.f32 %v3767, %v3809
    %v3811 = vpop.f32.mrb[0].mxu0
    %v3812 = vadd.f32 %v3769, %v3811
    %3813 = vdwg.mxu0
    %3814 = vmatprep.subr.bf16.mxu0 %v2281
    %3815 = vmatpush1.bf16.msra.mxu0 %v2280
    %3816 = vmatprep.subr.bf16.mxu0 %v2289
    %3817 = vmatpush1.bf16.msra.mxu0 %v2288
    %3818 = vmatprep.subr.bf16.mxu0 %v2297
    %3819 = vmatpush1.bf16.msra.mxu0 %v2296
    %3820 = vmatprep.subr.bf16.mxu0 %v2305
    %3821 = vmatpush1.bf16.msra.mxu0 %v2304
    %3822 = vmatprep.subr.bf16.mxu0 %v2313
    %3823 = vmatpush1.bf16.msra.mxu0 %v2312
    %3824 = vmatprep.subr.bf16.mxu0 %v2321
    %3825 = vmatpush1.bf16.msra.mxu0 %v2320
    %3826 = vmatprep.subr.bf16.mxu0 %v2329
    %3827 = vmatpush1.bf16.msra.mxu0 %v2328
    %3828 = vmatprep.subr.bf16.mxu0 %v2337
    %3829 = vmatpush1.bf16.msra.mxu0 %v2336
    %3830 = vmatprep.subr.bf16.mxu0 %v2345
    %3831 = vmatpush1.bf16.msra.mxu0 %v2344
    %3832 = vmatprep.subr.bf16.mxu0 %v2353
    %3833 = vmatpush1.bf16.msra.mxu0 %v2352
    %3834 = vmatprep.subr.bf16.mxu0 %v2361
    %3835 = vmatpush1.bf16.msra.mxu0 %v2360
    %3836 = vmatprep.subr.bf16.mxu0 %v2369
    %3837 = vmatpush1.bf16.msra.mxu0 %v2368
    %3838 = vmatprep.subr.bf16.mxu0 %v2377
    %3839 = vmatpush1.bf16.msra.mxu0 %v2376
    %3840 = vmatprep.subr.bf16.mxu0 %v2385
    %3841 = vmatpush1.bf16.msra.mxu0 %v2384
    %3842 = vmatprep.subr.bf16.mxu0 %v2393
    %3843 = vmatpush1.bf16.msra.mxu0 %v2392
    %3844 = vmatprep.subr.bf16.mxu0 %v2401
    %3845 = vmatpush1.bf16.msra.mxu0 %v2400
    %3846 = vmatprep.mubr.bf16.mxu0 %v723
    %3847 = vmatmul.mubr.bf16.gmra.mrb[0].mxu0 %v722
    %v3848 = vpop.f32.mrb[0].mxu0
    %v3849 = vadd.f32 %v685, %v3848
    %v3850 = vpop.f32.mrb[0].mxu0
    %v3851 = vadd.f32 %v689, %v3850
    %v3852 = vpop.f32.mrb[0].mxu0
    %v3853 = vadd.f32 %v685, %v3852
    %v3854 = vpop.f32.mrb[0].mxu0
    %v3855 = vadd.f32 %v689, %v3854
    %3856 = vdwg.mxu0
    %3857 = vmatprep.subr.bf16.mxu0 %v2409
    %3858 = vmatpush1.bf16.msra.mxu0 %v2408
    %3859 = vmatprep.subr.bf16.mxu0 %v2417
    %3860 = vmatpush1.bf16.msra.mxu0 %v2416
    %3861 = vmatprep.subr.bf16.mxu0 %v2425
    %3862 = vmatpush1.bf16.msra.mxu0 %v2424
    %3863 = vmatprep.subr.bf16.mxu0 %v2433
    %3864 = vmatpush1.bf16.msra.mxu0 %v2432
    %3865 = vmatprep.subr.bf16.mxu0 %v2441
    %3866 = vmatpush1.bf16.msra.mxu0 %v2440
    %3867 = vmatprep.subr.bf16.mxu0 %v2449
    %3868 = vmatpush1.bf16.msra.mxu0 %v2448
    %3869 = vmatprep.subr.bf16.mxu0 %v2457
    %3870 = vmatpush1.bf16.msra.mxu0 %v2456
    %3871 = vmatprep.subr.bf16.mxu0 %v2465
    %3872 = vmatpush1.bf16.msra.mxu0 %v2464
    %3873 = vmatprep.subr.bf16.mxu0 %v2473
    %3874 = vmatpush1.bf16.msra.mxu0 %v2472
    %3875 = vmatprep.subr.bf16.mxu0 %v2481
    %3876 = vmatpush1.bf16.msra.mxu0 %v2480
    %3877 = vmatprep.subr.bf16.mxu0 %v2489
    %3878 = vmatpush1.bf16.msra.mxu0 %v2488
    %3879 = vmatprep.subr.bf16.mxu0 %v2497
    %3880 = vmatpush1.bf16.msra.mxu0 %v2496
    %3881 = vmatprep.subr.bf16.mxu0 %v2505
    %3882 = vmatpush1.bf16.msra.mxu0 %v2504
    %3883 = vmatprep.subr.bf16.mxu0 %v2513
    %3884 = vmatpush1.bf16.msra.mxu0 %v2512
    %3885 = vmatprep.subr.bf16.mxu0 %v2521
    %3886 = vmatpush1.bf16.msra.mxu0 %v2520
    %3887 = vmatprep.subr.bf16.mxu0 %v2529
    %3888 = vmatpush1.bf16.msra.mxu0 %v2528
    %3889 = vmatprep.mubr.bf16.mxu0 %v725
    %3890 = vmatmul.mubr.bf16.gmra.mrb[0].mxu0 %v724
    %v3891 = vpop.f32.mrb[0].mxu0
    %v3892 = vadd.f32 %v3849, %v3891
    %v3893 = vpop.f32.mrb[0].mxu0
    %v3894 = vadd.f32 %v3851, %v3893
    %v3895 = vpop.f32.mrb[0].mxu0
    %v3896 = vadd.f32 %v3853, %v3895
    %v3897 = vpop.f32.mrb[0].mxu0
    %v3898 = vadd.f32 %v3855, %v3897
    %3899 = vdwg.mxu0
    %3900 = vmatprep.subr.bf16.mxu0 %v2537
    %3901 = vmatpush1.bf16.msra.mxu0 %v2536
    %3902 = vmatprep.subr.bf16.mxu0 %v2545
    %3903 = vmatpush1.bf16.msra.mxu0 %v2544
    %3904 = vmatprep.subr.bf16.mxu0 %v2553
    %3905 = vmatpush1.bf16.msra.mxu0 %v2552
    %3906 = vmatprep.subr.bf16.mxu0 %v2561
    %3907 = vmatpush1.bf16.msra.mxu0 %v2560
    %3908 = vmatprep.subr.bf16.mxu0 %v2569
    %3909 = vmatpush1.bf16.msra.mxu0 %v2568
    %3910 = vmatprep.subr.bf16.mxu0 %v2577
    %3911 = vmatpush1.bf16.msra.mxu0 %v2576
    %3912 = vmatprep.subr.bf16.mxu0 %v2585
    %3913 = vmatpush1.bf16.msra.mxu0 %v2584
    %3914 = vmatprep.subr.bf16.mxu0 %v2593
    %3915 = vmatpush1.bf16.msra.mxu0 %v2592
    %3916 = vmatprep.subr.bf16.mxu0 %v2601
    %3917 = vmatpush1.bf16.msra.mxu0 %v2600
    %3918 = vmatprep.subr.bf16.mxu0 %v2609
    %3919 = vmatpush1.bf16.msra.mxu0 %v2608
    %3920 = vmatprep.subr.bf16.mxu0 %v2617
    %3921 = vmatpush1.bf16.msra.mxu0 %v2616
    %3922 = vmatprep.subr.bf16.mxu0 %v2625
    %3923 = vmatpush1.bf16.msra.mxu0 %v2624
    %3924 = vmatprep.subr.bf16.mxu0 %v2633
    %3925 = vmatpush1.bf16.msra.mxu0 %v2632
    %3926 = vmatprep.subr.bf16.mxu0 %v2641
    %3927 = vmatpush1.bf16.msra.mxu0 %v2640
    %3928 = vmatprep.subr.bf16.mxu0 %v2649
    %3929 = vmatpush1.bf16.msra.mxu0 %v2648
    %3930 = vmatprep.subr.bf16.mxu0 %v2657
    %3931 = vmatpush1.bf16.msra.mxu0 %v2656
    %3932 = vmatprep.mubr.bf16.mxu0 %v727
    %3933 = vmatmul.mubr.bf16.gmra.mrb[0].mxu0 %v726
    %v3934 = vpop.f32.mrb[0].mxu0
    %v3935 = vadd.f32 %v3892, %v3934
    %v3936 = vpop.f32.mrb[0].mxu0
    %v3937 = vadd.f32 %v3894, %v3936
    %v3938 = vpop.f32.mrb[0].mxu0
    %v3939 = vadd.f32 %v3896, %v3938
    %v3940 = vpop.f32.mrb[0].mxu0
    %v3941 = vadd.f32 %v3898, %v3940
    %3942 = vdwg.mxu0
    %3943 = vmatprep.subr.bf16.mxu0 %v2665
    %3944 = vmatpush1.bf16.msra.mxu0 %v2664
    %3945 = vmatprep.subr.bf16.mxu0 %v2673
    %3946 = vmatpush1.bf16.msra.mxu0 %v2672
    %3947 = vmatprep.subr.bf16.mxu0 %v2681
    %3948 = vmatpush1.bf16.msra.mxu0 %v2680
    %3949 = vmatprep.subr.bf16.mxu0 %v2689
    %3950 = vmatpush1.bf16.msra.mxu0 %v2688
    %3951 = vmatprep.subr.bf16.mxu0 %v2697
    %3952 = vmatpush1.bf16.msra.mxu0 %v2696
    %3953 = vmatprep.subr.bf16.mxu0 %v2705
    %3954 = vmatpush1.bf16.msra.mxu0 %v2704
    %3955 = vmatprep.subr.bf16.mxu0 %v2713
    %3956 = vmatpush1.bf16.msra.mxu0 %v2712
    %3957 = vmatprep.subr.bf16.mxu0 %v2721
    %3958 = vmatpush1.bf16.msra.mxu0 %v2720
    %3959 = vmatprep.subr.bf16.mxu0 %v2729
    %3960 = vmatpush1.bf16.msra.mxu0 %v2728
    %3961 = vmatprep.subr.bf16.mxu0 %v2737
    %3962 = vmatpush1.bf16.msra.mxu0 %v2736
    %3963 = vmatprep.subr.bf16.mxu0 %v2745
    %3964 = vmatpush1.bf16.msra.mxu0 %v2744
    %3965 = vmatprep.subr.bf16.mxu0 %v2753
    %3966 = vmatpush1.bf16.msra.mxu0 %v2752
    %3967 = vmatprep.subr.bf16.mxu0 %v2761
    %3968 = vmatpush1.bf16.msra.mxu0 %v2760
    %3969 = vmatprep.subr.bf16.mxu0 %v2769
    %3970 = vmatpush1.bf16.msra.mxu0 %v2768
    %3971 = vmatprep.subr.bf16.mxu0 %v2777
    %3972 = vmatpush1.bf16.msra.mxu0 %v2776
    %3973 = vmatprep.subr.bf16.mxu0 %v2785
    %3974 = vmatpush1.bf16.msra.mxu0 %v2784
    %3975 = vmatprep.mubr.bf16.mxu0 %v729
    %3976 = vmatmul.mubr.bf16.gmra.mrb[0].mxu0 %v728
    %v3977 = vpop.f32.mrb[0].mxu0
    %v3978 = vadd.f32 %v3935, %v3977
    %v3979 = vpop.f32.mrb[0].mxu0
    %v3980 = vadd.f32 %v3937, %v3979
    %v3981 = vpop.f32.mrb[0].mxu0
    %v3982 = vadd.f32 %v3939, %v3981
    %v3983 = vpop.f32.mrb[0].mxu0
    %v3984 = vadd.f32 %v3941, %v3983
    %3985 = vdwg.mxu0
    %v3986 = vmax.f32 %v3462, 0.0
    %v3987 = vmax.f32 %v3464, 0.0
    %v3988 = vmax.f32 %v3634, 0.0
    %v3989 = vmax.f32 %v3636, 0.0
    %v3990 = vmax.f32 %v3806, 0.0
    %v3991 = vmax.f32 %v3808, 0.0
    %v3992 = vmax.f32 %v3978, 0.0
    %v3993 = vmax.f32 %v3980, 0.0
    %v3994 = vmax.f32 %v3466, 0.0
    %v3995 = vmax.f32 %v3468, 0.0
    %v3996 = vmax.f32 %v3638, 0.0
    %v3997 = vmax.f32 %v3640, 0.0
    %v3998 = vmax.f32 %v3810, 0.0
    %v3999 = vmax.f32 %v3812, 0.0
    %v4000 = vmax.f32 %v3982, 0.0
    %v4001 = vmax.f32 %v3984, 0.0
    %v4002 = vpack.c.bf16 %v3994, %v3986
    %v4003 = vpack.c.bf16 %v3995, %v3987
    %v4004 = vpack.c.bf16 %v3996, %v3988
    %v4005 = vpack.c.bf16 %v3997, %v3989
    %v4006 = vpack.c.bf16 %v3998, %v3990
    %v4007 = vpack.c.bf16 %v3999, %v3991
    %v4008 = vpack.c.bf16 %v4000, %v3992
    %v4009 = vpack.c.bf16 %v4001, %v3993
    %v4010 = vld [vmem:[#allocation6] sm:$0xf]
    %v4011 = vld [vmem:[#allocation6 + $0x4] sm:$0xf]
    %v4012 = vld [vmem:[#allocation6 + $0x8] sm:$0xf]
    %v4013 = vld [vmem:[#allocation6 + $0xc] sm:$0xf]
    %v4014 = vld [vmem:[#allocation6 + $0x10] sm:$0xf]
    %v4015 = vld [vmem:[#allocation6 + $0x14] sm:$0xf]
    %v4016 = vld [vmem:[#allocation6 + $0x18] sm:$0xf]
    %v4017 = vld [vmem:[#allocation6 + $0x1c] sm:$0xf]
    %v4018 = vld [vmem:[#allocation6 + $0x20] sm:$0xf]
    %v4019 = vld [vmem:[#allocation6 + $0x24] sm:$0xf]
    %v4020 = vld [vmem:[#allocation6 + $0x28] sm:$0xf]
    %v4021 = vld [vmem:[#allocation6 + $0x2c] sm:$0xf]
    %v4022 = vld [vmem:[#allocation6 + $0x30] sm:$0xf]
    %v4023 = vld [vmem:[#allocation6 + $0x34] sm:$0xf]
    %v4024 = vld [vmem:[#allocation6 + $0x38] sm:$0xf]
    %v4025 = vld [vmem:[#allocation6 + $0x3c] sm:$0xf]
    %v4026 = vld [vmem:[#allocation6 + $0x40] sm:$0xf]
    %v4027 = vld [vmem:[#allocation6 + $0x44] sm:$0xf]
    %v4028 = vld [vmem:[#allocation6 + $0x48] sm:$0xf]
    %v4029 = vld [vmem:[#allocation6 + $0x4c] sm:$0xf]
    %v4030 = vld [vmem:[#allocation6 + $0x50] sm:$0xf]
    %v4031 = vld [vmem:[#allocation6 + $0x54] sm:$0xf]
    %v4032 = vld [vmem:[#allocation6 + $0x58] sm:$0xf]
    %v4033 = vld [vmem:[#allocation6 + $0x5c] sm:$0xf]
    %v4034 = vld [vmem:[#allocation6 + $0x60] sm:$0xf]
    %v4035 = vld [vmem:[#allocation6 + $0x64] sm:$0xf]
    %v4036 = vld [vmem:[#allocation6 + $0x68] sm:$0xf]
    %v4037 = vld [vmem:[#allocation6 + $0x6c] sm:$0xf]
    %v4038 = vld [vmem:[#allocation6 + $0x70] sm:$0xf]
    %v4039 = vld [vmem:[#allocation6 + $0x74] sm:$0xf]
    %v4040 = vld [vmem:[#allocation6 + $0x78] sm:$0xf]
    %v4041 = vld [vmem:[#allocation6 + $0x7c] sm:$0xf]
    %v4042 = vld [vmem:[#allocation6 + $0x80] sm:$0xf]
    %v4043 = vld [vmem:[#allocation6 + $0x84] sm:$0xf]
    %v4044 = vld [vmem:[#allocation6 + $0x88] sm:$0xf]
    %v4045 = vld [vmem:[#allocation6 + $0x8c] sm:$0xf]
    %v4046 = vld [vmem:[#allocation6 + $0x90] sm:$0xf]
    %v4047 = vld [vmem:[#allocation6 + $0x94] sm:$0xf]
    %v4048 = vld [vmem:[#allocation6 + $0x98] sm:$0xf]
    %v4049 = vld [vmem:[#allocation6 + $0x9c] sm:$0xf]
    %v4050 = vld [vmem:[#allocation6 + $0xa0] sm:$0xf]
    %v4051 = vld [vmem:[#allocation6 + $0xa4] sm:$0xf]
    %v4052 = vld [vmem:[#allocation6 + $0xa8] sm:$0xf]
    %v4053 = vld [vmem:[#allocation6 + $0xac] sm:$0xf]
    %v4054 = vld [vmem:[#allocation6 + $0xb0] sm:$0xf]
    %v4055 = vld [vmem:[#allocation6 + $0xb4] sm:$0xf]
    %v4056 = vld [vmem:[#allocation6 + $0xb8] sm:$0xf]
    %v4057 = vld [vmem:[#allocation6 + $0xbc] sm:$0xf]
    %v4058 = vld [vmem:[#allocation6 + $0xc0] sm:$0xf]
    %v4059 = vld [vmem:[#allocation6 + $0xc4] sm:$0xf]
    %v4060 = vld [vmem:[#allocation6 + $0xc8] sm:$0xf]
    %v4061 = vld [vmem:[#allocation6 + $0xcc] sm:$0xf]
    %v4062 = vld [vmem:[#allocation6 + $0xd0] sm:$0xf]
    %v4063 = vld [vmem:[#allocation6 + $0xd4] sm:$0xf]
    %v4064 = vld [vmem:[#allocation6 + $0xd8] sm:$0xf]
    %v4065 = vld [vmem:[#allocation6 + $0xdc] sm:$0xf]
    %v4066 = vld [vmem:[#allocation6 + $0xe0] sm:$0xf]
    %v4067 = vld [vmem:[#allocation6 + $0xe4] sm:$0xf]
    %v4068 = vld [vmem:[#allocation6 + $0xe8] sm:$0xf]
    %v4069 = vld [vmem:[#allocation6 + $0xec] sm:$0xf]
    %v4070 = vld [vmem:[#allocation6 + $0xf0] sm:$0xf]
    %v4071 = vld [vmem:[#allocation6 + $0xf4] sm:$0xf]
    %v4072 = vld [vmem:[#allocation6 + $0xf8] sm:$0xf]
    %v4073 = vld [vmem:[#allocation6 + $0xfc] sm:$0xf]
    %v4074 = vld [vmem:[#allocation6 + $0x100] sm:$0xf]
    %v4075 = vld [vmem:[#allocation6 + $0x104] sm:$0xf]
    %v4076 = vld [vmem:[#allocation6 + $0x108] sm:$0xf]
    %v4077 = vld [vmem:[#allocation6 + $0x10c] sm:$0xf]
    %v4078 = vld [vmem:[#allocation6 + $0x110] sm:$0xf]
    %v4079 = vld [vmem:[#allocation6 + $0x114] sm:$0xf]
    %v4080 = vld [vmem:[#allocation6 + $0x118] sm:$0xf]
    %v4081 = vld [vmem:[#allocation6 + $0x11c] sm:$0xf]
    %v4082 = vld [vmem:[#allocation6 + $0x120] sm:$0xf]
    %v4083 = vld [vmem:[#allocation6 + $0x124] sm:$0xf]
    %v4084 = vld [vmem:[#allocation6 + $0x128] sm:$0xf]
    %v4085 = vld [vmem:[#allocation6 + $0x12c] sm:$0xf]
    %v4086 = vld [vmem:[#allocation6 + $0x130] sm:$0xf]
    %v4087 = vld [vmem:[#allocation6 + $0x134] sm:$0xf]
    %v4088 = vld [vmem:[#allocation6 + $0x138] sm:$0xf]
    %v4089 = vld [vmem:[#allocation6 + $0x13c] sm:$0xf]
    %v4090 = vld [vmem:[#allocation6 + $0x140] sm:$0xf]
    %v4091 = vld [vmem:[#allocation6 + $0x144] sm:$0xf]
    %v4092 = vld [vmem:[#allocation6 + $0x148] sm:$0xf]
    %v4093 = vld [vmem:[#allocation6 + $0x14c] sm:$0xf]
    %v4094 = vld [vmem:[#allocation6 + $0x150] sm:$0xf]
    %v4095 = vld [vmem:[#allocation6 + $0x154] sm:$0xf]
    %v4096 = vld [vmem:[#allocation6 + $0x158] sm:$0xf]
    %v4097 = vld [vmem:[#allocation6 + $0x15c] sm:$0xf]
    %v4098 = vld [vmem:[#allocation6 + $0x160] sm:$0xf]
    %v4099 = vld [vmem:[#allocation6 + $0x164] sm:$0xf]
    %v4100 = vld [vmem:[#allocation6 + $0x168] sm:$0xf]
    %v4101 = vld [vmem:[#allocation6 + $0x16c] sm:$0xf]
    %v4102 = vld [vmem:[#allocation6 + $0x170] sm:$0xf]
    %v4103 = vld [vmem:[#allocation6 + $0x174] sm:$0xf]
    %v4104 = vld [vmem:[#allocation6 + $0x178] sm:$0xf]
    %v4105 = vld [vmem:[#allocation6 + $0x17c] sm:$0xf]
    %v4106 = vld [vmem:[#allocation6 + $0x180] sm:$0xf]
    %v4107 = vld [vmem:[#allocation6 + $0x184] sm:$0xf]
    %v4108 = vld [vmem:[#allocation6 + $0x188] sm:$0xf]
    %v4109 = vld [vmem:[#allocation6 + $0x18c] sm:$0xf]
    %v4110 = vld [vmem:[#allocation6 + $0x190] sm:$0xf]
    %v4111 = vld [vmem:[#allocation6 + $0x194] sm:$0xf]
    %v4112 = vld [vmem:[#allocation6 + $0x198] sm:$0xf]
    %v4113 = vld [vmem:[#allocation6 + $0x19c] sm:$0xf]
    %v4114 = vld [vmem:[#allocation6 + $0x1a0] sm:$0xf]
    %v4115 = vld [vmem:[#allocation6 + $0x1a4] sm:$0xf]
    %v4116 = vld [vmem:[#allocation6 + $0x1a8] sm:$0xf]
    %v4117 = vld [vmem:[#allocation6 + $0x1ac] sm:$0xf]
    %v4118 = vld [vmem:[#allocation6 + $0x1b0] sm:$0xf]
    %v4119 = vld [vmem:[#allocation6 + $0x1b4] sm:$0xf]
    %v4120 = vld [vmem:[#allocation6 + $0x1b8] sm:$0xf]
    %v4121 = vld [vmem:[#allocation6 + $0x1bc] sm:$0xf]
    %v4122 = vld [vmem:[#allocation6 + $0x1c0] sm:$0xf]
    %v4123 = vld [vmem:[#allocation6 + $0x1c4] sm:$0xf]
    %v4124 = vld [vmem:[#allocation6 + $0x1c8] sm:$0xf]
    %v4125 = vld [vmem:[#allocation6 + $0x1cc] sm:$0xf]
    %v4126 = vld [vmem:[#allocation6 + $0x1d0] sm:$0xf]
    %v4127 = vld [vmem:[#allocation6 + $0x1d4] sm:$0xf]
    %v4128 = vld [vmem:[#allocation6 + $0x1d8] sm:$0xf]
    %v4129 = vld [vmem:[#allocation6 + $0x1dc] sm:$0xf]
    %v4130 = vld [vmem:[#allocation6 + $0x1e0] sm:$0xf]
    %v4131 = vld [vmem:[#allocation6 + $0x1e4] sm:$0xf]
    %v4132 = vld [vmem:[#allocation6 + $0x1e8] sm:$0xf]
    %v4133 = vld [vmem:[#allocation6 + $0x1ec] sm:$0xf]
    %v4134 = vld [vmem:[#allocation6 + $0x1f0] sm:$0xf]
    %v4135 = vld [vmem:[#allocation6 + $0x1f4] sm:$0xf]
    %v4136 = vld [vmem:[#allocation6 + $0x1f8] sm:$0xf]
    %v4137 = vld [vmem:[#allocation6 + $0x1fc] sm:$0xf]
    %v4138 = vld [vmem:[#allocation7] sm:$0x1]
    %v4140 = vlaneseq
    %v4141 = vshrl.u32 %v4140, 7
    %v4142 = vsub.s32 0, %v4141
    %v4143 = vrot.slane %v4138, %v4142
    %v4273 = vunpack.c.l.b16 %v4010
    %v4274 = vunpack.c.l.b16 %v4011
    %v4275 = vunpack.c.l.b16 %v4012
    %v4276 = vunpack.c.l.b16 %v4013
    %v4277 = vunpack.c.l.b16 %v4014
    %v4278 = vunpack.c.l.b16 %v4015
    %v4279 = vunpack.c.l.b16 %v4016
    %v4280 = vunpack.c.l.b16 %v4017
    %v4281 = vunpack.c.l.b16 %v4018
    %v4282 = vunpack.c.l.b16 %v4019
    %v4283 = vunpack.c.l.b16 %v4020
    %v4284 = vunpack.c.l.b16 %v4021
    %v4285 = vunpack.c.l.b16 %v4022
    %v4286 = vunpack.c.l.b16 %v4023
    %v4287 = vunpack.c.l.b16 %v4024
    %v4288 = vunpack.c.l.b16 %v4025
    %v4289 = vunpack.c.l.b16 %v4026
    %v4290 = vunpack.c.l.b16 %v4027
    %v4291 = vunpack.c.l.b16 %v4028
    %v4292 = vunpack.c.l.b16 %v4029
    %v4293 = vunpack.c.l.b16 %v4030
    %v4294 = vunpack.c.l.b16 %v4031
    %v4295 = vunpack.c.l.b16 %v4032
    %v4296 = vunpack.c.l.b16 %v4033
    %v4297 = vunpack.c.l.b16 %v4034
    %v4298 = vunpack.c.l.b16 %v4035
    %v4299 = vunpack.c.l.b16 %v4036
    %v4300 = vunpack.c.l.b16 %v4037
    %v4301 = vunpack.c.l.b16 %v4038
    %v4302 = vunpack.c.l.b16 %v4039
    %v4303 = vunpack.c.l.b16 %v4040
    %v4304 = vunpack.c.l.b16 %v4041
    %v4305 = vunpack.c.l.b16 %v4042
    %v4306 = vunpack.c.l.b16 %v4043
    %v4307 = vunpack.c.l.b16 %v4044
    %v4308 = vunpack.c.l.b16 %v4045
    %v4309 = vunpack.c.l.b16 %v4046
    %v4310 = vunpack.c.l.b16 %v4047
    %v4311 = vunpack.c.l.b16 %v4048
    %v4312 = vunpack.c.l.b16 %v4049
    %v4313 = vunpack.c.l.b16 %v4050
    %v4314 = vunpack.c.l.b16 %v4051
    %v4315 = vunpack.c.l.b16 %v4052
    %v4316 = vunpack.c.l.b16 %v4053
    %v4317 = vunpack.c.l.b16 %v4054
    %v4318 = vunpack.c.l.b16 %v4055
    %v4319 = vunpack.c.l.b16 %v4056
    %v4320 = vunpack.c.l.b16 %v4057
    %v4321 = vunpack.c.l.b16 %v4058
    %v4322 = vunpack.c.l.b16 %v4059
    %v4323 = vunpack.c.l.b16 %v4060
    %v4324 = vunpack.c.l.b16 %v4061
    %v4325 = vunpack.c.l.b16 %v4062
    %v4326 = vunpack.c.l.b16 %v4063
    %v4327 = vunpack.c.l.b16 %v4064
    %v4328 = vunpack.c.l.b16 %v4065
    %v4329 = vunpack.c.l.b16 %v4066
    %v4330 = vunpack.c.l.b16 %v4067
    %v4331 = vunpack.c.l.b16 %v4068
    %v4332 = vunpack.c.l.b16 %v4069
    %v4333 = vunpack.c.l.b16 %v4070
    %v4334 = vunpack.c.l.b16 %v4071
    %v4335 = vunpack.c.l.b16 %v4072
    %v4336 = vunpack.c.l.b16 %v4073
    %v4337 = vunpack.c.l.b16 %v4074
    %v4338 = vunpack.c.l.b16 %v4075
    %v4339 = vunpack.c.l.b16 %v4076
    %v4340 = vunpack.c.l.b16 %v4077
    %v4341 = vunpack.c.l.b16 %v4078
    %v4342 = vunpack.c.l.b16 %v4079
    %v4343 = vunpack.c.l.b16 %v4080
    %v4344 = vunpack.c.l.b16 %v4081
    %v4345 = vunpack.c.l.b16 %v4082
    %v4346 = vunpack.c.l.b16 %v4083
    %v4347 = vunpack.c.l.b16 %v4084
    %v4348 = vunpack.c.l.b16 %v4085
    %v4349 = vunpack.c.l.b16 %v4086
    %v4350 = vunpack.c.l.b16 %v4087
    %v4351 = vunpack.c.l.b16 %v4088
    %v4352 = vunpack.c.l.b16 %v4089
    %v4353 = vunpack.c.l.b16 %v4090
    %v4354 = vunpack.c.l.b16 %v4091
    %v4355 = vunpack.c.l.b16 %v4092
    %v4356 = vunpack.c.l.b16 %v4093
    %v4357 = vunpack.c.l.b16 %v4094
    %v4358 = vunpack.c.l.b16 %v4095
    %v4359 = vunpack.c.l.b16 %v4096
    %v4360 = vunpack.c.l.b16 %v4097
    %v4361 = vunpack.c.l.b16 %v4098
    %v4362 = vunpack.c.l.b16 %v4099
    %v4363 = vunpack.c.l.b16 %v4100
    %v4364 = vunpack.c.l.b16 %v4101
    %v4365 = vunpack.c.l.b16 %v4102
    %v4366 = vunpack.c.l.b16 %v4103
    %v4367 = vunpack.c.l.b16 %v4104
    %v4368 = vunpack.c.l.b16 %v4105
    %v4369 = vunpack.c.l.b16 %v4106
    %v4370 = vunpack.c.l.b16 %v4107
    %v4371 = vunpack.c.l.b16 %v4108
    %v4372 = vunpack.c.l.b16 %v4109
    %v4373 = vunpack.c.l.b16 %v4110
    %v4374 = vunpack.c.l.b16 %v4111
    %v4375 = vunpack.c.l.b16 %v4112
    %v4376 = vunpack.c.l.b16 %v4113
    %v4377 = vunpack.c.l.b16 %v4114
    %v4378 = vunpack.c.l.b16 %v4115
    %v4379 = vunpack.c.l.b16 %v4116
    %v4380 = vunpack.c.l.b16 %v4117
    %v4381 = vunpack.c.l.b16 %v4118
    %v4382 = vunpack.c.l.b16 %v4119
    %v4383 = vunpack.c.l.b16 %v4120
    %v4384 = vunpack.c.l.b16 %v4121
    %v4385 = vunpack.c.l.b16 %v4122
    %v4386 = vunpack.c.l.b16 %v4123
    %v4387 = vunpack.c.l.b16 %v4124
    %v4388 = vunpack.c.l.b16 %v4125
    %v4389 = vunpack.c.l.b16 %v4126
    %v4390 = vunpack.c.l.b16 %v4127
    %v4391 = vunpack.c.l.b16 %v4128
    %v4392 = vunpack.c.l.b16 %v4129
    %v4393 = vunpack.c.l.b16 %v4130
    %v4394 = vunpack.c.l.b16 %v4131
    %v4395 = vunpack.c.l.b16 %v4132
    %v4396 = vunpack.c.l.b16 %v4133
    %v4397 = vunpack.c.l.b16 %v4134
    %v4398 = vunpack.c.l.b16 %v4135
    %v4399 = vunpack.c.l.b16 %v4136
    %v4400 = vunpack.c.l.b16 %v4137
    %v4401 = vpack.c.b16 %v4274, %v4273
    %v4402 = vpack.c.b16 %v4276, %v4275
    %v4403 = vpack.c.b16 %v4278, %v4277
    %v4404 = vpack.c.b16 %v4280, %v4279
    %v4405 = vpack.c.b16 %v4282, %v4281
    %v4406 = vpack.c.b16 %v4284, %v4283
    %v4407 = vpack.c.b16 %v4286, %v4285
    %v4408 = vpack.c.b16 %v4288, %v4287
    %v4409 = vpack.c.b16 %v4290, %v4289
    %v4410 = vpack.c.b16 %v4292, %v4291
    %v4411 = vpack.c.b16 %v4294, %v4293
    %v4412 = vpack.c.b16 %v4296, %v4295
    %v4413 = vpack.c.b16 %v4298, %v4297
    %v4414 = vpack.c.b16 %v4300, %v4299
    %v4415 = vpack.c.b16 %v4302, %v4301
    %v4416 = vpack.c.b16 %v4304, %v4303
    %v4417 = vpack.c.b16 %v4306, %v4305
    %v4418 = vpack.c.b16 %v4308, %v4307
    %v4419 = vpack.c.b16 %v4310, %v4309
    %v4420 = vpack.c.b16 %v4312, %v4311
    %v4421 = vpack.c.b16 %v4314, %v4313
    %v4422 = vpack.c.b16 %v4316, %v4315
    %v4423 = vpack.c.b16 %v4318, %v4317
    %v4424 = vpack.c.b16 %v4320, %v4319
    %v4425 = vpack.c.b16 %v4322, %v4321
    %v4426 = vpack.c.b16 %v4324, %v4323
    %v4427 = vpack.c.b16 %v4326, %v4325
    %v4428 = vpack.c.b16 %v4328, %v4327
    %v4429 = vpack.c.b16 %v4330, %v4329
    %v4430 = vpack.c.b16 %v4332, %v4331
    %v4431 = vpack.c.b16 %v4334, %v4333
    %v4432 = vpack.c.b16 %v4336, %v4335
    %v4433 = vpack.c.b16 %v4338, %v4337
    %v4434 = vpack.c.b16 %v4340, %v4339
    %v4435 = vpack.c.b16 %v4342, %v4341
    %v4436 = vpack.c.b16 %v4344, %v4343
    %v4437 = vpack.c.b16 %v4346, %v4345
    %v4438 = vpack.c.b16 %v4348, %v4347
    %v4439 = vpack.c.b16 %v4350, %v4349
    %v4440 = vpack.c.b16 %v4352, %v4351
    %v4441 = vpack.c.b16 %v4354, %v4353
    %v4442 = vpack.c.b16 %v4356, %v4355
    %v4443 = vpack.c.b16 %v4358, %v4357
    %v4444 = vpack.c.b16 %v4360, %v4359
    %v4445 = vpack.c.b16 %v4362, %v4361
    %v4446 = vpack.c.b16 %v4364, %v4363
    %v4447 = vpack.c.b16 %v4366, %v4365
    %v4448 = vpack.c.b16 %v4368, %v4367
    %v4449 = vpack.c.b16 %v4370, %v4369
    %v4450 = vpack.c.b16 %v4372, %v4371
    %v4451 = vpack.c.b16 %v4374, %v4373
    %v4452 = vpack.c.b16 %v4376, %v4375
    %v4453 = vpack.c.b16 %v4378, %v4377
    %v4454 = vpack.c.b16 %v4380, %v4379
    %v4455 = vpack.c.b16 %v4382, %v4381
    %v4456 = vpack.c.b16 %v4384, %v4383
    %v4457 = vpack.c.b16 %v4386, %v4385
    %v4458 = vpack.c.b16 %v4388, %v4387
    %v4459 = vpack.c.b16 %v4390, %v4389
    %v4460 = vpack.c.b16 %v4392, %v4391
    %v4461 = vpack.c.b16 %v4394, %v4393
    %v4462 = vpack.c.b16 %v4396, %v4395
    %v4463 = vpack.c.b16 %v4398, %v4397
    %v4464 = vpack.c.b16 %v4400, %v4399
    %4529 = vmatprep.subr.bf16.mxu0 0
    %4530 = vmatpush1.bf16.msra.mxu0 %v4401
    %4531 = vmatprep.subr.bf16.mxu0 0
    %4532 = vmatpush1.bf16.msra.mxu0 %v4402
    %4533 = vmatprep.subr.bf16.mxu0 0
    %4534 = vmatpush1.bf16.msra.mxu0 %v4403
    %4535 = vmatprep.subr.bf16.mxu0 0
    %4536 = vmatpush1.bf16.msra.mxu0 %v4404
    %4537 = vmatprep.subr.bf16.mxu0 0
    %4538 = vmatpush1.bf16.msra.mxu0 %v4405
    %4539 = vmatprep.subr.bf16.mxu0 0
    %4540 = vmatpush1.bf16.msra.mxu0 %v4406
    %4541 = vmatprep.subr.bf16.mxu0 0
    %4542 = vmatpush1.bf16.msra.mxu0 %v4407
    %4543 = vmatprep.subr.bf16.mxu0 0
    %4544 = vmatpush1.bf16.msra.mxu0 %v4408
    %4545 = vmatprep.subr.bf16.mxu0 0
    %4546 = vmatpush1.bf16.msra.mxu0 %v4409
    %4547 = vmatprep.subr.bf16.mxu0 0
    %4548 = vmatpush1.bf16.msra.mxu0 %v4410
    %4549 = vmatprep.subr.bf16.mxu0 0
    %4550 = vmatpush1.bf16.msra.mxu0 %v4411
    %4551 = vmatprep.subr.bf16.mxu0 0
    %4552 = vmatpush1.bf16.msra.mxu0 %v4412
    %4553 = vmatprep.subr.bf16.mxu0 0
    %4554 = vmatpush1.bf16.msra.mxu0 %v4413
    %4555 = vmatprep.subr.bf16.mxu0 0
    %4556 = vmatpush1.bf16.msra.mxu0 %v4414
    %4557 = vmatprep.subr.bf16.mxu0 0
    %4558 = vmatpush1.bf16.msra.mxu0 %v4415
    %4559 = vmatprep.subr.bf16.mxu0 0
    %4560 = vmatpush1.bf16.msra.mxu0 %v4416
    %4561 = vmatprep.mubr.bf16.mxu0 %v4003
    %4562 = vmatmul.mubr.bf16.gmra.mrb[0].mxu0 %v4002
    %v4563 = vpop.f32.mrb[0].mxu0
    %v4564 = vadd.f32 %v4143, %v4563
    %v4565 = vpop.f32.mrb[0].mxu0
    %v4566 = vpop.f32.mrb[0].mxu0
    %v4567 = vadd.f32 %v4143, %v4566
    %v4568 = vpop.f32.mrb[0].mxu0
    %4569 = vdwg.mxu0
    %4570 = vmatprep.subr.bf16.mxu0 0
    %4571 = vmatpush1.bf16.msra.mxu0 %v4417
    %4572 = vmatprep.subr.bf16.mxu0 0
    %4573 = vmatpush1.bf16.msra.mxu0 %v4418
    %4574 = vmatprep.subr.bf16.mxu0 0
    %4575 = vmatpush1.bf16.msra.mxu0 %v4419
    %4576 = vmatprep.subr.bf16.mxu0 0
    %4577 = vmatpush1.bf16.msra.mxu0 %v4420
    %4578 = vmatprep.subr.bf16.mxu0 0
    %4579 = vmatpush1.bf16.msra.mxu0 %v4421
    %4580 = vmatprep.subr.bf16.mxu0 0
    %4581 = vmatpush1.bf16.msra.mxu0 %v4422
    %4582 = vmatprep.subr.bf16.mxu0 0
    %4583 = vmatpush1.bf16.msra.mxu0 %v4423
    %4584 = vmatprep.subr.bf16.mxu0 0
    %4585 = vmatpush1.bf16.msra.mxu0 %v4424
    %4586 = vmatprep.subr.bf16.mxu0 0
    %4587 = vmatpush1.bf16.msra.mxu0 %v4425
    %4588 = vmatprep.subr.bf16.mxu0 0
    %4589 = vmatpush1.bf16.msra.mxu0 %v4426
    %4590 = vmatprep.subr.bf16.mxu0 0
    %4591 = vmatpush1.bf16.msra.mxu0 %v4427
    %4592 = vmatprep.subr.bf16.mxu0 0
    %4593 = vmatpush1.bf16.msra.mxu0 %v4428
    %4594 = vmatprep.subr.bf16.mxu0 0
    %4595 = vmatpush1.bf16.msra.mxu0 %v4429
    %4596 = vmatprep.subr.bf16.mxu0 0
    %4597 = vmatpush1.bf16.msra.mxu0 %v4430
    %4598 = vmatprep.subr.bf16.mxu0 0
    %4599 = vmatpush1.bf16.msra.mxu0 %v4431
    %4600 = vmatprep.subr.bf16.mxu0 0
    %4601 = vmatpush1.bf16.msra.mxu0 %v4432
    %4602 = vmatprep.mubr.bf16.mxu0 %v4005
    %4603 = vmatmul.mubr.bf16.gmra.mrb[0].mxu0 %v4004
    %v4604 = vpop.f32.mrb[0].mxu0
    %v4605 = vadd.f32 %v4564, %v4604
    %v4606 = vpop.f32.mrb[0].mxu0
    %v4607 = vpop.f32.mrb[0].mxu0
    %v4608 = vadd.f32 %v4567, %v4607
    %v4609 = vpop.f32.mrb[0].mxu0
    %4610 = vdwg.mxu0
    %4611 = vmatprep.subr.bf16.mxu0 0
    %4612 = vmatpush1.bf16.msra.mxu0 %v4433
    %4613 = vmatprep.subr.bf16.mxu0 0
    %4614 = vmatpush1.bf16.msra.mxu0 %v4434
    %4615 = vmatprep.subr.bf16.mxu0 0
    %4616 = vmatpush1.bf16.msra.mxu0 %v4435
    %4617 = vmatprep.subr.bf16.mxu0 0
    %4618 = vmatpush1.bf16.msra.mxu0 %v4436
    %4619 = vmatprep.subr.bf16.mxu0 0
    %4620 = vmatpush1.bf16.msra.mxu0 %v4437
    %4621 = vmatprep.subr.bf16.mxu0 0
    %4622 = vmatpush1.bf16.msra.mxu0 %v4438
    %4623 = vmatprep.subr.bf16.mxu0 0
    %4624 = vmatpush1.bf16.msra.mxu0 %v4439
    %4625 = vmatprep.subr.bf16.mxu0 0
    %4626 = vmatpush1.bf16.msra.mxu0 %v4440
    %4627 = vmatprep.subr.bf16.mxu0 0
    %4628 = vmatpush1.bf16.msra.mxu0 %v4441
    %4629 = vmatprep.subr.bf16.mxu0 0
    %4630 = vmatpush1.bf16.msra.mxu0 %v4442
    %4631 = vmatprep.subr.bf16.mxu0 0
    %4632 = vmatpush1.bf16.msra.mxu0 %v4443
    %4633 = vmatprep.subr.bf16.mxu0 0
    %4634 = vmatpush1.bf16.msra.mxu0 %v4444
    %4635 = vmatprep.subr.bf16.mxu0 0
    %4636 = vmatpush1.bf16.msra.mxu0 %v4445
    %4637 = vmatprep.subr.bf16.mxu0 0
    %4638 = vmatpush1.bf16.msra.mxu0 %v4446
    %4639 = vmatprep.subr.bf16.mxu0 0
    %4640 = vmatpush1.bf16.msra.mxu0 %v4447
    %4641 = vmatprep.subr.bf16.mxu0 0
    %4642 = vmatpush1.bf16.msra.mxu0 %v4448
    %4643 = vmatprep.mubr.bf16.mxu0 %v4007
    %4644 = vmatmul.mubr.bf16.gmra.mrb[0].mxu0 %v4006
    %v4645 = vpop.f32.mrb[0].mxu0
    %v4646 = vadd.f32 %v4605, %v4645
    %v4647 = vpop.f32.mrb[0].mxu0
    %v4648 = vpop.f32.mrb[0].mxu0
    %v4649 = vadd.f32 %v4608, %v4648
    %v4650 = vpop.f32.mrb[0].mxu0
    %4651 = vdwg.mxu0
    %4652 = vmatprep.subr.bf16.mxu0 0
    %4653 = vmatpush1.bf16.msra.mxu0 %v4449
    %4654 = vmatprep.subr.bf16.mxu0 0
    %4655 = vmatpush1.bf16.msra.mxu0 %v4450
    %4656 = vmatprep.subr.bf16.mxu0 0
    %4657 = vmatpush1.bf16.msra.mxu0 %v4451
    %4658 = vmatprep.subr.bf16.mxu0 0
    %4659 = vmatpush1.bf16.msra.mxu0 %v4452
    %4660 = vmatprep.subr.bf16.mxu0 0
    %4661 = vmatpush1.bf16.msra.mxu0 %v4453
    %4662 = vmatprep.subr.bf16.mxu0 0
    %4663 = vmatpush1.bf16.msra.mxu0 %v4454
    %4664 = vmatprep.subr.bf16.mxu0 0
    %4665 = vmatpush1.bf16.msra.mxu0 %v4455
    %4666 = vmatprep.subr.bf16.mxu0 0
    %4667 = vmatpush1.bf16.msra.mxu0 %v4456
    %4668 = vmatprep.subr.bf16.mxu0 0
    %4669 = vmatpush1.bf16.msra.mxu0 %v4457
    %4670 = vmatprep.subr.bf16.mxu0 0
    %4671 = vmatpush1.bf16.msra.mxu0 %v4458
    %4672 = vmatprep.subr.bf16.mxu0 0
    %4673 = vmatpush1.bf16.msra.mxu0 %v4459
    %4674 = vmatprep.subr.bf16.mxu0 0
    %4675 = vmatpush1.bf16.msra.mxu0 %v4460
    %4676 = vmatprep.subr.bf16.mxu0 0
    %4677 = vmatpush1.bf16.msra.mxu0 %v4461
    %4678 = vmatprep.subr.bf16.mxu0 0
    %4679 = vmatpush1.bf16.msra.mxu0 %v4462
    %4680 = vmatprep.subr.bf16.mxu0 0
    %4681 = vmatpush1.bf16.msra.mxu0 %v4463
    %4682 = vmatprep.subr.bf16.mxu0 0
    %4683 = vmatpush1.bf16.msra.mxu0 %v4464
    %4684 = vmatprep.mubr.bf16.mxu0 %v4009
    %4685 = vmatmul.mubr.bf16.gmra.mrb[0].mxu0 %v4008
    %v4686 = vpop.f32.mrb[0].mxu0
    %v4687 = vadd.f32 %v4646, %v4686
    %v4688 = vpop.f32.mrb[0].mxu0
    %v4689 = vpop.f32.mrb[0].mxu0
    %v4690 = vadd.f32 %v4649, %v4689
    %v4691 = vpop.f32.mrb[0].mxu0
    %4692 = vdwg.mxu0
    %v4693 = vmax.f32 %v4687, 0.0
    %v4694 = vmax.f32 %v4690, 0.0
    loop: start=0, step=1, limit=2
    $region70: #{net_forward.1} parent=1 // loop_pre_header
      _
    $region71: #{net_forward.1} parent=1 // loop_header
      %s4696 = sphi 0, %s4700
      %p4697 = scmp.ge.s32.totalorder %s4696, 2
      %v4701 = vphi %v4693, %v4820
      %v4702 = vphi %v4694, %v4821
    $region72: #{net_forward.1} parent=1 // loop_header_branch
      %4699 = sbr.rel (%p4697) target = $region76
    $region73: #{net_forward.1} parent=1 // loop_body
      %v4703 = vpack.c.bf16 %v4702, %v4701
      %s4704 = smul.u32 %s4696, 16
      %s4705 = smul.addr %s4704, 4
      %s4706 = scalar_lea.vmem [#allocation9], %s4705
      %v4707 = vld [vmem:[%s4706] sm:$0xf]
      %v4708 = vld [vmem:[%s4706 + $0x4] sm:$0xf]
      %v4709 = vld [vmem:[%s4706 + $0x8] sm:$0xf]
      %v4710 = vld [vmem:[%s4706 + $0xc] sm:$0xf]
      %v4711 = vld [vmem:[%s4706 + $0x10] sm:$0xf]
      %v4712 = vld [vmem:[%s4706 + $0x14] sm:$0xf]
      %v4713 = vld [vmem:[%s4706 + $0x18] sm:$0xf]
      %v4714 = vld [vmem:[%s4706 + $0x1c] sm:$0xf]
      %v4715 = vld [vmem:[%s4706 + $0x20] sm:$0xf]
      %v4716 = vld [vmem:[%s4706 + $0x24] sm:$0xf]
      %v4717 = vld [vmem:[%s4706 + $0x28] sm:$0xf]
      %v4718 = vld [vmem:[%s4706 + $0x2c] sm:$0xf]
      %v4719 = vld [vmem:[%s4706 + $0x30] sm:$0xf]
      %v4720 = vld [vmem:[%s4706 + $0x34] sm:$0xf]
      %v4721 = vld [vmem:[%s4706 + $0x38] sm:$0xf]
      %v4722 = vld [vmem:[%s4706 + $0x3c] sm:$0xf]
      %s4723 = scalar_lea.vmem [#allocation10], %s4696
      %v4724 = vld [vmem:[%s4723] sm:$0x1]
      %v4726 = vlaneseq
      %v4727 = vshrl.u32 %v4726, 7
      %v4728 = vsub.s32 0, %v4727
      %v4729 = vrot.slane %v4724, %v4728
      %v4747 = vunpack.c.l.b16 %v4707
      %v4748 = vunpack.c.l.b16 %v4708
      %v4749 = vunpack.c.l.b16 %v4709
      %v4750 = vunpack.c.l.b16 %v4710
      %v4751 = vunpack.c.l.b16 %v4711
      %v4752 = vunpack.c.l.b16 %v4712
      %v4753 = vunpack.c.l.b16 %v4713
      %v4754 = vunpack.c.l.b16 %v4714
      %v4755 = vunpack.c.l.b16 %v4715
      %v4756 = vunpack.c.l.b16 %v4716
      %v4757 = vunpack.c.l.b16 %v4717
      %v4758 = vunpack.c.l.b16 %v4718
      %v4759 = vunpack.c.l.b16 %v4719
      %v4760 = vunpack.c.l.b16 %v4720
      %v4761 = vunpack.c.l.b16 %v4721
      %v4762 = vunpack.c.l.b16 %v4722
      %v4763 = vpack.c.b16 %v4748, %v4747
      %v4764 = vpack.c.b16 %v4750, %v4749
      %v4765 = vpack.c.b16 %v4752, %v4751
      %v4766 = vpack.c.b16 %v4754, %v4753
      %v4767 = vpack.c.b16 %v4756, %v4755
      %v4768 = vpack.c.b16 %v4758, %v4757
      %v4769 = vpack.c.b16 %v4760, %v4759
      %v4770 = vpack.c.b16 %v4762, %v4761
      %4779 = vmatprep.subr.bf16.mxu0 0
      %4780 = vmatpush1.bf16.msra.mxu0 %v4763
      %4781 = vmatprep.subr.bf16.mxu0 0
      %4782 = vmatpush1.bf16.msra.mxu0 %v4764
      %4783 = vmatprep.subr.bf16.mxu0 0
      %4784 = vmatpush1.bf16.msra.mxu0 %v4765
      %4785 = vmatprep.subr.bf16.mxu0 0
      %4786 = vmatpush1.bf16.msra.mxu0 %v4766
      %4787 = vmatprep.subr.bf16.mxu0 0
      %4788 = vmatpush1.bf16.msra.mxu0 %v4767
      %4789 = vmatprep.subr.bf16.mxu0 0
      %4790 = vmatpush1.bf16.msra.mxu0 %v4768
      %4791 = vmatprep.subr.bf16.mxu0 0
      %4792 = vmatpush1.bf16.msra.mxu0 %v4769
      %4793 = vmatprep.subr.bf16.mxu0 0
      %4794 = vmatpush1.bf16.msra.mxu0 %v4770
      %4795 = vmatprep.subr.bf16.mxu0 0
      %4796 = vmatpush1.bf16.msra.mxu0 0
      %4797 = vmatprep.subr.bf16.mxu0 0
      %4798 = vmatpush1.bf16.msra.mxu0 0
      %4799 = vmatprep.subr.bf16.mxu0 0
      %4800 = vmatpush1.bf16.msra.mxu0 0
      %4801 = vmatprep.subr.bf16.mxu0 0
      %4802 = vmatpush1.bf16.msra.mxu0 0
      %4803 = vmatprep.subr.bf16.mxu0 0
      %4804 = vmatpush1.bf16.msra.mxu0 0
      %4805 = vmatprep.subr.bf16.mxu0 0
      %4806 = vmatpush1.bf16.msra.mxu0 0
      %4807 = vmatprep.subr.bf16.mxu0 0
      %4808 = vmatpush1.bf16.msra.mxu0 0
      %4809 = vmatprep.subr.bf16.mxu0 0
      %4810 = vmatpush1.bf16.msra.mxu0 0
      %4811 = vmatprep.mubr.bf16.mxu0 0
      %4812 = vmatmul.mubr.bf16.gmra.mrb[0].mxu0 %v4703
      %v4813 = vpop.f32.mrb[0].mxu0
      %v4814 = vadd.f32 %v4729, %v4813
      %v4815 = vpop.f32.mrb[0].mxu0
      %v4816 = vpop.f32.mrb[0].mxu0
      %v4817 = vadd.f32 %v4729, %v4816
      %v4818 = vpop.f32.mrb[0].mxu0
      %4819 = vdwg.mxu0
      %v4820 = vmax.f32 %v4814, 0.0
      %v4821 = vmax.f32 %v4817, 0.0
    $region74: #{net_forward.1} parent=1 // loop_footer
      %s4700 = sadd.s32 1, %s4696
    $region75: #{net_forward.1} parent=1 // loop_footer_branch
      %4695 = sbr.rel target = $region71
    $region76: #{net_forward.1} parent=1 // loop_exit
      _
    %v4822 = vpack.c.bf16 %v4702, %v4701
    %v4823 = vld [vmem:[#allocation12] sm:$0xf]
    %v4824 = vld [vmem:[#allocation12 + $0x4] sm:$0xf]
    %v4825 = vld [vmem:[#allocation12 + $0x8] sm:$0xf]
    %v4826 = vld [vmem:[#allocation12 + $0xc] sm:$0xf]
    %v4827 = vld [vmem:[#allocation12 + $0x10] sm:$0xf]
    %v4828 = vld [vmem:[#allocation12 + $0x14] sm:$0xf]
    %v4829 = vld [vmem:[#allocation12 + $0x18] sm:$0xf]
    %v4830 = vld [vmem:[#allocation12 + $0x1c] sm:$0xf]
    %v4831 = vld [vmem:[#allocation12 + $0x20] sm:$0xf]
    %v4832 = vld [vmem:[#allocation12 + $0x24] sm:$0xf]
    %v4833 = vld [vmem:[#allocation12 + $0x28] sm:$0xf]
    %v4834 = vld [vmem:[#allocation12 + $0x2c] sm:$0xf]
    %v4835 = vld [vmem:[#allocation12 + $0x30] sm:$0xf]
    %v4836 = vld [vmem:[#allocation12 + $0x34] sm:$0xf]
    %v4837 = vld [vmem:[#allocation12 + $0x38] sm:$0xf]
    %v4838 = vld [vmem:[#allocation12 + $0x3c] sm:$0xf]
    %v4839 = vld [vmem:[#allocation13] sm:$0x1]
    %v4841 = vlaneseq
    %v4842 = vshrl.u32 %v4841, 7
    %v4843 = vsub.s32 0, %v4842
    %v4844 = vrot.slane %v4839, %v4843
    %v4862 = vunpack.c.l.b16 %v4823
    %v4863 = vunpack.c.l.b16 %v4824
    %v4864 = vunpack.c.l.b16 %v4825
    %v4865 = vunpack.c.l.b16 %v4826
    %v4866 = vunpack.c.l.b16 %v4827
    %v4867 = vunpack.c.l.b16 %v4828
    %v4868 = vunpack.c.l.b16 %v4829
    %v4869 = vunpack.c.l.b16 %v4830
    %v4870 = vunpack.c.l.b16 %v4831
    %v4871 = vunpack.c.l.b16 %v4832
    %v4872 = vunpack.c.l.b16 %v4833
    %v4873 = vunpack.c.l.b16 %v4834
    %v4874 = vunpack.c.l.b16 %v4835
    %v4875 = vunpack.c.l.b16 %v4836
    %v4876 = vunpack.c.l.b16 %v4837
    %v4877 = vunpack.c.l.b16 %v4838
    %v4878 = vpack.c.b16 %v4863, %v4862
    %v4879 = vpack.c.b16 %v4865, %v4864
    %v4880 = vpack.c.b16 %v4867, %v4866
    %v4881 = vpack.c.b16 %v4869, %v4868
    %v4882 = vpack.c.b16 %v4871, %v4870
    %v4883 = vpack.c.b16 %v4873, %v4872
    %v4884 = vpack.c.b16 %v4875, %v4874
    %v4885 = vpack.c.b16 %v4877, %v4876
    %4894 = vmatprep.subr.bf16.mxu0 0
    %4895 = vmatpush1.bf16.msra.mxu0 %v4878
    %4896 = vmatprep.subr.bf16.mxu0 0
    %4897 = vmatpush1.bf16.msra.mxu0 %v4879
    %4898 = vmatprep.subr.bf16.mxu0 0
    %4899 = vmatpush1.bf16.msra.mxu0 %v4880
    %4900 = vmatprep.subr.bf16.mxu0 0
    %4901 = vmatpush1.bf16.msra.mxu0 %v4881
    %4902 = vmatprep.subr.bf16.mxu0 0
    %4903 = vmatpush1.bf16.msra.mxu0 %v4882
    %4904 = vmatprep.subr.bf16.mxu0 0
    %4905 = vmatpush1.bf16.msra.mxu0 %v4883
    %4906 = vmatprep.subr.bf16.mxu0 0
    %4907 = vmatpush1.bf16.msra.mxu0 %v4884
    %4908 = vmatprep.subr.bf16.mxu0 0
    %4909 = vmatpush1.bf16.msra.mxu0 %v4885
    %4910 = vmatprep.subr.bf16.mxu0 0
    %4911 = vmatpush1.bf16.msra.mxu0 0
    %4912 = vmatprep.subr.bf16.mxu0 0
    %4913 = vmatpush1.bf16.msra.mxu0 0
    %4914 = vmatprep.subr.bf16.mxu0 0
    %4915 = vmatpush1.bf16.msra.mxu0 0
    %4916 = vmatprep.subr.bf16.mxu0 0
    %4917 = vmatpush1.bf16.msra.mxu0 0
    %4918 = vmatprep.subr.bf16.mxu0 0
    %4919 = vmatpush1.bf16.msra.mxu0 0
    %4920 = vmatprep.subr.bf16.mxu0 0
    %4921 = vmatpush1.bf16.msra.mxu0 0
    %4922 = vmatprep.subr.bf16.mxu0 0
    %4923 = vmatpush1.bf16.msra.mxu0 0
    %4924 = vmatprep.subr.bf16.mxu0 0
    %4925 = vmatpush1.bf16.msra.mxu0 0
    %4926 = vmatprep.mubr.bf16.mxu0 0
    %4927 = vmatmul.mubr.bf16.gmra.mrb[0].mxu0 %v4822
    %v4928 = vpop.f32.mrb[0].mxu0
    %v4929 = vadd.f32 %v4844, %v4928
    %v4930 = vpop.f32.mrb[0].mxu0
    %v4931 = vpop.f32.mrb[0].mxu0
    %v4932 = vadd.f32 %v4844, %v4931
    %v4933 = vpop.f32.mrb[0].mxu0
    %4934 = vdwg.mxu0
    %4935 = vst [vmem:[%s9] sm:$0xff] %v4929
    %4936 = vst [vmem:[%s9 + $0x8] sm:$0xff] %v4932
    // Predicated region
    $region77: #{net_forward.1} parent=1 // pred_check
      _
    $region78: #{net_forward.1} parent=1 // pred_check_branch
      %4938 = sbr.rel (0) target = $region80
    $region79: #{net_forward.1} parent=1 // pred_region
      _
    $region80: #{net_forward.1} parent=1 // pred_fallthru
      _
    // Predicated region
    $region81: #{net_forward.1} parent=1 // pred_check
      _
    $region82: #{net_forward.1} parent=1 // pred_check_branch
      %4940 = sbr.rel (0) target = $region84
    $region83: #{net_forward.1} parent=1 // pred_region
      _
    $region84: #{net_forward.1} parent=1 // pred_fallthru
      _
    %4941 = vsyncpa [#allocation3], 1
    %4942 = vsyncpa [#allocation5], 1
    %4943 = vsyncpa [#allocation8], 1
    %4944 = vsyncpa [#allocation11], 1
    %4945 = vsyncpa [#allocation14], 1

</llo_original>
